<compile_context>
chip_gen: v7x
topology: tpu7x:2x2x1
jax: 0.10.0
libtpu: 0.0.40
codegen_flags: <defaults>
</compile_context>

<pallas_src>
import jax
import jax.numpy as jnp
from jax.experimental import pallas as pl
from jax.experimental.pallas import tpu as pltpu

D_MODEL = 32
D_INNER = 64
N_HEAD = 4
D_K = 8
D_V = 8
HD = N_HEAD * D_K          # 32
LN_EPS = 1e-6

# ----------------------------------------------------------------------------
# Weight-slab layout: one (SLAB_ROWS, 128) bf16 slab, every tensor starts at
# lane 0 (so in-kernel slices need no lane realignment).
# ----------------------------------------------------------------------------
SLAB_LANES = 128
R_WQKV_S = 0                       # (32, 96)  Wq|Wk|Wv   (self attention)
R_WO_S   = R_WQKV_S + D_MODEL      # (32, 32)
R_WQ_C   = R_WO_S + HD             # (32, 32)
R_WKV_C  = R_WQ_C + D_MODEL        # (32, 64)  Wk|Wv      (cross attention)
R_WO_C   = R_WKV_C + D_MODEL       # (32, 32)
R_W1     = R_WO_C + HD             # (32, 64)
R_W2     = R_W1 + D_MODEL          # (64, 32)
R_B1     = R_W2 + D_INNER          # (1, 64)
R_B2     = R_B1 + 1                # (1, 32)
R_G_S    = R_B2 + 1                # layernorm gamma/beta rows (1, 32) each
R_B_S    = R_G_S + 1
R_G_C    = R_B_S + 1
R_B_C    = R_G_C + 1
R_G_F    = R_B_C + 1
R_B_F    = R_G_F + 1
SLAB_ROWS = R_B_F + 1              # 264 (multiple of 8)


def pack_decoder_params(params):
    """Pack every layer weight into one (SLAB_ROWS, 128) bf16 slab.

    Called ONCE per parameter set (hoisted out of the per-step path); the
    result is the only weight operand of the kernel -> a single DMA.
    """
    wq_s, wk_s, wv_s, wo_s, g_s, b_s = params["slf_attn"]
    wq_c, wk_c, wv_c, wo_c, g_c, b_c = params["enc_attn_second"]
    w1, b1, w2, b2, g_f, b_f = params["pos_ffn"]

    def block(x):
        x = jnp.asarray(x, jnp.float32)
        if x.ndim == 1:
            x = x[None, :]
        return jnp.pad(x, ((0, 0), (0, SLAB_LANES - x.shape[1])))

    slab = jnp.concatenate([
        block(jnp.concatenate([wq_s, wk_s, wv_s], axis=1)),   # R_WQKV_S
        block(wo_s),                                          # R_WO_S
        block(wq_c),                                          # R_WQ_C
        block(jnp.concatenate([wk_c, wv_c], axis=1)),         # R_WKV_C
        block(wo_c),                                          # R_WO_C
        block(w1),                                            # R_W1
        block(w2),                                            # R_W2
        block(b1), block(b2),                                 # R_B1, R_B2
        block(g_s), block(b_s),                               # R_G_S, R_B_S
        block(g_c), block(b_c),                               # R_G_C, R_B_C
        block(g_f), block(b_f),                               # R_G_F, R_B_F
    ], axis=0)
    assert slab.shape == (SLAB_ROWS, SLAB_LANES)
    return slab.astype(jnp.bfloat16)


# ----------------------------------------------------------------------------
# Kernel helpers (all elementwise math in f32)
# ----------------------------------------------------------------------------
def _layernorm(x, gamma, beta):
    mean = jnp.mean(x, axis=-1, keepdims=True)
    var = jnp.mean((x - mean) ** 2, axis=-1, keepdims=True)
    return (x - mean) * jax.lax.rsqrt(var + LN_EPS) * gamma + beta


def _attention(q, k, v, mask):
    """q: (B,Lq,H*Dk), k/v: (B,Lk,H*Dk), mask: (B,Lq,Lk) raw 0/1 floats."""
    # Mask -> additive bias ONCE per attention (not per head); matches the
    # reference's `where(mask == 0, -1e9, s)` for exact 0/1 masks.
    bias = jnp.where(mask == 0.0, -1e9, 0.0).astype(jnp.float32)
    scale = 1.0 / (D_K ** 0.5)
    heads = []
    for h in range(N_HEAD):                          # static loop (see header)
        qh = q[:, :, h * D_K:(h + 1) * D_K]          # (B, Lq, Dk) lane slice
        kh = k[:, :, h * D_K:(h + 1) * D_K]          # (B, Lk, Dk)
        vh = v[:, :, h * D_V:(h + 1) * D_V]          # (B, Lk, Dv)
        s = jnp.einsum('bqd,bkd->bqk', qh, kh,
                       preferred_element_type=jnp.float32) * scale + bias
        s = s - jnp.max(s, axis=-1, keepdims=True)
        p = jnp.exp(s)
        # EUP approximate reciprocal for the softmax denominator (free slot).
        p = p * pl.reciprocal(jnp.sum(p, axis=-1, keepdims=True), approx=True)
        heads.append(jnp.einsum('bqk,bkd->bqd', p, vh,
                                preferred_element_type=jnp.float32))
    return jnp.concatenate(heads, axis=-1)           # (B, Lq, H*Dv)


# ----------------------------------------------------------------------------
# Fused decoder-layer kernel (single invocation, everything VMEM resident)
# ----------------------------------------------------------------------------
def decoder_layer_kernel(dec_ref, enc_ref, smask_ref, xmask_ref, slab_ref,
                         out_ref):
    B, Lq, _ = smask_ref.shape
    Lk = xmask_ref.shape[2]
    D = dec_ref.shape[1]
    f32, bf16 = jnp.float32, jnp.bfloat16

    # -------- static views into the packed weight slab (lane offset 0) -------
    w_qkv_s = slab_ref[R_WQKV_S:R_WQKV_S + D_MODEL, 0:3 * HD]   # bf16 (32, 96)
    w_o_s   = slab_ref[R_WO_S:R_WO_S + HD, 0:D_MODEL]           # bf16 (32, 32)
    w_q_c   = slab_ref[R_WQ_C:R_WQ_C + D_MODEL, 0:HD]           # bf16 (32, 32)
    w_kv_c  = slab_ref[R_WKV_C:R_WKV_C + D_MODEL, 0:2 * HD]     # bf16 (32, 64)
    w_o_c   = slab_ref[R_WO_C:R_WO_C + HD, 0:D_MODEL]           # bf16 (32, 32)
    w_1     = slab_ref[R_W1:R_W1 + D_MODEL, 0:D_INNER]          # bf16 (32, 64)
    w_2     = slab_ref[R_W2:R_W2 + D_INNER, 0:D_MODEL]          # bf16 (64, 32)
    b_1 = slab_ref[R_B1:R_B1 + 1, 0:D_INNER].astype(f32)        # (1, 64)
    b_2 = slab_ref[R_B2:R_B2 + 1, 0:D_MODEL].astype(f32)        # (1, 32)
    g_s = slab_ref[R_G_S:R_G_S + 1, 0:D_MODEL].astype(f32)
    b_s = slab_ref[R_B_S:R_B_S + 1, 0:D_MODEL].astype(f32)
    g_c = slab_ref[R_G_C:R_G_C + 1, 0:D_MODEL].astype(f32)
    b_c = slab_ref[R_B_C:R_B_C + 1, 0:D_MODEL].astype(f32)
    g_f = slab_ref[R_G_F:R_G_F + 1, 0:D_MODEL].astype(f32)
    b_f = slab_ref[R_B_F:R_B_F + 1, 0:D_MODEL].astype(f32)

    x2 = dec_ref[...].astype(f32)                    # (B*Lq, D)
    enc2 = enc_ref[...].astype(f32)                  # (B*Lk, D)

    # ------------------------------ self attention ---------------------------
    qkv = jnp.dot(x2.astype(bf16), w_qkv_s, preferred_element_type=f32)
    q = qkv[:, 0 * HD:1 * HD].reshape(B, Lq, HD)
    k = qkv[:, 1 * HD:2 * HD].reshape(B, Lq, HD)
    v = qkv[:, 2 * HD:3 * HD].reshape(B, Lq, HD)
    ctx = _attention(q, k, v, smask_ref[...]).reshape(B * Lq, HD)
    o = jnp.dot(ctx.astype(bf16), w_o_s, preferred_element_type=f32)
    h1 = _layernorm(o + x2, g_s, b_s)                # (B*Lq, D)

    # ------------------------------ cross attention --------------------------
    qc = jnp.dot(h1.astype(bf16), w_q_c,
                 preferred_element_type=f32).reshape(B, Lq, HD)
    kvc = jnp.dot(enc2.astype(bf16), w_kv_c, preferred_element_type=f32)
    kc = kvc[:, 0 * HD:1 * HD].reshape(B, Lk, HD)
    vc = kvc[:, 1 * HD:2 * HD].reshape(B, Lk, HD)
    ctx_c = _attention(qc, kc, vc, xmask_ref[...]).reshape(B * Lq, HD)
    oc = jnp.dot(ctx_c.astype(bf16), w_o_c, preferred_element_type=f32)
    h2 = _layernorm(oc + h1, g_c, b_c)               # (B*Lq, D)

    # ------------------------ position-wise feed-forward ---------------------
    ff = jnp.dot(h2.astype(bf16), w_1, preferred_element_type=f32) + b_1
    ff = jnp.maximum(ff, 0.0)
    ff = jnp.dot(ff.astype(bf16), w_2, preferred_element_type=f32) + b_2
    y = _layernorm(ff + h2, g_f, b_f)                # (B*Lq, D)

    # Lane-dense store: (B*Lq, D) -> (B, Lq*D) via a leading-dim reshape plus
    # minor-dim concatenation; last dim Lq*D is a multiple of 128 -> unmasked
    # full-lane vst instead of masked 32-lane partial stores.
    y3 = y.reshape(B, Lq, D)
    out_ref[...] = jnp.concatenate([y3[:, i, :] for i in range(Lq)],
                                   axis=-1).astype(out_ref.dtype)


# ----------------------------------------------------------------------------
# Wrapper: one pallas_call, no grid (all operands < 100 KiB, VMEM resident).
# ----------------------------------------------------------------------------
@jax.jit
def decoder_layer(dec_input, enc_output, slf_attn_mask, dec_enc_attn_mask,
                  param_slab):
    B, Lq, D = dec_input.shape
    Lk = enc_output.shape[1]

    # Free (metadata-only) HBM reshapes so in-kernel activations are already
    # in their natural 2-D (rows, features) layout.
    dec2 = dec_input.reshape(B * Lq, D)
    enc2 = enc_output.reshape(B * Lk, D)

    # Advisory cost estimate for XLA's scheduler around the custom call.
    flops = 2 * B * Lq * D * 3 * HD            # self qkv projection
    flops += 2 * B * Lq * HD * D               # self output projection
    flops += 2 * B * Lq * D * HD               # cross q projection
    flops += 2 * B * Lk * D * 2 * HD           # cross kv projection
    flops += 2 * B * Lq * HD * D               # cross output projection
    flops += 2 * B * Lq * D * D_INNER * 2      # feed-forward
    flops += 2 * B * N_HEAD * Lq * (Lq + Lk) * D_K * 2   # attn scores + PV
    transcendentals = B * N_HEAD * Lq * (Lq + Lk)         # softmax exp
    bytes_accessed = (4 * (dec2.size + enc2.size + slf_attn_mask.size
                           + dec_enc_attn_mask.size + B * Lq * D)
                      + 2 * SLAB_ROWS * SLAB_LANES)

    vmem = pl.BlockSpec(memory_space=pltpu.MemorySpace.VMEM)
    out_flat = pl.pallas_call(
        decoder_layer_kernel,
        out_shape=jax.ShapeDtypeStruct((B, Lq * D), dec_input.dtype),
        in_specs=[vmem] * 5,
        out_specs=vmem,
        cost_estimate=pl.CostEstimate(flops=flops,
                                      transcendentals=transcendentals,
                                      bytes_accessed=bytes_accessed),
        # Gridless on purpose at this size.  When B*Lq grows: add a leading
        # "parallel" grid axis over row tiles (v7x has 2 TensorCores) and set
        # pltpu.CompilerParams(vmem_limit_bytes=...) against v7x's 64 MiB VMEM.
    )(dec2, enc2,
      slf_attn_mask.astype(jnp.float32),
      dec_enc_attn_mask.astype(jnp.float32),
      param_slab)
    return out_flat.reshape(B, Lq, D)


# ----------------------------------------------------------------------------
# Pure-JAX f32 reference (mirrors the PyTorch module, for verification)
# ----------------------------------------------------------------------------
def mha_ref(q_in, kv_in, mask, params):
    wq, wk, wv, wo, g, b = params
    B, Lq, _ = q_in.shape
    Lk = kv_in.shape[1]
    q = (q_in @ wq).reshape(B, Lq, N_HEAD, D_K).transpose(0, 2, 1, 3)
    k = (kv_in @ wk).reshape(B, Lk, N_HEAD, D_K).transpose(0, 2, 1, 3)
    v = (kv_in @ wv).reshape(B, Lk, N_HEAD, D_V).transpose(0, 2, 1, 3)
    s = jnp.einsum("bhqd,bhkd->bhqk", q, k) / (D_K ** 0.5)
    s = jnp.where(mask[:, None, :, :] == 0.0, -1e9, s)
    p = jax.nn.softmax(s, axis=-1)
    o = jnp.einsum("bhqk,bhkd->bhqd", p, v).transpose(0, 2, 1, 3).reshape(B, Lq, -1)
    o = o @ wo + q_in
    return _layernorm(o, g[0], b[0])


def ffn_ref(x, params):
    w1, b1, w2, b2, g, b = params
    h = jnp.maximum(x @ w1 + b1[0], 0.0)
    o = h @ w2 + b2[0] + x
    return _layernorm(o, g[0], b[0])


def decoder_layer_ref(dec_input, enc_output, slf_mask, de_mask, params):
    d = mha_ref(dec_input, dec_input, slf_mask, params["slf_attn"])
    t = mha_ref(d, enc_output, de_mask, params["enc_attn_second"])
    return ffn_ref(t, params["pos_ffn"])


# ----------------------------------------------------------------------------
# Deterministic parameter init
# ----------------------------------------------------------------------------
def init_params(key):
    keys = iter(jax.random.split(key, 32))
    nrm = lambda shp, s=0.1: (jax.random.normal(next(keys), shp, jnp.float32) * s)

    def mha_params():
        return (nrm((D_MODEL, N_HEAD * D_K)),
                nrm((D_MODEL, N_HEAD * D_K)),
                nrm((D_MODEL, N_HEAD * D_V)),
                nrm((N_HEAD * D_V, D_MODEL)),
                jnp.ones((1, D_MODEL), jnp.float32),
                jnp.zeros((1, D_MODEL), jnp.float32))

    def ffn_params():
        return (nrm((D_MODEL, D_INNER)),
                nrm((1, D_INNER)),
                nrm((D_INNER, D_MODEL)),
                nrm((1, D_MODEL)),
                jnp.ones((1, D_MODEL), jnp.float32),
                jnp.zeros((1, D_MODEL), jnp.float32))

    return {"slf_attn": mha_params(),
            "enc_attn_second": mha_params(),
            "pos_ffn": ffn_params()}


if __name__ == "__main__":
    B, L_DEC, L_ENC = 2, 8, 16

    key = jax.random.PRNGKey(0)
    k_in, k_enc, k_par = jax.random.split(key, 3)

    dec_input = jax.random.normal(k_in, (B, L_DEC, D_MODEL), jnp.float32)
    enc_output = jax.random.normal(k_enc, (B, L_ENC, D_MODEL), jnp.float32)

    # causal self-attention mask (1 = attend, 0 = masked)
    slf_attn_mask = jnp.broadcast_to(
        jnp.tril(jnp.ones((L_DEC, L_DEC), jnp.float32)), (B, L_DEC, L_DEC))
    # full-visibility decoder->encoder mask
    dec_enc_attn_mask = jnp.ones((B, L_DEC, L_ENC), jnp.float32)

    params = init_params(k_par)
    # Slab packing hoisted out of the per-step path (once per parameter set).
    param_slab = jax.block_until_ready(pack_decoder_params(params))

    out = decoder_layer(dec_input, enc_output, slf_attn_mask,
                        dec_enc_attn_mask, param_slab)
    out = jax.block_until_ready(out)

    ref = decoder_layer_ref(dec_input, enc_output, slf_attn_mask,
                            dec_enc_attn_mask, params)
    assert out.shape == (B, L_DEC, D_MODEL)
    # Tolerance accounts for bf16 MXU inputs on the weight matmuls (weights and
    # activations rounded to bf16 at the dot, f32 accumulation) plus the EUP
    # approximate reciprocal in the softmax denominator; the reference is
    # all-f32 exact.  Estimated worst-case |err| is ~1e-2 at these scales.
    err = float(jnp.max(jnp.abs(out - ref)))
    assert err < 3e-2, err

    print("KERNEL_OK")
</pallas_src>

<mosaic_0001>
module attributes {stable_mosaic.version = 11 : i64} {
  func.func @decoder_layer_kernel(%arg0: memref<16x32xf32, #tpu.memory_space<vmem>>, %arg1: memref<32x32xf32, #tpu.memory_space<vmem>>, %arg2: memref<2x8x8xf32, #tpu.memory_space<vmem>>, %arg3: memref<2x8x16xf32, #tpu.memory_space<vmem>>, %arg4: memref<264x128xbf16, #tpu.memory_space<vmem>>, %arg5: memref<2x256xf32, #tpu.memory_space<vmem>>) attributes {dimension_semantics = [], scalar_prefetch = 0 : i64, scratch_operands = 0 : i64, tpu.core_type = #tpu.core_type<tc>} {
    %c0 = arith.constant 0 : index
    %c0_0 = arith.constant 0 : index
    %0 = vector.load %arg4[%c0, %c0_0] : memref<264x128xbf16, #tpu.memory_space<vmem>>, vector<32x96xbf16>
    %c32 = arith.constant 32 : index
    %c0_1 = arith.constant 0 : index
    %1 = vector.load %arg4[%c32, %c0_1] : memref<264x128xbf16, #tpu.memory_space<vmem>>, vector<32x32xbf16>
    %c64 = arith.constant 64 : index
    %c0_2 = arith.constant 0 : index
    %2 = vector.load %arg4[%c64, %c0_2] : memref<264x128xbf16, #tpu.memory_space<vmem>>, vector<32x32xbf16>
    %c96 = arith.constant 96 : index
    %c0_3 = arith.constant 0 : index
    %3 = vector.load %arg4[%c96, %c0_3] : memref<264x128xbf16, #tpu.memory_space<vmem>>, vector<32x64xbf16>
    %c128 = arith.constant 128 : index
    %c0_4 = arith.constant 0 : index
    %4 = vector.load %arg4[%c128, %c0_4] : memref<264x128xbf16, #tpu.memory_space<vmem>>, vector<32x32xbf16>
    %c160 = arith.constant 160 : index
    %c0_5 = arith.constant 0 : index
    %5 = vector.load %arg4[%c160, %c0_5] : memref<264x128xbf16, #tpu.memory_space<vmem>>, vector<32x64xbf16>
    %c192 = arith.constant 192 : index
    %c0_6 = arith.constant 0 : index
    %6 = vector.load %arg4[%c192, %c0_6] : memref<264x128xbf16, #tpu.memory_space<vmem>>, vector<64x32xbf16>
    %c256 = arith.constant 256 : index
    %c0_7 = arith.constant 0 : index
    %7 = vector.load %arg4[%c256, %c0_7] : memref<264x128xbf16, #tpu.memory_space<vmem>>, vector<1x64xbf16>
    %8 = arith.extf %7 : vector<1x64xbf16> to vector<1x64xf32>
    %c257 = arith.constant 257 : index
    %c0_8 = arith.constant 0 : index
    %9 = vector.load %arg4[%c257, %c0_8] : memref<264x128xbf16, #tpu.memory_space<vmem>>, vector<1x32xbf16>
    %10 = arith.extf %9 : vector<1x32xbf16> to vector<1x32xf32>
    %c258 = arith.constant 258 : index
    %c0_9 = arith.constant 0 : index
    %11 = vector.load %arg4[%c258, %c0_9] : memref<264x128xbf16, #tpu.memory_space<vmem>>, vector<1x32xbf16>
    %12 = arith.extf %11 : vector<1x32xbf16> to vector<1x32xf32>
    %c259 = arith.constant 259 : index
    %c0_10 = arith.constant 0 : index
    %13 = vector.load %arg4[%c259, %c0_10] : memref<264x128xbf16, #tpu.memory_space<vmem>>, vector<1x32xbf16>
    %14 = arith.extf %13 : vector<1x32xbf16> to vector<1x32xf32>
    %c260 = arith.constant 260 : index
    %c0_11 = arith.constant 0 : index
    %15 = vector.load %arg4[%c260, %c0_11] : memref<264x128xbf16, #tpu.memory_space<vmem>>, vector<1x32xbf16>
    %16 = arith.extf %15 : vector<1x32xbf16> to vector<1x32xf32>
    %c261 = arith.constant 261 : index
    %c0_12 = arith.constant 0 : index
    %17 = vector.load %arg4[%c261, %c0_12] : memref<264x128xbf16, #tpu.memory_space<vmem>>, vector<1x32xbf16>
    %18 = arith.extf %17 : vector<1x32xbf16> to vector<1x32xf32>
    %c262 = arith.constant 262 : index
    %c0_13 = arith.constant 0 : index
    %19 = vector.load %arg4[%c262, %c0_13] : memref<264x128xbf16, #tpu.memory_space<vmem>>, vector<1x32xbf16>
    %20 = arith.extf %19 : vector<1x32xbf16> to vector<1x32xf32>
    %c263 = arith.constant 263 : index
    %c0_14 = arith.constant 0 : index
    %21 = vector.load %arg4[%c263, %c0_14] : memref<264x128xbf16, #tpu.memory_space<vmem>>, vector<1x32xbf16>
    %22 = arith.extf %21 : vector<1x32xbf16> to vector<1x32xf32>
    %c0_15 = arith.constant 0 : index
    %c0_16 = arith.constant 0 : index
    %23 = vector.load %arg0[%c0_15, %c0_16] : memref<16x32xf32, #tpu.memory_space<vmem>>, vector<16x32xf32>
    %c0_17 = arith.constant 0 : index
    %c0_18 = arith.constant 0 : index
    %24 = vector.load %arg1[%c0_17, %c0_18] : memref<32x32xf32, #tpu.memory_space<vmem>>, vector<32x32xf32>
    %25 = arith.truncf %23 : vector<16x32xf32> to vector<16x32xbf16>
    %cst = arith.constant dense<0.000000e+00> : vector<16x96xf32>
    %26 = tpu.matmul %25, %0, %cst {dimension_numbers = #tpu.dot_dimension_numbers<[1], [0], [0], [1], [0, 0, 1, 1], [], []>} : vector<16x32xbf16>, vector<32x96xbf16>, vector<16x96xf32> -> vector<16x96xf32>
    %27 = vector.extract_strided_slice %26 {offsets = [0, 0], sizes = [16, 32], strides = [1, 1]} : vector<16x96xf32> to vector<16x32xf32>
    %28 = vector.shape_cast %27 : vector<16x32xf32> to vector<2x8x32xf32>
    %29 = vector.extract_strided_slice %26 {offsets = [0, 32], sizes = [16, 32], strides = [1, 1]} : vector<16x96xf32> to vector<16x32xf32>
    %30 = vector.shape_cast %29 : vector<16x32xf32> to vector<2x8x32xf32>
    %31 = vector.extract_strided_slice %26 {offsets = [0, 64], sizes = [16, 32], strides = [1, 1]} : vector<16x96xf32> to vector<16x32xf32>
    %32 = vector.shape_cast %31 : vector<16x32xf32> to vector<2x8x32xf32>
    %c0_19 = arith.constant 0 : index
    %c0_20 = arith.constant 0 : index
    %c0_21 = arith.constant 0 : index
    %33 = vector.load %arg2[%c0_19, %c0_20, %c0_21] : memref<2x8x8xf32, #tpu.memory_space<vmem>>, vector<2x8x8xf32>
    %cst_22 = arith.constant 0.000000e+00 : f32
    %34 = vector.broadcast %cst_22 : f32 to vector<2x8x8xf32>
    %35 = arith.cmpf oeq, %33, %34 : vector<2x8x8xf32>
    %cst_23 = arith.constant -1.000000e+09 : f32
    %cst_24 = arith.constant 0.000000e+00 : f32
    %36 = vector.broadcast %cst_23 : f32 to vector<2x8x8xf32>
    %37 = vector.broadcast %cst_24 : f32 to vector<2x8x8xf32>
    %38 = arith.select %35, %36, %37 : vector<2x8x8xi1>, vector<2x8x8xf32>
    %39 = vector.extract_strided_slice %28 {offsets = [0, 0, 0], sizes = [2, 8, 8], strides = [1, 1, 1]} : vector<2x8x32xf32> to vector<2x8x8xf32>
    %40 = vector.extract_strided_slice %30 {offsets = [0, 0, 0], sizes = [2, 8, 8], strides = [1, 1, 1]} : vector<2x8x32xf32> to vector<2x8x8xf32>
    %41 = vector.extract_strided_slice %32 {offsets = [0, 0, 0], sizes = [2, 8, 8], strides = [1, 1, 1]} : vector<2x8x32xf32> to vector<2x8x8xf32>
    "tpu.trace_start"() <{level = 10 : i32, message = "bqd,bkd->bqk"}> : () -> ()
    %cst_25 = arith.constant dense<0.000000e+00> : vector<2x8x8xf32>
    %42 = tpu.matmul %39, %40, %cst_25 {dimension_numbers = #tpu.dot_dimension_numbers<[2], [2], [1], [1], [0, 0, 0, 1, 1, 1], [0], [0]>} : vector<2x8x8xf32>, vector<2x8x8xf32>, vector<2x8x8xf32> -> vector<2x8x8xf32>
    "tpu.trace_stop"() : () -> ()
    %cst_26 = arith.constant 0.353553385 : f32
    %43 = vector.broadcast %cst_26 : f32 to vector<2x8x8xf32>
    %44 = arith.mulf %42, %43 : vector<2x8x8xf32>
    %45 = arith.addf %44, %38 : vector<2x8x8xf32>
    %cst_27 = arith.constant dense<0xFF800000> : vector<2x8xf32>
    %46 = vector.multi_reduction <maximumf>, %45, %cst_27 [2] : vector<2x8x8xf32> to vector<2x8xf32>
    %47 = vector.shape_cast %46 : vector<2x8xf32> to vector<2x8x1xf32>
    %48 = vector.broadcast %47 : vector<2x8x1xf32> to vector<2x8x8xf32>
    %49 = arith.subf %45, %48 : vector<2x8x8xf32>
    %50 = math.exp %49 : vector<2x8x8xf32>
    %cst_28 = arith.constant dense<0.000000e+00> : vector<2x8xf32>
    %51 = vector.multi_reduction <add>, %50, %cst_28 [2] : vector<2x8x8xf32> to vector<2x8xf32>
    %52 = vector.shape_cast %51 : vector<2x8xf32> to vector<2x8x1xf32>
    %53 = tpu.reciprocal %52 {approx = true} : vector<2x8x1xf32> -> vector<2x8x1xf32>
    %54 = vector.broadcast %53 : vector<2x8x1xf32> to vector<2x8x8xf32>
    %55 = arith.mulf %50, %54 : vector<2x8x8xf32>
    "tpu.trace_start"() <{level = 10 : i32, message = "bqk,bkd->bqd"}> : () -> ()
    %cst_29 = arith.constant dense<0.000000e+00> : vector<2x8x8xf32>
    %56 = tpu.matmul %55, %41, %cst_29 {dimension_numbers = #tpu.dot_dimension_numbers<[2], [1], [1], [2], [0, 0, 0, 1, 1, 2], [0], [0]>} : vector<2x8x8xf32>, vector<2x8x8xf32>, vector<2x8x8xf32> -> vector<2x8x8xf32>
    "tpu.trace_stop"() : () -> ()
    %57 = vector.extract_strided_slice %28 {offsets = [0, 0, 8], sizes = [2, 8, 8], strides = [1, 1, 1]} : vector<2x8x32xf32> to vector<2x8x8xf32>
    %58 = vector.extract_strided_slice %30 {offsets = [0, 0, 8], sizes = [2, 8, 8], strides = [1, 1, 1]} : vector<2x8x32xf32> to vector<2x8x8xf32>
    %59 = vector.extract_strided_slice %32 {offsets = [0, 0, 8], sizes = [2, 8, 8], strides = [1, 1, 1]} : vector<2x8x32xf32> to vector<2x8x8xf32>
    "tpu.trace_start"() <{level = 10 : i32, message = "bqd,bkd->bqk"}> : () -> ()
    %cst_30 = arith.constant dense<0.000000e+00> : vector<2x8x8xf32>
    %60 = tpu.matmul %57, %58, %cst_30 {dimension_numbers = #tpu.dot_dimension_numbers<[2], [2], [1], [1], [0, 0, 0, 1, 1, 1], [0], [0]>} : vector<2x8x8xf32>, vector<2x8x8xf32>, vector<2x8x8xf32> -> vector<2x8x8xf32>
    "tpu.trace_stop"() : () -> ()
    %cst_31 = arith.constant 0.353553385 : f32
    %61 = vector.broadcast %cst_31 : f32 to vector<2x8x8xf32>
    %62 = arith.mulf %60, %61 : vector<2x8x8xf32>
    %63 = arith.addf %62, %38 : vector<2x8x8xf32>
    %cst_32 = arith.constant dense<0xFF800000> : vector<2x8xf32>
    %64 = vector.multi_reduction <maximumf>, %63, %cst_32 [2] : vector<2x8x8xf32> to vector<2x8xf32>
    %65 = vector.shape_cast %64 : vector<2x8xf32> to vector<2x8x1xf32>
    %66 = vector.broadcast %65 : vector<2x8x1xf32> to vector<2x8x8xf32>
    %67 = arith.subf %63, %66 : vector<2x8x8xf32>
    %68 = math.exp %67 : vector<2x8x8xf32>
    %cst_33 = arith.constant dense<0.000000e+00> : vector<2x8xf32>
    %69 = vector.multi_reduction <add>, %68, %cst_33 [2] : vector<2x8x8xf32> to vector<2x8xf32>
    %70 = vector.shape_cast %69 : vector<2x8xf32> to vector<2x8x1xf32>
    %71 = tpu.reciprocal %70 {approx = true} : vector<2x8x1xf32> -> vector<2x8x1xf32>
    %72 = vector.broadcast %71 : vector<2x8x1xf32> to vector<2x8x8xf32>
    %73 = arith.mulf %68, %72 : vector<2x8x8xf32>
    "tpu.trace_start"() <{level = 10 : i32, message = "bqk,bkd->bqd"}> : () -> ()
    %cst_34 = arith.constant dense<0.000000e+00> : vector<2x8x8xf32>
    %74 = tpu.matmul %73, %59, %cst_34 {dimension_numbers = #tpu.dot_dimension_numbers<[2], [1], [1], [2], [0, 0, 0, 1, 1, 2], [0], [0]>} : vector<2x8x8xf32>, vector<2x8x8xf32>, vector<2x8x8xf32> -> vector<2x8x8xf32>
    "tpu.trace_stop"() : () -> ()
    %75 = vector.extract_strided_slice %28 {offsets = [0, 0, 16], sizes = [2, 8, 8], strides = [1, 1, 1]} : vector<2x8x32xf32> to vector<2x8x8xf32>
    %76 = vector.extract_strided_slice %30 {offsets = [0, 0, 16], sizes = [2, 8, 8], strides = [1, 1, 1]} : vector<2x8x32xf32> to vector<2x8x8xf32>
    %77 = vector.extract_strided_slice %32 {offsets = [0, 0, 16], sizes = [2, 8, 8], strides = [1, 1, 1]} : vector<2x8x32xf32> to vector<2x8x8xf32>
    "tpu.trace_start"() <{level = 10 : i32, message = "bqd,bkd->bqk"}> : () -> ()
    %cst_35 = arith.constant dense<0.000000e+00> : vector<2x8x8xf32>
    %78 = tpu.matmul %75, %76, %cst_35 {dimension_numbers = #tpu.dot_dimension_numbers<[2], [2], [1], [1], [0, 0, 0, 1, 1, 1], [0], [0]>} : vector<2x8x8xf32>, vector<2x8x8xf32>, vector<2x8x8xf32> -> vector<2x8x8xf32>
    "tpu.trace_stop"() : () -> ()
    %cst_36 = arith.constant 0.353553385 : f32
    %79 = vector.broadcast %cst_36 : f32 to vector<2x8x8xf32>
    %80 = arith.mulf %78, %79 : vector<2x8x8xf32>
    %81 = arith.addf %80, %38 : vector<2x8x8xf32>
    %cst_37 = arith.constant dense<0xFF800000> : vector<2x8xf32>
    %82 = vector.multi_reduction <maximumf>, %81, %cst_37 [2] : vector<2x8x8xf32> to vector<2x8xf32>
    %83 = vector.shape_cast %82 : vector<2x8xf32> to vector<2x8x1xf32>
    %84 = vector.broadcast %83 : vector<2x8x1xf32> to vector<2x8x8xf32>
    %85 = arith.subf %81, %84 : vector<2x8x8xf32>
    %86 = math.exp %85 : vector<2x8x8xf32>
    %cst_38 = arith.constant dense<0.000000e+00> : vector<2x8xf32>
    %87 = vector.multi_reduction <add>, %86, %cst_38 [2] : vector<2x8x8xf32> to vector<2x8xf32>
    %88 = vector.shape_cast %87 : vector<2x8xf32> to vector<2x8x1xf32>
    %89 = tpu.reciprocal %88 {approx = true} : vector<2x8x1xf32> -> vector<2x8x1xf32>
    %90 = vector.broadcast %89 : vector<2x8x1xf32> to vector<2x8x8xf32>
    %91 = arith.mulf %86, %90 : vector<2x8x8xf32>
    "tpu.trace_start"() <{level = 10 : i32, message = "bqk,bkd->bqd"}> : () -> ()
    %cst_39 = arith.constant dense<0.000000e+00> : vector<2x8x8xf32>
    %92 = tpu.matmul %91, %77, %cst_39 {dimension_numbers = #tpu.dot_dimension_numbers<[2], [1], [1], [2], [0, 0, 0, 1, 1, 2], [0], [0]>} : vector<2x8x8xf32>, vector<2x8x8xf32>, vector<2x8x8xf32> -> vector<2x8x8xf32>
    "tpu.trace_stop"() : () -> ()
    %93 = vector.extract_strided_slice %28 {offsets = [0, 0, 24], sizes = [2, 8, 8], strides = [1, 1, 1]} : vector<2x8x32xf32> to vector<2x8x8xf32>
    %94 = vector.extract_strided_slice %30 {offsets = [0, 0, 24], sizes = [2, 8, 8], strides = [1, 1, 1]} : vector<2x8x32xf32> to vector<2x8x8xf32>
    %95 = vector.extract_strided_slice %32 {offsets = [0, 0, 24], sizes = [2, 8, 8], strides = [1, 1, 1]} : vector<2x8x32xf32> to vector<2x8x8xf32>
    "tpu.trace_start"() <{level = 10 : i32, message = "bqd,bkd->bqk"}> : () -> ()
    %cst_40 = arith.constant dense<0.000000e+00> : vector<2x8x8xf32>
    %96 = tpu.matmul %93, %94, %cst_40 {dimension_numbers = #tpu.dot_dimension_numbers<[2], [2], [1], [1], [0, 0, 0, 1, 1, 1], [0], [0]>} : vector<2x8x8xf32>, vector<2x8x8xf32>, vector<2x8x8xf32> -> vector<2x8x8xf32>
    "tpu.trace_stop"() : () -> ()
    %cst_41 = arith.constant 0.353553385 : f32
    %97 = vector.broadcast %cst_41 : f32 to vector<2x8x8xf32>
    %98 = arith.mulf %96, %97 : vector<2x8x8xf32>
    %99 = arith.addf %98, %38 : vector<2x8x8xf32>
    %cst_42 = arith.constant dense<0xFF800000> : vector<2x8xf32>
    %100 = vector.multi_reduction <maximumf>, %99, %cst_42 [2] : vector<2x8x8xf32> to vector<2x8xf32>
    %101 = vector.shape_cast %100 : vector<2x8xf32> to vector<2x8x1xf32>
    %102 = vector.broadcast %101 : vector<2x8x1xf32> to vector<2x8x8xf32>
    %103 = arith.subf %99, %102 : vector<2x8x8xf32>
    %104 = math.exp %103 : vector<2x8x8xf32>
    %cst_43 = arith.constant dense<0.000000e+00> : vector<2x8xf32>
    %105 = vector.multi_reduction <add>, %104, %cst_43 [2] : vector<2x8x8xf32> to vector<2x8xf32>
    %106 = vector.shape_cast %105 : vector<2x8xf32> to vector<2x8x1xf32>
    %107 = tpu.reciprocal %106 {approx = true} : vector<2x8x1xf32> -> vector<2x8x1xf32>
    %108 = vector.broadcast %107 : vector<2x8x1xf32> to vector<2x8x8xf32>
    %109 = arith.mulf %104, %108 : vector<2x8x8xf32>
    "tpu.trace_start"() <{level = 10 : i32, message = "bqk,bkd->bqd"}> : () -> ()
    %cst_44 = arith.constant dense<0.000000e+00> : vector<2x8x8xf32>
    %110 = tpu.matmul %109, %95, %cst_44 {dimension_numbers = #tpu.dot_dimension_numbers<[2], [1], [1], [2], [0, 0, 0, 1, 1, 2], [0], [0]>} : vector<2x8x8xf32>, vector<2x8x8xf32>, vector<2x8x8xf32> -> vector<2x8x8xf32>
    "tpu.trace_stop"() : () -> ()
    %111 = tpu.concatenate %56, %74, %92, %110 in 2 : vector<2x8x8xf32>, vector<2x8x8xf32>, vector<2x8x8xf32>, vector<2x8x8xf32> -> vector<2x8x32xf32>
    %112 = vector.shape_cast %111 : vector<2x8x32xf32> to vector<16x32xf32>
    %113 = arith.truncf %112 : vector<16x32xf32> to vector<16x32xbf16>
    %cst_45 = arith.constant dense<0.000000e+00> : vector<16x32xf32>
    %114 = tpu.matmul %113, %1, %cst_45 {dimension_numbers = #tpu.dot_dimension_numbers<[1], [0], [0], [1], [0, 0, 1, 1], [], []>} : vector<16x32xbf16>, vector<32x32xbf16>, vector<16x32xf32> -> vector<16x32xf32>
    %115 = arith.addf %114, %23 : vector<16x32xf32>
    %cst_46 = arith.constant dense<0.000000e+00> : vector<16xf32>
    %116 = vector.multi_reduction <add>, %115, %cst_46 [1] : vector<16x32xf32> to vector<16xf32>
    %117 = vector.shape_cast %116 : vector<16xf32> to vector<16x1xf32>
    %cst_47 = arith.constant 3.200000e+01 : f32
    %118 = vector.broadcast %cst_47 : f32 to vector<16x1xf32>
    %119 = arith.divf %117, %118 : vector<16x1xf32>
    %120 = vector.broadcast %119 : vector<16x1xf32> to vector<16x32xf32>
    %121 = arith.subf %115, %120 : vector<16x32xf32>
    %122 = arith.mulf %121, %121 : vector<16x32xf32>
    %cst_48 = arith.constant dense<0.000000e+00> : vector<16xf32>
    %123 = vector.multi_reduction <add>, %122, %cst_48 [1] : vector<16x32xf32> to vector<16xf32>
    %124 = vector.shape_cast %123 : vector<16xf32> to vector<16x1xf32>
    %cst_49 = arith.constant 3.200000e+01 : f32
    %125 = vector.broadcast %cst_49 : f32 to vector<16x1xf32>
    %126 = arith.divf %124, %125 : vector<16x1xf32>
    %127 = vector.broadcast %119 : vector<16x1xf32> to vector<16x32xf32>
    %128 = arith.subf %115, %127 : vector<16x32xf32>
    %cst_50 = arith.constant 9.99999997E-7 : f32
    %129 = vector.broadcast %cst_50 : f32 to vector<16x1xf32>
    %130 = arith.addf %126, %129 : vector<16x1xf32>
    %131 = math.rsqrt %130 : vector<16x1xf32>
    %132 = vector.broadcast %131 : vector<16x1xf32> to vector<16x32xf32>
    %133 = arith.mulf %128, %132 : vector<16x32xf32>
    %134 = vector.broadcast %12 : vector<1x32xf32> to vector<16x32xf32>
    %135 = arith.mulf %133, %134 : vector<16x32xf32>
    %136 = vector.broadcast %14 : vector<1x32xf32> to vector<16x32xf32>
    %137 = arith.addf %135, %136 : vector<16x32xf32>
    %138 = arith.truncf %137 : vector<16x32xf32> to vector<16x32xbf16>
    %cst_51 = arith.constant dense<0.000000e+00> : vector<16x32xf32>
    %139 = tpu.matmul %138, %2, %cst_51 {dimension_numbers = #tpu.dot_dimension_numbers<[1], [0], [0], [1], [0, 0, 1, 1], [], []>} : vector<16x32xbf16>, vector<32x32xbf16>, vector<16x32xf32> -> vector<16x32xf32>
    %140 = vector.shape_cast %139 : vector<16x32xf32> to vector<2x8x32xf32>
    %141 = arith.truncf %24 : vector<32x32xf32> to vector<32x32xbf16>
    %cst_52 = arith.constant dense<0.000000e+00> : vector<32x64xf32>
    %142 = tpu.matmul %141, %3, %cst_52 {dimension_numbers = #tpu.dot_dimension_numbers<[1], [0], [0], [1], [0, 0, 1, 1], [], []>} : vector<32x32xbf16>, vector<32x64xbf16>, vector<32x64xf32> -> vector<32x64xf32>
    %143 = vector.extract_strided_slice %142 {offsets = [0, 0], sizes = [32, 32], strides = [1, 1]} : vector<32x64xf32> to vector<32x32xf32>
    %144 = vector.shape_cast %143 : vector<32x32xf32> to vector<2x16x32xf32>
    %145 = vector.extract_strided_slice %142 {offsets = [0, 32], sizes = [32, 32], strides = [1, 1]} : vector<32x64xf32> to vector<32x32xf32>
    %146 = vector.shape_cast %145 : vector<32x32xf32> to vector<2x16x32xf32>
    %c0_53 = arith.constant 0 : index
    %c0_54 = arith.constant 0 : index
    %c0_55 = arith.constant 0 : index
    %147 = vector.load %arg3[%c0_53, %c0_54, %c0_55] : memref<2x8x16xf32, #tpu.memory_space<vmem>>, vector<2x8x16xf32>
    %cst_56 = arith.constant 0.000000e+00 : f32
    %148 = vector.broadcast %cst_56 : f32 to vector<2x8x16xf32>
    %149 = arith.cmpf oeq, %147, %148 : vector<2x8x16xf32>
    %cst_57 = arith.constant -1.000000e+09 : f32
    %cst_58 = arith.constant 0.000000e+00 : f32
    %150 = vector.broadcast %cst_57 : f32 to vector<2x8x16xf32>
    %151 = vector.broadcast %cst_58 : f32 to vector<2x8x16xf32>
    %152 = arith.select %149, %150, %151 : vector<2x8x16xi1>, vector<2x8x16xf32>
    %153 = vector.extract_strided_slice %140 {offsets = [0, 0, 0], sizes = [2, 8, 8], strides = [1, 1, 1]} : vector<2x8x32xf32> to vector<2x8x8xf32>
    %154 = vector.extract_strided_slice %144 {offsets = [0, 0, 0], sizes = [2, 16, 8], strides = [1, 1, 1]} : vector<2x16x32xf32> to vector<2x16x8xf32>
    %155 = vector.extract_strided_slice %146 {offsets = [0, 0, 0], sizes = [2, 16, 8], strides = [1, 1, 1]} : vector<2x16x32xf32> to vector<2x16x8xf32>
    "tpu.trace_start"() <{level = 10 : i32, message = "bqd,bkd->bqk"}> : () -> ()
    %cst_59 = arith.constant dense<0.000000e+00> : vector<2x8x16xf32>
    %156 = tpu.matmul %153, %154, %cst_59 {dimension_numbers = #tpu.dot_dimension_numbers<[2], [2], [1], [1], [0, 0, 0, 1, 1, 1], [0], [0]>} : vector<2x8x8xf32>, vector<2x16x8xf32>, vector<2x8x16xf32> -> vector<2x8x16xf32>
    "tpu.trace_stop"() : () -> ()
    %cst_60 = arith.constant 0.353553385 : f32
    %157 = vector.broadcast %cst_60 : f32 to vector<2x8x16xf32>
    %158 = arith.mulf %156, %157 : vector<2x8x16xf32>
    %159 = arith.addf %158, %152 : vector<2x8x16xf32>
    %cst_61 = arith.constant dense<0xFF800000> : vector<2x8xf32>
    %160 = vector.multi_reduction <maximumf>, %159, %cst_61 [2] : vector<2x8x16xf32> to vector<2x8xf32>
    %161 = vector.shape_cast %160 : vector<2x8xf32> to vector<2x8x1xf32>
    %162 = vector.broadcast %161 : vector<2x8x1xf32> to vector<2x8x16xf32>
    %163 = arith.subf %159, %162 : vector<2x8x16xf32>
    %164 = math.exp %163 : vector<2x8x16xf32>
    %cst_62 = arith.constant dense<0.000000e+00> : vector<2x8xf32>
    %165 = vector.multi_reduction <add>, %164, %cst_62 [2] : vector<2x8x16xf32> to vector<2x8xf32>
    %166 = vector.shape_cast %165 : vector<2x8xf32> to vector<2x8x1xf32>
    %167 = tpu.reciprocal %166 {approx = true} : vector<2x8x1xf32> -> vector<2x8x1xf32>
    %168 = vector.broadcast %167 : vector<2x8x1xf32> to vector<2x8x16xf32>
    %169 = arith.mulf %164, %168 : vector<2x8x16xf32>
    "tpu.trace_start"() <{level = 10 : i32, message = "bqk,bkd->bqd"}> : () -> ()
    %cst_63 = arith.constant dense<0.000000e+00> : vector<2x8x8xf32>
    %170 = tpu.matmul %169, %155, %cst_63 {dimension_numbers = #tpu.dot_dimension_numbers<[2], [1], [1], [2], [0, 0, 0, 1, 1, 2], [0], [0]>} : vector<2x8x16xf32>, vector<2x16x8xf32>, vector<2x8x8xf32> -> vector<2x8x8xf32>
    "tpu.trace_stop"() : () -> ()
    %171 = vector.extract_strided_slice %140 {offsets = [0, 0, 8], sizes = [2, 8, 8], strides = [1, 1, 1]} : vector<2x8x32xf32> to vector<2x8x8xf32>
    %172 = vector.extract_strided_slice %144 {offsets = [0, 0, 8], sizes = [2, 16, 8], strides = [1, 1, 1]} : vector<2x16x32xf32> to vector<2x16x8xf32>
    %173 = vector.extract_strided_slice %146 {offsets = [0, 0, 8], sizes = [2, 16, 8], strides = [1, 1, 1]} : vector<2x16x32xf32> to vector<2x16x8xf32>
    "tpu.trace_start"() <{level = 10 : i32, message = "bqd,bkd->bqk"}> : () -> ()
    %cst_64 = arith.constant dense<0.000000e+00> : vector<2x8x16xf32>
    %174 = tpu.matmul %171, %172, %cst_64 {dimension_numbers = #tpu.dot_dimension_numbers<[2], [2], [1], [1], [0, 0, 0, 1, 1, 1], [0], [0]>} : vector<2x8x8xf32>, vector<2x16x8xf32>, vector<2x8x16xf32> -> vector<2x8x16xf32>
    "tpu.trace_stop"() : () -> ()
    %cst_65 = arith.constant 0.353553385 : f32
    %175 = vector.broadcast %cst_65 : f32 to vector<2x8x16xf32>
    %176 = arith.mulf %174, %175 : vector<2x8x16xf32>
    %177 = arith.addf %176, %152 : vector<2x8x16xf32>
    %cst_66 = arith.constant dense<0xFF800000> : vector<2x8xf32>
    %178 = vector.multi_reduction <maximumf>, %177, %cst_66 [2] : vector<2x8x16xf32> to vector<2x8xf32>
    %179 = vector.shape_cast %178 : vector<2x8xf32> to vector<2x8x1xf32>
    %180 = vector.broadcast %179 : vector<2x8x1xf32> to vector<2x8x16xf32>
    %181 = arith.subf %177, %180 : vector<2x8x16xf32>
    %182 = math.exp %181 : vector<2x8x16xf32>
    %cst_67 = arith.constant dense<0.000000e+00> : vector<2x8xf32>
    %183 = vector.multi_reduction <add>, %182, %cst_67 [2] : vector<2x8x16xf32> to vector<2x8xf32>
    %184 = vector.shape_cast %183 : vector<2x8xf32> to vector<2x8x1xf32>
    %185 = tpu.reciprocal %184 {approx = true} : vector<2x8x1xf32> -> vector<2x8x1xf32>
    %186 = vector.broadcast %185 : vector<2x8x1xf32> to vector<2x8x16xf32>
    %187 = arith.mulf %182, %186 : vector<2x8x16xf32>
    "tpu.trace_start"() <{level = 10 : i32, message = "bqk,bkd->bqd"}> : () -> ()
    %cst_68 = arith.constant dense<0.000000e+00> : vector<2x8x8xf32>
    %188 = tpu.matmul %187, %173, %cst_68 {dimension_numbers = #tpu.dot_dimension_numbers<[2], [1], [1], [2], [0, 0, 0, 1, 1, 2], [0], [0]>} : vector<2x8x16xf32>, vector<2x16x8xf32>, vector<2x8x8xf32> -> vector<2x8x8xf32>
    "tpu.trace_stop"() : () -> ()
    %189 = vector.extract_strided_slice %140 {offsets = [0, 0, 16], sizes = [2, 8, 8], strides = [1, 1, 1]} : vector<2x8x32xf32> to vector<2x8x8xf32>
    %190 = vector.extract_strided_slice %144 {offsets = [0, 0, 16], sizes = [2, 16, 8], strides = [1, 1, 1]} : vector<2x16x32xf32> to vector<2x16x8xf32>
    %191 = vector.extract_strided_slice %146 {offsets = [0, 0, 16], sizes = [2, 16, 8], strides = [1, 1, 1]} : vector<2x16x32xf32> to vector<2x16x8xf32>
    "tpu.trace_start"() <{level = 10 : i32, message = "bqd,bkd->bqk"}> : () -> ()
    %cst_69 = arith.constant dense<0.000000e+00> : vector<2x8x16xf32>
    %192 = tpu.matmul %189, %190, %cst_69 {dimension_numbers = #tpu.dot_dimension_numbers<[2], [2], [1], [1], [0, 0, 0, 1, 1, 1], [0], [0]>} : vector<2x8x8xf32>, vector<2x16x8xf32>, vector<2x8x16xf32> -> vector<2x8x16xf32>
    "tpu.trace_stop"() : () -> ()
    %cst_70 = arith.constant 0.353553385 : f32
    %193 = vector.broadcast %cst_70 : f32 to vector<2x8x16xf32>
    %194 = arith.mulf %192, %193 : vector<2x8x16xf32>
    %195 = arith.addf %194, %152 : vector<2x8x16xf32>
    %cst_71 = arith.constant dense<0xFF800000> : vector<2x8xf32>
    %196 = vector.multi_reduction <maximumf>, %195, %cst_71 [2] : vector<2x8x16xf32> to vector<2x8xf32>
    %197 = vector.shape_cast %196 : vector<2x8xf32> to vector<2x8x1xf32>
    %198 = vector.broadcast %197 : vector<2x8x1xf32> to vector<2x8x16xf32>
    %199 = arith.subf %195, %198 : vector<2x8x16xf32>
    %200 = math.exp %199 : vector<2x8x16xf32>
    %cst_72 = arith.constant dense<0.000000e+00> : vector<2x8xf32>
    %201 = vector.multi_reduction <add>, %200, %cst_72 [2] : vector<2x8x16xf32> to vector<2x8xf32>
    %202 = vector.shape_cast %201 : vector<2x8xf32> to vector<2x8x1xf32>
    %203 = tpu.reciprocal %202 {approx = true} : vector<2x8x1xf32> -> vector<2x8x1xf32>
    %204 = vector.broadcast %203 : vector<2x8x1xf32> to vector<2x8x16xf32>
    %205 = arith.mulf %200, %204 : vector<2x8x16xf32>
    "tpu.trace_start"() <{level = 10 : i32, message = "bqk,bkd->bqd"}> : () -> ()
    %cst_73 = arith.constant dense<0.000000e+00> : vector<2x8x8xf32>
    %206 = tpu.matmul %205, %191, %cst_73 {dimension_numbers = #tpu.dot_dimension_numbers<[2], [1], [1], [2], [0, 0, 0, 1, 1, 2], [0], [0]>} : vector<2x8x16xf32>, vector<2x16x8xf32>, vector<2x8x8xf32> -> vector<2x8x8xf32>
    "tpu.trace_stop"() : () -> ()
    %207 = vector.extract_strided_slice %140 {offsets = [0, 0, 24], sizes = [2, 8, 8], strides = [1, 1, 1]} : vector<2x8x32xf32> to vector<2x8x8xf32>
    %208 = vector.extract_strided_slice %144 {offsets = [0, 0, 24], sizes = [2, 16, 8], strides = [1, 1, 1]} : vector<2x16x32xf32> to vector<2x16x8xf32>
    %209 = vector.extract_strided_slice %146 {offsets = [0, 0, 24], sizes = [2, 16, 8], strides = [1, 1, 1]} : vector<2x16x32xf32> to vector<2x16x8xf32>
    "tpu.trace_start"() <{level = 10 : i32, message = "bqd,bkd->bqk"}> : () -> ()
    %cst_74 = arith.constant dense<0.000000e+00> : vector<2x8x16xf32>
    %210 = tpu.matmul %207, %208, %cst_74 {dimension_numbers = #tpu.dot_dimension_numbers<[2], [2], [1], [1], [0, 0, 0, 1, 1, 1], [0], [0]>} : vector<2x8x8xf32>, vector<2x16x8xf32>, vector<2x8x16xf32> -> vector<2x8x16xf32>
    "tpu.trace_stop"() : () -> ()
    %cst_75 = arith.constant 0.353553385 : f32
    %211 = vector.broadcast %cst_75 : f32 to vector<2x8x16xf32>
    %212 = arith.mulf %210, %211 : vector<2x8x16xf32>
    %213 = arith.addf %212, %152 : vector<2x8x16xf32>
    %cst_76 = arith.constant dense<0xFF800000> : vector<2x8xf32>
    %214 = vector.multi_reduction <maximumf>, %213, %cst_76 [2] : vector<2x8x16xf32> to vector<2x8xf32>
    %215 = vector.shape_cast %214 : vector<2x8xf32> to vector<2x8x1xf32>
    %216 = vector.broadcast %215 : vector<2x8x1xf32> to vector<2x8x16xf32>
    %217 = arith.subf %213, %216 : vector<2x8x16xf32>
    %218 = math.exp %217 : vector<2x8x16xf32>
    %cst_77 = arith.constant dense<0.000000e+00> : vector<2x8xf32>
    %219 = vector.multi_reduction <add>, %218, %cst_77 [2] : vector<2x8x16xf32> to vector<2x8xf32>
    %220 = vector.shape_cast %219 : vector<2x8xf32> to vector<2x8x1xf32>
    %221 = tpu.reciprocal %220 {approx = true} : vector<2x8x1xf32> -> vector<2x8x1xf32>
    %222 = vector.broadcast %221 : vector<2x8x1xf32> to vector<2x8x16xf32>
    %223 = arith.mulf %218, %222 : vector<2x8x16xf32>
    "tpu.trace_start"() <{level = 10 : i32, message = "bqk,bkd->bqd"}> : () -> ()
    %cst_78 = arith.constant dense<0.000000e+00> : vector<2x8x8xf32>
    %224 = tpu.matmul %223, %209, %cst_78 {dimension_numbers = #tpu.dot_dimension_numbers<[2], [1], [1], [2], [0, 0, 0, 1, 1, 2], [0], [0]>} : vector<2x8x16xf32>, vector<2x16x8xf32>, vector<2x8x8xf32> -> vector<2x8x8xf32>
    "tpu.trace_stop"() : () -> ()
    %225 = tpu.concatenate %170, %188, %206, %224 in 2 : vector<2x8x8xf32>, vector<2x8x8xf32>, vector<2x8x8xf32>, vector<2x8x8xf32> -> vector<2x8x32xf32>
    %226 = vector.shape_cast %225 : vector<2x8x32xf32> to vector<16x32xf32>
    %227 = arith.truncf %226 : vector<16x32xf32> to vector<16x32xbf16>
    %cst_79 = arith.constant dense<0.000000e+00> : vector<16x32xf32>
    %228 = tpu.matmul %227, %4, %cst_79 {dimension_numbers = #tpu.dot_dimension_numbers<[1], [0], [0], [1], [0, 0, 1, 1], [], []>} : vector<16x32xbf16>, vector<32x32xbf16>, vector<16x32xf32> -> vector<16x32xf32>
    %229 = arith.addf %228, %137 : vector<16x32xf32>
    %cst_80 = arith.constant dense<0.000000e+00> : vector<16xf32>
    %230 = vector.multi_reduction <add>, %229, %cst_80 [1] : vector<16x32xf32> to vector<16xf32>
    %231 = vector.shape_cast %230 : vector<16xf32> to vector<16x1xf32>
    %cst_81 = arith.constant 3.200000e+01 : f32
    %232 = vector.broadcast %cst_81 : f32 to vector<16x1xf32>
    %233 = arith.divf %231, %232 : vector<16x1xf32>
    %234 = vector.broadcast %233 : vector<16x1xf32> to vector<16x32xf32>
    %235 = arith.subf %229, %234 : vector<16x32xf32>
    %236 = arith.mulf %235, %235 : vector<16x32xf32>
    %cst_82 = arith.constant dense<0.000000e+00> : vector<16xf32>
    %237 = vector.multi_reduction <add>, %236, %cst_82 [1] : vector<16x32xf32> to vector<16xf32>
    %238 = vector.shape_cast %237 : vector<16xf32> to vector<16x1xf32>
    %cst_83 = arith.constant 3.200000e+01 : f32
    %239 = vector.broadcast %cst_83 : f32 to vector<16x1xf32>
    %240 = arith.divf %238, %239 : vector<16x1xf32>
    %241 = vector.broadcast %233 : vector<16x1xf32> to vector<16x32xf32>
    %242 = arith.subf %229, %241 : vector<16x32xf32>
    %cst_84 = arith.constant 9.99999997E-7 : f32
    %243 = vector.broadcast %cst_84 : f32 to vector<16x1xf32>
    %244 = arith.addf %240, %243 : vector<16x1xf32>
    %245 = math.rsqrt %244 : vector<16x1xf32>
    %246 = vector.broadcast %245 : vector<16x1xf32> to vector<16x32xf32>
    %247 = arith.mulf %242, %246 : vector<16x32xf32>
    %248 = vector.broadcast %16 : vector<1x32xf32> to vector<16x32xf32>
    %249 = arith.mulf %247, %248 : vector<16x32xf32>
    %250 = vector.broadcast %18 : vector<1x32xf32> to vector<16x32xf32>
    %251 = arith.addf %249, %250 : vector<16x32xf32>
    %252 = arith.truncf %251 : vector<16x32xf32> to vector<16x32xbf16>
    %cst_85 = arith.constant dense<0.000000e+00> : vector<16x64xf32>
    %253 = tpu.matmul %252, %5, %cst_85 {dimension_numbers = #tpu.dot_dimension_numbers<[1], [0], [0], [1], [0, 0, 1, 1], [], []>} : vector<16x32xbf16>, vector<32x64xbf16>, vector<16x64xf32> -> vector<16x64xf32>
    %254 = vector.broadcast %8 : vector<1x64xf32> to vector<16x64xf32>
    %255 = arith.addf %253, %254 : vector<16x64xf32>
    %cst_86 = arith.constant 0.000000e+00 : f32
    %256 = vector.broadcast %cst_86 : f32 to vector<16x64xf32>
    %257 = arith.maximumf %255, %256 : vector<16x64xf32>
    %258 = arith.truncf %257 : vector<16x64xf32> to vector<16x64xbf16>
    %cst_87 = arith.constant dense<0.000000e+00> : vector<16x32xf32>
    %259 = tpu.matmul %258, %6, %cst_87 {dimension_numbers = #tpu.dot_dimension_numbers<[1], [0], [0], [1], [0, 0, 1, 1], [], []>} : vector<16x64xbf16>, vector<64x32xbf16>, vector<16x32xf32> -> vector<16x32xf32>
    %260 = vector.broadcast %10 : vector<1x32xf32> to vector<16x32xf32>
    %261 = arith.addf %259, %260 : vector<16x32xf32>
    %262 = arith.addf %261, %251 : vector<16x32xf32>
    %cst_88 = arith.constant dense<0.000000e+00> : vector<16xf32>
    %263 = vector.multi_reduction <add>, %262, %cst_88 [1] : vector<16x32xf32> to vector<16xf32>
    %264 = vector.shape_cast %263 : vector<16xf32> to vector<16x1xf32>
    %cst_89 = arith.constant 3.200000e+01 : f32
    %265 = vector.broadcast %cst_89 : f32 to vector<16x1xf32>
    %266 = arith.divf %264, %265 : vector<16x1xf32>
    %267 = vector.broadcast %266 : vector<16x1xf32> to vector<16x32xf32>
    %268 = arith.subf %262, %267 : vector<16x32xf32>
    %269 = arith.mulf %268, %268 : vector<16x32xf32>
    %cst_90 = arith.constant dense<0.000000e+00> : vector<16xf32>
    %270 = vector.multi_reduction <add>, %269, %cst_90 [1] : vector<16x32xf32> to vector<16xf32>
    %271 = vector.shape_cast %270 : vector<16xf32> to vector<16x1xf32>
    %cst_91 = arith.constant 3.200000e+01 : f32
    %272 = vector.broadcast %cst_91 : f32 to vector<16x1xf32>
    %273 = arith.divf %271, %272 : vector<16x1xf32>
    %274 = vector.broadcast %266 : vector<16x1xf32> to vector<16x32xf32>
    %275 = arith.subf %262, %274 : vector<16x32xf32>
    %cst_92 = arith.constant 9.99999997E-7 : f32
    %276 = vector.broadcast %cst_92 : f32 to vector<16x1xf32>
    %277 = arith.addf %273, %276 : vector<16x1xf32>
    %278 = math.rsqrt %277 : vector<16x1xf32>
    %279 = vector.broadcast %278 : vector<16x1xf32> to vector<16x32xf32>
    %280 = arith.mulf %275, %279 : vector<16x32xf32>
    %281 = vector.broadcast %20 : vector<1x32xf32> to vector<16x32xf32>
    %282 = arith.mulf %280, %281 : vector<16x32xf32>
    %283 = vector.broadcast %22 : vector<1x32xf32> to vector<16x32xf32>
    %284 = arith.addf %282, %283 : vector<16x32xf32>
    %285 = vector.shape_cast %284 : vector<16x32xf32> to vector<2x8x32xf32>
    %286 = vector.extract_strided_slice %285 {offsets = [0, 0, 0], sizes = [2, 1, 32], strides = [1, 1, 1]} : vector<2x8x32xf32> to vector<2x1x32xf32>
    %287 = vector.shape_cast %286 : vector<2x1x32xf32> to vector<2x32xf32>
    %288 = vector.extract_strided_slice %285 {offsets = [0, 1, 0], sizes = [2, 1, 32], strides = [1, 1, 1]} : vector<2x8x32xf32> to vector<2x1x32xf32>
    %289 = vector.shape_cast %288 : vector<2x1x32xf32> to vector<2x32xf32>
    %290 = vector.extract_strided_slice %285 {offsets = [0, 2, 0], sizes = [2, 1, 32], strides = [1, 1, 1]} : vector<2x8x32xf32> to vector<2x1x32xf32>
    %291 = vector.shape_cast %290 : vector<2x1x32xf32> to vector<2x32xf32>
    %292 = vector.extract_strided_slice %285 {offsets = [0, 3, 0], sizes = [2, 1, 32], strides = [1, 1, 1]} : vector<2x8x32xf32> to vector<2x1x32xf32>
    %293 = vector.shape_cast %292 : vector<2x1x32xf32> to vector<2x32xf32>
    %294 = vector.extract_strided_slice %285 {offsets = [0, 4, 0], sizes = [2, 1, 32], strides = [1, 1, 1]} : vector<2x8x32xf32> to vector<2x1x32xf32>
    %295 = vector.shape_cast %294 : vector<2x1x32xf32> to vector<2x32xf32>
    %296 = vector.extract_strided_slice %285 {offsets = [0, 5, 0], sizes = [2, 1, 32], strides = [1, 1, 1]} : vector<2x8x32xf32> to vector<2x1x32xf32>
    %297 = vector.shape_cast %296 : vector<2x1x32xf32> to vector<2x32xf32>
    %298 = vector.extract_strided_slice %285 {offsets = [0, 6, 0], sizes = [2, 1, 32], strides = [1, 1, 1]} : vector<2x8x32xf32> to vector<2x1x32xf32>
    %299 = vector.shape_cast %298 : vector<2x1x32xf32> to vector<2x32xf32>
    %300 = vector.extract_strided_slice %285 {offsets = [0, 7, 0], sizes = [2, 1, 32], strides = [1, 1, 1]} : vector<2x8x32xf32> to vector<2x1x32xf32>
    %301 = vector.shape_cast %300 : vector<2x1x32xf32> to vector<2x32xf32>
    %302 = tpu.concatenate %287, %289, %291, %293, %295, %297, %299, %301 in 1 : vector<2x32xf32>, vector<2x32xf32>, vector<2x32xf32>, vector<2x32xf32>, vector<2x32xf32>, vector<2x32xf32>, vector<2x32xf32>, vector<2x32xf32> -> vector<2x256xf32>
    %c0_93 = arith.constant 0 : index
    %c0_94 = arith.constant 0 : index
    %303 = vector.load %arg5[%c0_93, %c0_94] : memref<2x256xf32, #tpu.memory_space<vmem>>, vector<2x256xf32>
    tpu.vector_store %arg5[%c0_93, %c0_94], %302 {strides = array<i32>} : memref<2x256xf32, #tpu.memory_space<vmem>>, vector<2x256xf32>,
    return
  }
}

</mosaic_0001>

<llo_original>
// kernel: decoder_layer.1
$region0: #{decoder_layer.1}
  #allocation0 [shape = 'u32[]', space=smem, size = 0x4, offset = 0x4, fixed_abs, tag = 'smem constant byte address 0x4 - core index']
  #allocation1 [shape = 'u32[144,128]{1,0:T(1,128)}', space=vmem, size = 0x12000, scoped, tag = 'internal scratch']
  %s0 = inlined_call_operand.hbm [shape: f32[16,32], index: 0, kind: input, shape index: {}]
  %s1 = inlined_call_operand.hbm [shape: f32[32,32], index: 1, kind: input, shape index: {}]
  %s2 = inlined_call_operand.hbm [shape: f32[2,8,8], index: 2, kind: input, shape index: {}]
  %s3 = inlined_call_operand.vmem [shape: f32[2,8,16], index: 3, kind: input, shape index: {}]
  %s4 = inlined_call_operand.hbm [shape: bf16[264,128], index: 4, kind: input, shape index: {}]
  %s5 = inlined_call_operand.vmem [shape: f32[2,256], index: 5, kind: output, shape index: {}]
  %s6 = sld [smem:[#allocation0]]
  $region46: #{decoder_layer.1} parent=0
    _
  %s8 = ssub.s32 1, %s6
  %s9 = scalar_select 0, %s8, %s6
  $region1: #{decoder_layer.1} parent=0
    #allocation2 [shape = 'u8[8192]{0}', space=vmem, size = 0x2000, scoped, tag = 'input window, operand 0, single buffered']
    #allocation3 [shape = 's32[1]{0}', space=sflag, size = 0x4, scoped, tag = 'scoped memory for decoder_layer.1']
    #allocation4 [shape = 'u8[16384]{0}', space=vmem, size = 0x4000, scoped, tag = 'input window, operand 1, single buffered']
    #allocation5 [shape = 's32[1]{0}', space=sflag, size = 0x4, scoped, tag = 'scoped memory for decoder_layer.1']
    #allocation6 [shape = 'u8[8192]{0}', space=vmem, size = 0x2000, scoped, tag = 'input window, operand 2, single buffered']
    #allocation7 [shape = 'u8[67584]{0}', space=vmem, size = 0x10800, scoped, tag = 'input window, operand 4, single buffered']
    #allocation8 [shape = 's32[1]{0}', space=sflag, size = 0x4, scoped, tag = 'scoped memory for decoder_layer.1']
    %10 = vsyncpa [#allocation3], 0
    %11 = vsyncpa [#allocation5], 0
    %12 = vsyncpa [#allocation8], 0
    // Predicated region
    $region2: #{decoder_layer.1} parent=1 // pred_check
      _
    $region3: #{decoder_layer.1} parent=1 // pred_check_branch
      %14 = sbr.rel (0) target = $region5
    $region4: #{decoder_layer.1} parent=1 // pred_region
      %s16 = ssub.s32 256, 256
      %17 = vsyncadd [#allocation3], %s16
      %s18 = sshll.u32 [#allocation2], 4
      %s19 = int_to_ptr.vmem [resolvable:$true] %s18
      %24 = dma.hbm_to_vmem [thread:$0]  %s0, 256, %s19, [#allocation3], 128, 128, 8
    $region5: #{decoder_layer.1} parent=1 // pred_fallthru
      _
    // Predicated region
    $region6: #{decoder_layer.1} parent=1 // pred_check
      _
    $region7: #{decoder_layer.1} parent=1 // pred_check_branch
      %26 = sbr.rel (0) target = $region9
    $region8: #{decoder_layer.1} parent=1 // pred_region
      %s28 = ssub.s32 512, 512
      %29 = vsyncadd [#allocation5], %s28
      %s30 = sshll.u32 [#allocation4], 4
      %s31 = int_to_ptr.vmem [resolvable:$true] %s30
      %36 = dma.hbm_to_vmem [thread:$0]  %s1, 512, %s31, [#allocation5], 128, 128, 8
    $region9: #{decoder_layer.1} parent=1 // pred_fallthru
      _
    // Predicated region
    $region10: #{decoder_layer.1} parent=1 // pred_check
      _
    $region11: #{decoder_layer.1} parent=1 // pred_check_branch
      %38 = sbr.rel (0) target = $region13
    $region12: #{decoder_layer.1} parent=1 // pred_region
      %s40 = ssub.s32 256, 256
      %41 = vsyncadd [#allocation5], %s40
      %s42 = sshll.u32 [#allocation6], 4
      %s43 = int_to_ptr.vmem [resolvable:$true] %s42
      %48 = dma.hbm_to_vmem [thread:$0]  %s2, 256, %s43, [#allocation5], 128, 128, 8
    $region13: #{decoder_layer.1} parent=1 // pred_fallthru
      _
    // Predicated region
    $region14: #{decoder_layer.1} parent=1 // pred_check
      _
    $region15: #{decoder_layer.1} parent=1 // pred_check_branch
      %50 = sbr.rel (0) target = $region17
    $region16: #{decoder_layer.1} parent=1 // pred_region
      _
    $region17: #{decoder_layer.1} parent=1 // pred_fallthru
      _
    // Predicated region
    $region18: #{decoder_layer.1} parent=1 // pred_check
      _
    $region19: #{decoder_layer.1} parent=1 // pred_check_branch
      %52 = sbr.rel (0) target = $region21
    $region20: #{decoder_layer.1} parent=1 // pred_region
      %s54 = ssub.s32 2112, 2112
      %55 = vsyncadd [#allocation8], %s54
      %s56 = sshll.u32 [#allocation7], 4
      %s57 = int_to_ptr.vmem [resolvable:$true] %s56
      %62 = dma.hbm_to_vmem [thread:$0]  %s4, 2112, %s57, [#allocation8], 64, 64, 4
    $region21: #{decoder_layer.1} parent=1 // pred_fallthru
      _
    // Predicated region
    $region22: #{decoder_layer.1} parent=1 // pred_check
      _
    $region23: #{decoder_layer.1} parent=1 // pred_check_branch
      %64 = sbr.rel (0) target = $region25
    $region24: #{decoder_layer.1} parent=1 // pred_region
      %65 = dma.done [#allocation3], 256
    $region25: #{decoder_layer.1} parent=1 // pred_fallthru
      _
    // Predicated region
    $region26: #{decoder_layer.1} parent=1 // pred_check
      _
    $region27: #{decoder_layer.1} parent=1 // pred_check_branch
      %67 = sbr.rel (0) target = $region29
    $region28: #{decoder_layer.1} parent=1 // pred_region
      %68 = dma.done [#allocation5], 512
    $region29: #{decoder_layer.1} parent=1 // pred_fallthru
      _
    // Predicated region
    $region30: #{decoder_layer.1} parent=1 // pred_check
      _
    $region31: #{decoder_layer.1} parent=1 // pred_check_branch
      %70 = sbr.rel (0) target = $region33
    $region32: #{decoder_layer.1} parent=1 // pred_region
      %71 = dma.done [#allocation5], 256
    $region33: #{decoder_layer.1} parent=1 // pred_fallthru
      _
    // Predicated region
    $region34: #{decoder_layer.1} parent=1 // pred_check
      _
    $region35: #{decoder_layer.1} parent=1 // pred_check_branch
      %73 = sbr.rel (0) target = $region37
    $region36: #{decoder_layer.1} parent=1 // pred_region
      %74 = dma.done [#allocation8], 2112
    $region37: #{decoder_layer.1} parent=1 // pred_fallthru
      _
    %v76 = vld [vmem:[#allocation7] sm:$0xf]
    %v77 = vld [vmem:[#allocation7 + $0x4] sm:$0xf]
    %v78 = vld [vmem:[#allocation7 + $0x8] sm:$0xf]
    %v79 = vld [vmem:[#allocation7 + $0xc] sm:$0xf]
    %v80 = vld [vmem:[#allocation7 + $0x10] sm:$0xf]
    %v81 = vld [vmem:[#allocation7 + $0x14] sm:$0xf]
    %v82 = vld [vmem:[#allocation7 + $0x18] sm:$0xf]
    %v83 = vld [vmem:[#allocation7 + $0x1c] sm:$0xf]
    %v84 = vld [vmem:[#allocation7 + $0x20] sm:$0xf]
    %v85 = vld [vmem:[#allocation7 + $0x24] sm:$0xf]
    %v86 = vld [vmem:[#allocation7 + $0x28] sm:$0xf]
    %v87 = vld [vmem:[#allocation7 + $0x2c] sm:$0xf]
    %v88 = vld [vmem:[#allocation7 + $0x30] sm:$0xf]
    %v89 = vld [vmem:[#allocation7 + $0x34] sm:$0xf]
    %v90 = vld [vmem:[#allocation7 + $0x38] sm:$0xf]
    %v91 = vld [vmem:[#allocation7 + $0x3c] sm:$0xf]
    %v92 = vld [vmem:[#allocation7 + $0x40] sm:$0xf]
    %v93 = vld [vmem:[#allocation7 + $0x44] sm:$0xf]
    %v94 = vld [vmem:[#allocation7 + $0x48] sm:$0xf]
    %v95 = vld [vmem:[#allocation7 + $0x4c] sm:$0xf]
    %v96 = vld [vmem:[#allocation7 + $0x50] sm:$0xf]
    %v97 = vld [vmem:[#allocation7 + $0x54] sm:$0xf]
    %v98 = vld [vmem:[#allocation7 + $0x58] sm:$0xf]
    %v99 = vld [vmem:[#allocation7 + $0x5c] sm:$0xf]
    %v100 = vld [vmem:[#allocation7 + $0x60] sm:$0xf]
    %v101 = vld [vmem:[#allocation7 + $0x64] sm:$0xf]
    %v102 = vld [vmem:[#allocation7 + $0x68] sm:$0xf]
    %v103 = vld [vmem:[#allocation7 + $0x6c] sm:$0xf]
    %v104 = vld [vmem:[#allocation7 + $0x70] sm:$0xf]
    %v105 = vld [vmem:[#allocation7 + $0x74] sm:$0xf]
    %v106 = vld [vmem:[#allocation7 + $0x78] sm:$0xf]
    %v107 = vld [vmem:[#allocation7 + $0x7c] sm:$0xf]
    %v108 = vld [vmem:[#allocation7 + $0x80] sm:$0x1]
    %v109 = vunpack.c.l.bf16 %v108
    %v110 = vld [vmem:[#allocation7 + $0x80] sm:$0x2]
    %v111 = vunpack.c.l.bf16 %v110
    %v112 = vld [vmem:[#allocation7 + $0x80] sm:$0x4]
    %v113 = vunpack.c.l.bf16 %v112
    %v114 = vld [vmem:[#allocation7 + $0x80] sm:$0x8]
    %v115 = vunpack.c.l.bf16 %v114
    %v116 = vld [vmem:[#allocation2] sm:$0xff]
    %v117 = vld [vmem:[#allocation2 + $0x8] sm:$0xff]
    %v118 = vld [vmem:[#allocation4] sm:$0xff]
    %v119 = vld [vmem:[#allocation4 + $0x8] sm:$0xff]
    %v120 = vld [vmem:[#allocation4 + $0x10] sm:$0xff]
    %v121 = vld [vmem:[#allocation4 + $0x18] sm:$0xff]
    %v122 = vpack.c.bf16 %v117, %v116
    %v127 = vunpack.c.l.b16 %v76
    %v128 = vunpack.c.l.b16 %v77
    %v129 = vunpack.c.l.b16 %v78
    %v130 = vunpack.c.l.b16 %v79
    %v131 = vpack.c.b16 %v128, %v127
    %v132 = vpack.c.b16 %v130, %v129
    %vm135 = vcmask 261120
    %v137 = vsel %vm135, %v122, 0
    %139 = vmatprep.subr.bf16.mxu0 0
    %140 = vmatpush1.bf16.msra.mxu0 %v131
    %141 = vmatprep.subr.bf16.mxu0 0
    %142 = vmatpush1.bf16.msra.mxu0 %v132
    %143 = vmatprep.subr.bf16.mxu0 0
    %144 = vmatpush1.bf16.msra.mxu0 0
    %145 = vmatprep.subr.bf16.mxu0 0
    %146 = vmatpush1.bf16.msra.mxu0 0
    %147 = vmatprep.subr.bf16.mxu0 0
    %148 = vmatpush1.bf16.msra.mxu0 0
    %149 = vmatprep.subr.bf16.mxu0 0
    %150 = vmatpush1.bf16.msra.mxu0 0
    %151 = vmatprep.subr.bf16.mxu0 0
    %152 = vmatpush1.bf16.msra.mxu0 0
    %153 = vmatprep.subr.bf16.mxu0 0
    %154 = vmatpush1.bf16.msra.mxu0 0
    %155 = vmatprep.subr.bf16.mxu0 0
    %156 = vmatpush1.bf16.msra.mxu0 0
    %157 = vmatprep.subr.bf16.mxu0 0
    %158 = vmatpush1.bf16.msra.mxu0 0
    %159 = vmatprep.subr.bf16.mxu0 0
    %160 = vmatpush1.bf16.msra.mxu0 0
    %161 = vmatprep.subr.bf16.mxu0 0
    %162 = vmatpush1.bf16.msra.mxu0 0
    %163 = vmatprep.subr.bf16.mxu0 0
    %164 = vmatpush1.bf16.msra.mxu0 0
    %165 = vmatprep.subr.bf16.mxu0 0
    %166 = vmatpush1.bf16.msra.mxu0 0
    %167 = vmatprep.subr.bf16.mxu0 0
    %168 = vmatpush1.bf16.msra.mxu0 0
    %169 = vmatprep.subr.bf16.mxu0 0
    %170 = vmatpush1.bf16.msra.mxu0 0
    %171 = vmatprep.mubr.bf16.mxu0 0
    %172 = vmatmul.mubr.bf16.gmra.mrb[0].mxu0 %v137
    %v173 = vpop.f32.mrb[0].mxu0
    %v174 = vadd.f32 0.0, %v173
    %v175 = vpop.f32.mrb[0].mxu0
    %v176 = vpop.f32.mrb[0].mxu0
    %v177 = vadd.f32 0.0, %v176
    %v178 = vpop.f32.mrb[0].mxu0
    %179 = vdwg.mxu0
    %v180 = vld [vmem:[#allocation6] sm:$0xff]
    %v181 = vld [vmem:[#allocation6 + $0x8] sm:$0xff]
    %vm182 = vcmp.eq.f32.partialorder %v180, 0.0
    %vm183 = vcmp.eq.f32.partialorder %v181, 0.0
    %v184 = vsel %vm182, -1e+09, 0.0
    %v185 = vsel %vm183, -1e+09, 0.0
    %187 = vrot.lane.b32.xlu0 %v174, 96
    %v188 = vpop.permute.xlu0 %187
    %vm189 = vcmask 64512
    %v190 = vsel %vm189, %v174, 0
    %v192 = vsel %vm189, %v188, 0
    %194 = vmatprep.subr.mxu0 0.0
    %195 = vmatpush1.xpose.msra.mxu0 %v192
    %196 = vmatprep.subr.mxu0 0.0
    %197 = vmatpush1.xpose.msra.mxu0 0.0
    %198 = vmatprep.subr.mxu0 0.0
    %199 = vmatpush1.xpose.msra.mxu0 0.0
    %200 = vmatprep.subr.mxu0 0.0
    %201 = vmatpush1.xpose.msra.mxu0 0.0
    %202 = vmatprep.subr.mxu0 0.0
    %203 = vmatpush1.xpose.msra.mxu0 0.0
    %204 = vmatprep.subr.mxu0 0.0
    %205 = vmatpush1.xpose.msra.mxu0 0.0
    %206 = vmatprep.subr.mxu0 0.0
    %207 = vmatpush1.xpose.msra.mxu0 0.0
    %208 = vmatprep.subr.mxu0 0.0
    %209 = vmatpush1.xpose.msra.mxu0 0.0
    %210 = vmatprep.subr.mxu0 0.0
    %211 = vmatpush1.xpose.msra.mxu0 0.0
    %212 = vmatprep.subr.mxu0 0.0
    %213 = vmatpush1.xpose.msra.mxu0 0.0
    %214 = vmatprep.subr.mxu0 0.0
    %215 = vmatpush1.xpose.msra.mxu0 0.0
    %216 = vmatprep.subr.mxu0 0.0
    %217 = vmatpush1.xpose.msra.mxu0 0.0
    %218 = vmatprep.subr.mxu0 0.0
    %219 = vmatpush1.xpose.msra.mxu0 0.0
    %220 = vmatprep.subr.mxu0 0.0
    %221 = vmatpush1.xpose.msra.mxu0 0.0
    %222 = vmatprep.subr.mxu0 0.0
    %223 = vmatpush1.xpose.msra.mxu0 0.0
    %224 = vmatprep.subr.mxu0 0.0
    %225 = vmatpush1.xpose.msra.mxu0 0.0
    %226 = vmatprep.subr.mxu0 0.0
    %227 = vmatpush1.xpose.msra.mxu0 0.0
    %228 = vmatprep.subr.mxu0 0.0
    %229 = vmatpush1.xpose.msra.mxu0 0.0
    %230 = vmatprep.subr.mxu0 0.0
    %231 = vmatpush1.xpose.msra.mxu0 0.0
    %232 = vmatprep.subr.mxu0 0.0
    %233 = vmatpush1.xpose.msra.mxu0 0.0
    %234 = vmatprep.subr.mxu0 0.0
    %235 = vmatpush1.xpose.msra.mxu0 0.0
    %236 = vmatprep.subr.mxu0 0.0
    %237 = vmatpush1.xpose.msra.mxu0 0.0
    %238 = vmatprep.subr.mxu0 0.0
    %239 = vmatpush1.xpose.msra.mxu0 0.0
    %240 = vmatprep.subr.mxu0 0.0
    %241 = vmatpush1.xpose.msra.mxu0 0.0
    %242 = vmatprep.subr.mxu0 0.0
    %243 = vmatpush1.xpose.msra.mxu0 0.0
    %244 = vmatprep.subr.mxu0 0.0
    %245 = vmatpush1.xpose.msra.mxu0 0.0
    %246 = vmatprep.subr.mxu0 0.0
    %247 = vmatpush1.xpose.msra.mxu0 0.0
    %248 = vmatprep.subr.mxu0 0.0
    %249 = vmatpush1.xpose.msra.mxu0 0.0
    %250 = vmatprep.subr.mxu0 0.0
    %251 = vmatpush1.xpose.msra.mxu0 0.0
    %252 = vmatprep.subr.mxu0 0.0
    %253 = vmatpush1.xpose.msra.mxu0 0.0
    %254 = vmatprep.subr.mxu0 0.0
    %255 = vmatpush1.xpose.msra.mxu0 0.0
    %256 = vmatprep.subr.mxu0 0.0
    %257 = vmatpush1.xpose.msra.mxu0 0.0
    %258 = vmatprep.mubr.f32.mxu0 0.0
    %259 = vmatmul.mubr.f32.gmra.mrb[0].mxu0 %v190
    %v260 = vpop.f32.mrb[0].mxu0
    %v261 = vadd.f32 0.0, %v260
    %v262 = vpop.f32.mrb[0].mxu0
    %263 = vdwg.mxu0
    %265 = vrot.lane.b32.xlu0 %v177, 96
    %v266 = vpop.permute.xlu0 %265
    %v267 = vsel %vm189, %v177, 0
    %v269 = vsel %vm189, %v266, 0
    %271 = vmatprep.subr.mxu0 0.0
    %272 = vmatpush1.xpose.msra.mxu0 %v269
    %273 = vmatprep.subr.mxu0 0.0
    %274 = vmatpush1.xpose.msra.mxu0 0.0
    %275 = vmatprep.subr.mxu0 0.0
    %276 = vmatpush1.xpose.msra.mxu0 0.0
    %277 = vmatprep.subr.mxu0 0.0
    %278 = vmatpush1.xpose.msra.mxu0 0.0
    %279 = vmatprep.subr.mxu0 0.0
    %280 = vmatpush1.xpose.msra.mxu0 0.0
    %281 = vmatprep.subr.mxu0 0.0
    %282 = vmatpush1.xpose.msra.mxu0 0.0
    %283 = vmatprep.subr.mxu0 0.0
    %284 = vmatpush1.xpose.msra.mxu0 0.0
    %285 = vmatprep.subr.mxu0 0.0
    %286 = vmatpush1.xpose.msra.mxu0 0.0
    %287 = vmatprep.subr.mxu0 0.0
    %288 = vmatpush1.xpose.msra.mxu0 0.0
    %289 = vmatprep.subr.mxu0 0.0
    %290 = vmatpush1.xpose.msra.mxu0 0.0
    %291 = vmatprep.subr.mxu0 0.0
    %292 = vmatpush1.xpose.msra.mxu0 0.0
    %293 = vmatprep.subr.mxu0 0.0
    %294 = vmatpush1.xpose.msra.mxu0 0.0
    %295 = vmatprep.subr.mxu0 0.0
    %296 = vmatpush1.xpose.msra.mxu0 0.0
    %297 = vmatprep.subr.mxu0 0.0
    %298 = vmatpush1.xpose.msra.mxu0 0.0
    %299 = vmatprep.subr.mxu0 0.0
    %300 = vmatpush1.xpose.msra.mxu0 0.0
    %301 = vmatprep.subr.mxu0 0.0
    %302 = vmatpush1.xpose.msra.mxu0 0.0
    %303 = vmatprep.subr.mxu0 0.0
    %304 = vmatpush1.xpose.msra.mxu0 0.0
    %305 = vmatprep.subr.mxu0 0.0
    %306 = vmatpush1.xpose.msra.mxu0 0.0
    %307 = vmatprep.subr.mxu0 0.0
    %308 = vmatpush1.xpose.msra.mxu0 0.0
    %309 = vmatprep.subr.mxu0 0.0
    %310 = vmatpush1.xpose.msra.mxu0 0.0
    %311 = vmatprep.subr.mxu0 0.0
    %312 = vmatpush1.xpose.msra.mxu0 0.0
    %313 = vmatprep.subr.mxu0 0.0
    %314 = vmatpush1.xpose.msra.mxu0 0.0
    %315 = vmatprep.subr.mxu0 0.0
    %316 = vmatpush1.xpose.msra.mxu0 0.0
    %317 = vmatprep.subr.mxu0 0.0
    %318 = vmatpush1.xpose.msra.mxu0 0.0
    %319 = vmatprep.subr.mxu0 0.0
    %320 = vmatpush1.xpose.msra.mxu0 0.0
    %321 = vmatprep.subr.mxu0 0.0
    %322 = vmatpush1.xpose.msra.mxu0 0.0
    %323 = vmatprep.subr.mxu0 0.0
    %324 = vmatpush1.xpose.msra.mxu0 0.0
    %325 = vmatprep.subr.mxu0 0.0
    %326 = vmatpush1.xpose.msra.mxu0 0.0
    %327 = vmatprep.subr.mxu0 0.0
    %328 = vmatpush1.xpose.msra.mxu0 0.0
    %329 = vmatprep.subr.mxu0 0.0
    %330 = vmatpush1.xpose.msra.mxu0 0.0
    %331 = vmatprep.subr.mxu0 0.0
    %332 = vmatpush1.xpose.msra.mxu0 0.0
    %333 = vmatprep.subr.mxu0 0.0
    %334 = vmatpush1.xpose.msra.mxu0 0.0
    %335 = vmatprep.mubr.f32.mxu0 0.0
    %336 = vmatmul.mubr.f32.gmra.mrb[0].mxu0 %v267
    %v337 = vpop.f32.mrb[0].mxu0
    %v338 = vadd.f32 0.0, %v337
    %v339 = vpop.f32.mrb[0].mxu0
    %340 = vdwg.mxu0
    %v341 = vmul.f32 %v261, 0.35355338
    %v342 = vmul.f32 %v338, 0.35355338
    %v343 = vadd.f32 %v341, %v184
    %v344 = vadd.f32 %v342, %v185
    %v345 = vsel %vm189, %v343, -inf
    %346 = vmax.xlane.f32.xlu0 %v345
    %v347 = vpop.xlane.xlu0 %346
    %v348 = vsel %vm189, %v344, -inf
    %349 = vmax.xlane.f32.xlu0 %v348
    %v350 = vpop.xlane.xlu0 %349
    %v351 = vsub.f32 %v343, %v347
    %v352 = vsub.f32 %v344, %v350
    %v353 = vmul.f32 %v351, 1.442695
    %v354 = vpow.pop %v353
    %v355 = vmul.f32 %v352, 1.442695
    %v356 = vpow.pop %v355
    %v357 = vsel %vm189, %v354, 0.0
    %358 = vadd.xlane.f32.xlu0 %v357
    %v359 = vpop.xlane.xlu0 %358
    %v360 = vsel %vm189, %v356, 0.0
    %361 = vadd.xlane.f32.xlu0 %v360
    %v362 = vpop.xlane.xlu0 %361
    %v363 = vrcp.pop %v359
    %v364 = vrcp.pop %v362
    %v365 = vmul.f32 %v354, %v363
    %v366 = vmul.f32 %v356, %v364
    %367 = vrot.lane.b32.xlu0 %v174, 64
    %v368 = vpop.permute.xlu0 %367
    %v371 = vsel %vm189, %v365, 0
    %373 = vmatprep.subr.mxu0 0.0
    %374 = vmatpush1.msra.mxu0 %v368
    %375 = vmatprep.subr.mxu0 0.0
    %376 = vmatpush1.msra.mxu0 0.0
    %377 = vmatprep.subr.mxu0 0.0
    %378 = vmatpush1.msra.mxu0 0.0
    %379 = vmatprep.subr.mxu0 0.0
    %380 = vmatpush1.msra.mxu0 0.0
    %381 = vmatprep.subr.mxu0 0.0
    %382 = vmatpush1.msra.mxu0 0.0
    %383 = vmatprep.subr.mxu0 0.0
    %384 = vmatpush1.msra.mxu0 0.0
    %385 = vmatprep.subr.mxu0 0.0
    %386 = vmatpush1.msra.mxu0 0.0
    %387 = vmatprep.subr.mxu0 0.0
    %388 = vmatpush1.msra.mxu0 0.0
    %389 = vmatprep.subr.mxu0 0.0
    %390 = vmatpush1.msra.mxu0 0.0
    %391 = vmatprep.subr.mxu0 0.0
    %392 = vmatpush1.msra.mxu0 0.0
    %393 = vmatprep.subr.mxu0 0.0
    %394 = vmatpush1.msra.mxu0 0.0
    %395 = vmatprep.subr.mxu0 0.0
    %396 = vmatpush1.msra.mxu0 0.0
    %397 = vmatprep.subr.mxu0 0.0
    %398 = vmatpush1.msra.mxu0 0.0
    %399 = vmatprep.subr.mxu0 0.0
    %400 = vmatpush1.msra.mxu0 0.0
    %401 = vmatprep.subr.mxu0 0.0
    %402 = vmatpush1.msra.mxu0 0.0
    %403 = vmatprep.subr.mxu0 0.0
    %404 = vmatpush1.msra.mxu0 0.0
    %405 = vmatprep.subr.mxu0 0.0
    %406 = vmatpush1.msra.mxu0 0.0
    %407 = vmatprep.subr.mxu0 0.0
    %408 = vmatpush1.msra.mxu0 0.0
    %409 = vmatprep.subr.mxu0 0.0
    %410 = vmatpush1.msra.mxu0 0.0
    %411 = vmatprep.subr.mxu0 0.0
    %412 = vmatpush1.msra.mxu0 0.0
    %413 = vmatprep.subr.mxu0 0.0
    %414 = vmatpush1.msra.mxu0 0.0
    %415 = vmatprep.subr.mxu0 0.0
    %416 = vmatpush1.msra.mxu0 0.0
    %417 = vmatprep.subr.mxu0 0.0
    %418 = vmatpush1.msra.mxu0 0.0
    %419 = vmatprep.subr.mxu0 0.0
    %420 = vmatpush1.msra.mxu0 0.0
    %421 = vmatprep.subr.mxu0 0.0
    %422 = vmatpush1.msra.mxu0 0.0
    %423 = vmatprep.subr.mxu0 0.0
    %424 = vmatpush1.msra.mxu0 0.0
    %425 = vmatprep.subr.mxu0 0.0
    %426 = vmatpush1.msra.mxu0 0.0
    %427 = vmatprep.subr.mxu0 0.0
    %428 = vmatpush1.msra.mxu0 0.0
    %429 = vmatprep.subr.mxu0 0.0
    %430 = vmatpush1.msra.mxu0 0.0
    %431 = vmatprep.subr.mxu0 0.0
    %432 = vmatpush1.msra.mxu0 0.0
    %433 = vmatprep.subr.mxu0 0.0
    %434 = vmatpush1.msra.mxu0 0.0
    %435 = vmatprep.subr.mxu0 0.0
    %436 = vmatpush1.msra.mxu0 0.0
    %437 = vmatprep.mubr.f32.mxu0 0.0
    %438 = vmatmul.mubr.f32.gmra.mrb[0].mxu0 %v371
    %v439 = vpop.f32.mrb[0].mxu0
    %v440 = vadd.f32 0.0, %v439
    %v441 = vpop.f32.mrb[0].mxu0
    %442 = vdwg.mxu0
    %443 = vrot.lane.b32.xlu0 %v177, 64
    %v444 = vpop.permute.xlu0 %443
    %v447 = vsel %vm189, %v366, 0
    %449 = vmatprep.subr.mxu0 0.0
    %450 = vmatpush1.msra.mxu0 %v444
    %451 = vmatprep.subr.mxu0 0.0
    %452 = vmatpush1.msra.mxu0 0.0
    %453 = vmatprep.subr.mxu0 0.0
    %454 = vmatpush1.msra.mxu0 0.0
    %455 = vmatprep.subr.mxu0 0.0
    %456 = vmatpush1.msra.mxu0 0.0
    %457 = vmatprep.subr.mxu0 0.0
    %458 = vmatpush1.msra.mxu0 0.0
    %459 = vmatprep.subr.mxu0 0.0
    %460 = vmatpush1.msra.mxu0 0.0
    %461 = vmatprep.subr.mxu0 0.0
    %462 = vmatpush1.msra.mxu0 0.0
    %463 = vmatprep.subr.mxu0 0.0
    %464 = vmatpush1.msra.mxu0 0.0
    %465 = vmatprep.subr.mxu0 0.0
    %466 = vmatpush1.msra.mxu0 0.0
    %467 = vmatprep.subr.mxu0 0.0
    %468 = vmatpush1.msra.mxu0 0.0
    %469 = vmatprep.subr.mxu0 0.0
    %470 = vmatpush1.msra.mxu0 0.0
    %471 = vmatprep.subr.mxu0 0.0
    %472 = vmatpush1.msra.mxu0 0.0
    %473 = vmatprep.subr.mxu0 0.0
    %474 = vmatpush1.msra.mxu0 0.0
    %475 = vmatprep.subr.mxu0 0.0
    %476 = vmatpush1.msra.mxu0 0.0
    %477 = vmatprep.subr.mxu0 0.0
    %478 = vmatpush1.msra.mxu0 0.0
    %479 = vmatprep.subr.mxu0 0.0
    %480 = vmatpush1.msra.mxu0 0.0
    %481 = vmatprep.subr.mxu0 0.0
    %482 = vmatpush1.msra.mxu0 0.0
    %483 = vmatprep.subr.mxu0 0.0
    %484 = vmatpush1.msra.mxu0 0.0
    %485 = vmatprep.subr.mxu0 0.0
    %486 = vmatpush1.msra.mxu0 0.0
    %487 = vmatprep.subr.mxu0 0.0
    %488 = vmatpush1.msra.mxu0 0.0
    %489 = vmatprep.subr.mxu0 0.0
    %490 = vmatpush1.msra.mxu0 0.0
    %491 = vmatprep.subr.mxu0 0.0
    %492 = vmatpush1.msra.mxu0 0.0
    %493 = vmatprep.subr.mxu0 0.0
    %494 = vmatpush1.msra.mxu0 0.0
    %495 = vmatprep.subr.mxu0 0.0
    %496 = vmatpush1.msra.mxu0 0.0
    %497 = vmatprep.subr.mxu0 0.0
    %498 = vmatpush1.msra.mxu0 0.0
    %499 = vmatprep.subr.mxu0 0.0
    %500 = vmatpush1.msra.mxu0 0.0
    %501 = vmatprep.subr.mxu0 0.0
    %502 = vmatpush1.msra.mxu0 0.0
    %503 = vmatprep.subr.mxu0 0.0
    %504 = vmatpush1.msra.mxu0 0.0
    %505 = vmatprep.subr.mxu0 0.0
    %506 = vmatpush1.msra.mxu0 0.0
    %507 = vmatprep.subr.mxu0 0.0
    %508 = vmatpush1.msra.mxu0 0.0
    %509 = vmatprep.subr.mxu0 0.0
    %510 = vmatpush1.msra.mxu0 0.0
    %511 = vmatprep.subr.mxu0 0.0
    %512 = vmatpush1.msra.mxu0 0.0
    %513 = vmatprep.mubr.f32.mxu0 0.0
    %514 = vmatmul.mubr.f32.gmra.mrb[0].mxu0 %v447
    %v515 = vpop.f32.mrb[0].mxu0
    %v516 = vadd.f32 0.0, %v515
    %v517 = vpop.f32.mrb[0].mxu0
    %518 = vdwg.mxu0
    %519 = vrot.lane.b32.xlu0 %v174, 120
    %v520 = vpop.permute.xlu0 %519
    %521 = vrot.lane.b32.xlu0 %v174, 88
    %v522 = vpop.permute.xlu0 %521
    %v523 = vsel %vm189, %v520, 0
    %v525 = vsel %vm189, %v522, 0
    %527 = vmatprep.subr.mxu0 0.0
    %528 = vmatpush1.xpose.msra.mxu0 %v525
    %529 = vmatprep.subr.mxu0 0.0
    %530 = vmatpush1.xpose.msra.mxu0 0.0
    %531 = vmatprep.subr.mxu0 0.0
    %532 = vmatpush1.xpose.msra.mxu0 0.0
    %533 = vmatprep.subr.mxu0 0.0
    %534 = vmatpush1.xpose.msra.mxu0 0.0
    %535 = vmatprep.subr.mxu0 0.0
    %536 = vmatpush1.xpose.msra.mxu0 0.0
    %537 = vmatprep.subr.mxu0 0.0
    %538 = vmatpush1.xpose.msra.mxu0 0.0
    %539 = vmatprep.subr.mxu0 0.0
    %540 = vmatpush1.xpose.msra.mxu0 0.0
    %541 = vmatprep.subr.mxu0 0.0
    %542 = vmatpush1.xpose.msra.mxu0 0.0
    %543 = vmatprep.subr.mxu0 0.0
    %544 = vmatpush1.xpose.msra.mxu0 0.0
    %545 = vmatprep.subr.mxu0 0.0
    %546 = vmatpush1.xpose.msra.mxu0 0.0
    %547 = vmatprep.subr.mxu0 0.0
    %548 = vmatpush1.xpose.msra.mxu0 0.0
    %549 = vmatprep.subr.mxu0 0.0
    %550 = vmatpush1.xpose.msra.mxu0 0.0
    %551 = vmatprep.subr.mxu0 0.0
    %552 = vmatpush1.xpose.msra.mxu0 0.0
    %553 = vmatprep.subr.mxu0 0.0
    %554 = vmatpush1.xpose.msra.mxu0 0.0
    %555 = vmatprep.subr.mxu0 0.0
    %556 = vmatpush1.xpose.msra.mxu0 0.0
    %557 = vmatprep.subr.mxu0 0.0
    %558 = vmatpush1.xpose.msra.mxu0 0.0
    %559 = vmatprep.subr.mxu0 0.0
    %560 = vmatpush1.xpose.msra.mxu0 0.0
    %561 = vmatprep.subr.mxu0 0.0
    %562 = vmatpush1.xpose.msra.mxu0 0.0
    %563 = vmatprep.subr.mxu0 0.0
    %564 = vmatpush1.xpose.msra.mxu0 0.0
    %565 = vmatprep.subr.mxu0 0.0
    %566 = vmatpush1.xpose.msra.mxu0 0.0
    %567 = vmatprep.subr.mxu0 0.0
    %568 = vmatpush1.xpose.msra.mxu0 0.0
    %569 = vmatprep.subr.mxu0 0.0
    %570 = vmatpush1.xpose.msra.mxu0 0.0
    %571 = vmatprep.subr.mxu0 0.0
    %572 = vmatpush1.xpose.msra.mxu0 0.0
    %573 = vmatprep.subr.mxu0 0.0
    %574 = vmatpush1.xpose.msra.mxu0 0.0
    %575 = vmatprep.subr.mxu0 0.0
    %576 = vmatpush1.xpose.msra.mxu0 0.0
    %577 = vmatprep.subr.mxu0 0.0
    %578 = vmatpush1.xpose.msra.mxu0 0.0
    %579 = vmatprep.subr.mxu0 0.0
    %580 = vmatpush1.xpose.msra.mxu0 0.0
    %581 = vmatprep.subr.mxu0 0.0
    %582 = vmatpush1.xpose.msra.mxu0 0.0
    %583 = vmatprep.subr.mxu0 0.0
    %584 = vmatpush1.xpose.msra.mxu0 0.0
    %585 = vmatprep.subr.mxu0 0.0
    %586 = vmatpush1.xpose.msra.mxu0 0.0
    %587 = vmatprep.subr.mxu0 0.0
    %588 = vmatpush1.xpose.msra.mxu0 0.0
    %589 = vmatprep.subr.mxu0 0.0
    %590 = vmatpush1.xpose.msra.mxu0 0.0
    %591 = vmatprep.mubr.f32.mxu0 0.0
    %592 = vmatmul.mubr.f32.gmra.mrb[0].mxu0 %v523
    %v593 = vpop.f32.mrb[0].mxu0
    %v594 = vadd.f32 0.0, %v593
    %v595 = vpop.f32.mrb[0].mxu0
    %596 = vdwg.mxu0
    %597 = vrot.lane.b32.xlu0 %v177, 120
    %v598 = vpop.permute.xlu0 %597
    %599 = vrot.lane.b32.xlu0 %v177, 88
    %v600 = vpop.permute.xlu0 %599
    %v601 = vsel %vm189, %v598, 0
    %v603 = vsel %vm189, %v600, 0
    %605 = vmatprep.subr.mxu0 0.0
    %606 = vmatpush1.xpose.msra.mxu0 %v603
    %607 = vmatprep.subr.mxu0 0.0
    %608 = vmatpush1.xpose.msra.mxu0 0.0
    %609 = vmatprep.subr.mxu0 0.0
    %610 = vmatpush1.xpose.msra.mxu0 0.0
    %611 = vmatprep.subr.mxu0 0.0
    %612 = vmatpush1.xpose.msra.mxu0 0.0
    %613 = vmatprep.subr.mxu0 0.0
    %614 = vmatpush1.xpose.msra.mxu0 0.0
    %615 = vmatprep.subr.mxu0 0.0
    %616 = vmatpush1.xpose.msra.mxu0 0.0
    %617 = vmatprep.subr.mxu0 0.0
    %618 = vmatpush1.xpose.msra.mxu0 0.0
    %619 = vmatprep.subr.mxu0 0.0
    %620 = vmatpush1.xpose.msra.mxu0 0.0
    %621 = vmatprep.subr.mxu0 0.0
    %622 = vmatpush1.xpose.msra.mxu0 0.0
    %623 = vmatprep.subr.mxu0 0.0
    %624 = vmatpush1.xpose.msra.mxu0 0.0
    %625 = vmatprep.subr.mxu0 0.0
    %626 = vmatpush1.xpose.msra.mxu0 0.0
    %627 = vmatprep.subr.mxu0 0.0
    %628 = vmatpush1.xpose.msra.mxu0 0.0
    %629 = vmatprep.subr.mxu0 0.0
    %630 = vmatpush1.xpose.msra.mxu0 0.0
    %631 = vmatprep.subr.mxu0 0.0
    %632 = vmatpush1.xpose.msra.mxu0 0.0
    %633 = vmatprep.subr.mxu0 0.0
    %634 = vmatpush1.xpose.msra.mxu0 0.0
    %635 = vmatprep.subr.mxu0 0.0
    %636 = vmatpush1.xpose.msra.mxu0 0.0
    %637 = vmatprep.subr.mxu0 0.0
    %638 = vmatpush1.xpose.msra.mxu0 0.0
    %639 = vmatprep.subr.mxu0 0.0
    %640 = vmatpush1.xpose.msra.mxu0 0.0
    %641 = vmatprep.subr.mxu0 0.0
    %642 = vmatpush1.xpose.msra.mxu0 0.0
    %643 = vmatprep.subr.mxu0 0.0
    %644 = vmatpush1.xpose.msra.mxu0 0.0
    %645 = vmatprep.subr.mxu0 0.0
    %646 = vmatpush1.xpose.msra.mxu0 0.0
    %647 = vmatprep.subr.mxu0 0.0
    %648 = vmatpush1.xpose.msra.mxu0 0.0
    %649 = vmatprep.subr.mxu0 0.0
    %650 = vmatpush1.xpose.msra.mxu0 0.0
    %651 = vmatprep.subr.mxu0 0.0
    %652 = vmatpush1.xpose.msra.mxu0 0.0
    %653 = vmatprep.subr.mxu0 0.0
    %654 = vmatpush1.xpose.msra.mxu0 0.0
    %655 = vmatprep.subr.mxu0 0.0
    %656 = vmatpush1.xpose.msra.mxu0 0.0
    %657 = vmatprep.subr.mxu0 0.0
    %658 = vmatpush1.xpose.msra.mxu0 0.0
    %659 = vmatprep.subr.mxu0 0.0
    %660 = vmatpush1.xpose.msra.mxu0 0.0
    %661 = vmatprep.subr.mxu0 0.0
    %662 = vmatpush1.xpose.msra.mxu0 0.0
    %663 = vmatprep.subr.mxu0 0.0
    %664 = vmatpush1.xpose.msra.mxu0 0.0
    %665 = vmatprep.subr.mxu0 0.0
    %666 = vmatpush1.xpose.msra.mxu0 0.0
    %667 = vmatprep.subr.mxu0 0.0
    %668 = vmatpush1.xpose.msra.mxu0 0.0
    %669 = vmatprep.mubr.f32.mxu0 0.0
    %670 = vmatmul.mubr.f32.gmra.mrb[0].mxu0 %v601
    %v671 = vpop.f32.mrb[0].mxu0
    %v672 = vadd.f32 0.0, %v671
    %v673 = vpop.f32.mrb[0].mxu0
    %674 = vdwg.mxu0
    %v675 = vmul.f32 %v594, 0.35355338
    %v676 = vmul.f32 %v672, 0.35355338
    %v677 = vadd.f32 %v675, %v184
    %v678 = vadd.f32 %v676, %v185
    %v679 = vsel %vm189, %v677, -inf
    %680 = vmax.xlane.f32.xlu0 %v679
    %v681 = vpop.xlane.xlu0 %680
    %v682 = vsel %vm189, %v678, -inf
    %683 = vmax.xlane.f32.xlu0 %v682
    %v684 = vpop.xlane.xlu0 %683
    %v685 = vsub.f32 %v677, %v681
    %v686 = vsub.f32 %v678, %v684
    %v687 = vmul.f32 %v685, 1.442695
    %v688 = vpow.pop %v687
    %v689 = vmul.f32 %v686, 1.442695
    %v690 = vpow.pop %v689
    %v691 = vsel %vm189, %v688, 0.0
    %692 = vadd.xlane.f32.xlu0 %v691
    %v693 = vpop.xlane.xlu0 %692
    %v694 = vsel %vm189, %v690, 0.0
    %695 = vadd.xlane.f32.xlu0 %v694
    %v696 = vpop.xlane.xlu0 %695
    %v697 = vrcp.pop %v693
    %v698 = vrcp.pop %v696
    %v699 = vmul.f32 %v688, %v697
    %v700 = vmul.f32 %v690, %v698
    %701 = vrot.lane.b32.xlu0 %v174, 56
    %v702 = vpop.permute.xlu0 %701
    %v705 = vsel %vm189, %v699, 0
    %707 = vmatprep.subr.mxu0 0.0
    %708 = vmatpush1.msra.mxu0 %v702
    %709 = vmatprep.subr.mxu0 0.0
    %710 = vmatpush1.msra.mxu0 0.0
    %711 = vmatprep.subr.mxu0 0.0
    %712 = vmatpush1.msra.mxu0 0.0
    %713 = vmatprep.subr.mxu0 0.0
    %714 = vmatpush1.msra.mxu0 0.0
    %715 = vmatprep.subr.mxu0 0.0
    %716 = vmatpush1.msra.mxu0 0.0
    %717 = vmatprep.subr.mxu0 0.0
    %718 = vmatpush1.msra.mxu0 0.0
    %719 = vmatprep.subr.mxu0 0.0
    %720 = vmatpush1.msra.mxu0 0.0
    %721 = vmatprep.subr.mxu0 0.0
    %722 = vmatpush1.msra.mxu0 0.0
    %723 = vmatprep.subr.mxu0 0.0
    %724 = vmatpush1.msra.mxu0 0.0
    %725 = vmatprep.subr.mxu0 0.0
    %726 = vmatpush1.msra.mxu0 0.0
    %727 = vmatprep.subr.mxu0 0.0
    %728 = vmatpush1.msra.mxu0 0.0
    %729 = vmatprep.subr.mxu0 0.0
    %730 = vmatpush1.msra.mxu0 0.0
    %731 = vmatprep.subr.mxu0 0.0
    %732 = vmatpush1.msra.mxu0 0.0
    %733 = vmatprep.subr.mxu0 0.0
    %734 = vmatpush1.msra.mxu0 0.0
    %735 = vmatprep.subr.mxu0 0.0
    %736 = vmatpush1.msra.mxu0 0.0
    %737 = vmatprep.subr.mxu0 0.0
    %738 = vmatpush1.msra.mxu0 0.0
    %739 = vmatprep.subr.mxu0 0.0
    %740 = vmatpush1.msra.mxu0 0.0
    %741 = vmatprep.subr.mxu0 0.0
    %742 = vmatpush1.msra.mxu0 0.0
    %743 = vmatprep.subr.mxu0 0.0
    %744 = vmatpush1.msra.mxu0 0.0
    %745 = vmatprep.subr.mxu0 0.0
    %746 = vmatpush1.msra.mxu0 0.0
    %747 = vmatprep.subr.mxu0 0.0
    %748 = vmatpush1.msra.mxu0 0.0
    %749 = vmatprep.subr.mxu0 0.0
    %750 = vmatpush1.msra.mxu0 0.0
    %751 = vmatprep.subr.mxu0 0.0
    %752 = vmatpush1.msra.mxu0 0.0
    %753 = vmatprep.subr.mxu0 0.0
    %754 = vmatpush1.msra.mxu0 0.0
    %755 = vmatprep.subr.mxu0 0.0
    %756 = vmatpush1.msra.mxu0 0.0
    %757 = vmatprep.subr.mxu0 0.0
    %758 = vmatpush1.msra.mxu0 0.0
    %759 = vmatprep.subr.mxu0 0.0
    %760 = vmatpush1.msra.mxu0 0.0
    %761 = vmatprep.subr.mxu0 0.0
    %762 = vmatpush1.msra.mxu0 0.0
    %763 = vmatprep.subr.mxu0 0.0
    %764 = vmatpush1.msra.mxu0 0.0
    %765 = vmatprep.subr.mxu0 0.0
    %766 = vmatpush1.msra.mxu0 0.0
    %767 = vmatprep.subr.mxu0 0.0
    %768 = vmatpush1.msra.mxu0 0.0
    %769 = vmatprep.subr.mxu0 0.0
    %770 = vmatpush1.msra.mxu0 0.0
    %771 = vmatprep.mubr.f32.mxu0 0.0
    %772 = vmatmul.mubr.f32.gmra.mrb[0].mxu0 %v705
    %v773 = vpop.f32.mrb[0].mxu0
    %v774 = vadd.f32 0.0, %v773
    %v775 = vpop.f32.mrb[0].mxu0
    %776 = vdwg.mxu0
    %777 = vrot.lane.b32.xlu0 %v177, 56
    %v778 = vpop.permute.xlu0 %777
    %v781 = vsel %vm189, %v700, 0
    %783 = vmatprep.subr.mxu0 0.0
    %784 = vmatpush1.msra.mxu0 %v778
    %785 = vmatprep.subr.mxu0 0.0
    %786 = vmatpush1.msra.mxu0 0.0
    %787 = vmatprep.subr.mxu0 0.0
    %788 = vmatpush1.msra.mxu0 0.0
    %789 = vmatprep.subr.mxu0 0.0
    %790 = vmatpush1.msra.mxu0 0.0
    %791 = vmatprep.subr.mxu0 0.0
    %792 = vmatpush1.msra.mxu0 0.0
    %793 = vmatprep.subr.mxu0 0.0
    %794 = vmatpush1.msra.mxu0 0.0
    %795 = vmatprep.subr.mxu0 0.0
    %796 = vmatpush1.msra.mxu0 0.0
    %797 = vmatprep.subr.mxu0 0.0
    %798 = vmatpush1.msra.mxu0 0.0
    %799 = vmatprep.subr.mxu0 0.0
    %800 = vmatpush1.msra.mxu0 0.0
    %801 = vmatprep.subr.mxu0 0.0
    %802 = vmatpush1.msra.mxu0 0.0
    %803 = vmatprep.subr.mxu0 0.0
    %804 = vmatpush1.msra.mxu0 0.0
    %805 = vmatprep.subr.mxu0 0.0
    %806 = vmatpush1.msra.mxu0 0.0
    %807 = vmatprep.subr.mxu0 0.0
    %808 = vmatpush1.msra.mxu0 0.0
    %809 = vmatprep.subr.mxu0 0.0
    %810 = vmatpush1.msra.mxu0 0.0
    %811 = vmatprep.subr.mxu0 0.0
    %812 = vmatpush1.msra.mxu0 0.0
    %813 = vmatprep.subr.mxu0 0.0
    %814 = vmatpush1.msra.mxu0 0.0
    %815 = vmatprep.subr.mxu0 0.0
    %816 = vmatpush1.msra.mxu0 0.0
    %817 = vmatprep.subr.mxu0 0.0
    %818 = vmatpush1.msra.mxu0 0.0
    %819 = vmatprep.subr.mxu0 0.0
    %820 = vmatpush1.msra.mxu0 0.0
    %821 = vmatprep.subr.mxu0 0.0
    %822 = vmatpush1.msra.mxu0 0.0
    %823 = vmatprep.subr.mxu0 0.0
    %824 = vmatpush1.msra.mxu0 0.0
    %825 = vmatprep.subr.mxu0 0.0
    %826 = vmatpush1.msra.mxu0 0.0
    %827 = vmatprep.subr.mxu0 0.0
    %828 = vmatpush1.msra.mxu0 0.0
    %829 = vmatprep.subr.mxu0 0.0
    %830 = vmatpush1.msra.mxu0 0.0
    %831 = vmatprep.subr.mxu0 0.0
    %832 = vmatpush1.msra.mxu0 0.0
    %833 = vmatprep.subr.mxu0 0.0
    %834 = vmatpush1.msra.mxu0 0.0
    %835 = vmatprep.subr.mxu0 0.0
    %836 = vmatpush1.msra.mxu0 0.0
    %837 = vmatprep.subr.mxu0 0.0
    %838 = vmatpush1.msra.mxu0 0.0
    %839 = vmatprep.subr.mxu0 0.0
    %840 = vmatpush1.msra.mxu0 0.0
    %841 = vmatprep.subr.mxu0 0.0
    %842 = vmatpush1.msra.mxu0 0.0
    %843 = vmatprep.subr.mxu0 0.0
    %844 = vmatpush1.msra.mxu0 0.0
    %845 = vmatprep.subr.mxu0 0.0
    %846 = vmatpush1.msra.mxu0 0.0
    %847 = vmatprep.mubr.f32.mxu0 0.0
    %848 = vmatmul.mubr.f32.gmra.mrb[0].mxu0 %v781
    %v849 = vpop.f32.mrb[0].mxu0
    %v850 = vadd.f32 0.0, %v849
    %v851 = vpop.f32.mrb[0].mxu0
    %852 = vdwg.mxu0
    %853 = vrot.lane.b32.xlu0 %v174, 112
    %v854 = vpop.permute.xlu0 %853
    %855 = vrot.lane.b32.xlu0 %v174, 80
    %v856 = vpop.permute.xlu0 %855
    %v857 = vsel %vm189, %v854, 0
    %v859 = vsel %vm189, %v856, 0
    %861 = vmatprep.subr.mxu0 0.0
    %862 = vmatpush1.xpose.msra.mxu0 %v859
    %863 = vmatprep.subr.mxu0 0.0
    %864 = vmatpush1.xpose.msra.mxu0 0.0
    %865 = vmatprep.subr.mxu0 0.0
    %866 = vmatpush1.xpose.msra.mxu0 0.0
    %867 = vmatprep.subr.mxu0 0.0
    %868 = vmatpush1.xpose.msra.mxu0 0.0
    %869 = vmatprep.subr.mxu0 0.0
    %870 = vmatpush1.xpose.msra.mxu0 0.0
    %871 = vmatprep.subr.mxu0 0.0
    %872 = vmatpush1.xpose.msra.mxu0 0.0
    %873 = vmatprep.subr.mxu0 0.0
    %874 = vmatpush1.xpose.msra.mxu0 0.0
    %875 = vmatprep.subr.mxu0 0.0
    %876 = vmatpush1.xpose.msra.mxu0 0.0
    %877 = vmatprep.subr.mxu0 0.0
    %878 = vmatpush1.xpose.msra.mxu0 0.0
    %879 = vmatprep.subr.mxu0 0.0
    %880 = vmatpush1.xpose.msra.mxu0 0.0
    %881 = vmatprep.subr.mxu0 0.0
    %882 = vmatpush1.xpose.msra.mxu0 0.0
    %883 = vmatprep.subr.mxu0 0.0
    %884 = vmatpush1.xpose.msra.mxu0 0.0
    %885 = vmatprep.subr.mxu0 0.0
    %886 = vmatpush1.xpose.msra.mxu0 0.0
    %887 = vmatprep.subr.mxu0 0.0
    %888 = vmatpush1.xpose.msra.mxu0 0.0
    %889 = vmatprep.subr.mxu0 0.0
    %890 = vmatpush1.xpose.msra.mxu0 0.0
    %891 = vmatprep.subr.mxu0 0.0
    %892 = vmatpush1.xpose.msra.mxu0 0.0
    %893 = vmatprep.subr.mxu0 0.0
    %894 = vmatpush1.xpose.msra.mxu0 0.0
    %895 = vmatprep.subr.mxu0 0.0
    %896 = vmatpush1.xpose.msra.mxu0 0.0
    %897 = vmatprep.subr.mxu0 0.0
    %898 = vmatpush1.xpose.msra.mxu0 0.0
    %899 = vmatprep.subr.mxu0 0.0
    %900 = vmatpush1.xpose.msra.mxu0 0.0
    %901 = vmatprep.subr.mxu0 0.0
    %902 = vmatpush1.xpose.msra.mxu0 0.0
    %903 = vmatprep.subr.mxu0 0.0
    %904 = vmatpush1.xpose.msra.mxu0 0.0
    %905 = vmatprep.subr.mxu0 0.0
    %906 = vmatpush1.xpose.msra.mxu0 0.0
    %907 = vmatprep.subr.mxu0 0.0
    %908 = vmatpush1.xpose.msra.mxu0 0.0
    %909 = vmatprep.subr.mxu0 0.0
    %910 = vmatpush1.xpose.msra.mxu0 0.0
    %911 = vmatprep.subr.mxu0 0.0
    %912 = vmatpush1.xpose.msra.mxu0 0.0
    %913 = vmatprep.subr.mxu0 0.0
    %914 = vmatpush1.xpose.msra.mxu0 0.0
    %915 = vmatprep.subr.mxu0 0.0
    %916 = vmatpush1.xpose.msra.mxu0 0.0
    %917 = vmatprep.subr.mxu0 0.0
    %918 = vmatpush1.xpose.msra.mxu0 0.0
    %919 = vmatprep.subr.mxu0 0.0
    %920 = vmatpush1.xpose.msra.mxu0 0.0
    %921 = vmatprep.subr.mxu0 0.0
    %922 = vmatpush1.xpose.msra.mxu0 0.0
    %923 = vmatprep.subr.mxu0 0.0
    %924 = vmatpush1.xpose.msra.mxu0 0.0
    %925 = vmatprep.mubr.f32.mxu0 0.0
    %926 = vmatmul.mubr.f32.gmra.mrb[0].mxu0 %v857
    %v927 = vpop.f32.mrb[0].mxu0
    %v928 = vadd.f32 0.0, %v927
    %v929 = vpop.f32.mrb[0].mxu0
    %930 = vdwg.mxu0
    %931 = vrot.lane.b32.xlu0 %v177, 112
    %v932 = vpop.permute.xlu0 %931
    %933 = vrot.lane.b32.xlu0 %v177, 80
    %v934 = vpop.permute.xlu0 %933
    %v935 = vsel %vm189, %v932, 0
    %v937 = vsel %vm189, %v934, 0
    %939 = vmatprep.subr.mxu0 0.0
    %940 = vmatpush1.xpose.msra.mxu0 %v937
    %941 = vmatprep.subr.mxu0 0.0
    %942 = vmatpush1.xpose.msra.mxu0 0.0
    %943 = vmatprep.subr.mxu0 0.0
    %944 = vmatpush1.xpose.msra.mxu0 0.0
    %945 = vmatprep.subr.mxu0 0.0
    %946 = vmatpush1.xpose.msra.mxu0 0.0
    %947 = vmatprep.subr.mxu0 0.0
    %948 = vmatpush1.xpose.msra.mxu0 0.0
    %949 = vmatprep.subr.mxu0 0.0
    %950 = vmatpush1.xpose.msra.mxu0 0.0
    %951 = vmatprep.subr.mxu0 0.0
    %952 = vmatpush1.xpose.msra.mxu0 0.0
    %953 = vmatprep.subr.mxu0 0.0
    %954 = vmatpush1.xpose.msra.mxu0 0.0
    %955 = vmatprep.subr.mxu0 0.0
    %956 = vmatpush1.xpose.msra.mxu0 0.0
    %957 = vmatprep.subr.mxu0 0.0
    %958 = vmatpush1.xpose.msra.mxu0 0.0
    %959 = vmatprep.subr.mxu0 0.0
    %960 = vmatpush1.xpose.msra.mxu0 0.0
    %961 = vmatprep.subr.mxu0 0.0
    %962 = vmatpush1.xpose.msra.mxu0 0.0
    %963 = vmatprep.subr.mxu0 0.0
    %964 = vmatpush1.xpose.msra.mxu0 0.0
    %965 = vmatprep.subr.mxu0 0.0
    %966 = vmatpush1.xpose.msra.mxu0 0.0
    %967 = vmatprep.subr.mxu0 0.0
    %968 = vmatpush1.xpose.msra.mxu0 0.0
    %969 = vmatprep.subr.mxu0 0.0
    %970 = vmatpush1.xpose.msra.mxu0 0.0
    %971 = vmatprep.subr.mxu0 0.0
    %972 = vmatpush1.xpose.msra.mxu0 0.0
    %973 = vmatprep.subr.mxu0 0.0
    %974 = vmatpush1.xpose.msra.mxu0 0.0
    %975 = vmatprep.subr.mxu0 0.0
    %976 = vmatpush1.xpose.msra.mxu0 0.0
    %977 = vmatprep.subr.mxu0 0.0
    %978 = vmatpush1.xpose.msra.mxu0 0.0
    %979 = vmatprep.subr.mxu0 0.0
    %980 = vmatpush1.xpose.msra.mxu0 0.0
    %981 = vmatprep.subr.mxu0 0.0
    %982 = vmatpush1.xpose.msra.mxu0 0.0
    %983 = vmatprep.subr.mxu0 0.0
    %984 = vmatpush1.xpose.msra.mxu0 0.0
    %985 = vmatprep.subr.mxu0 0.0
    %986 = vmatpush1.xpose.msra.mxu0 0.0
    %987 = vmatprep.subr.mxu0 0.0
    %988 = vmatpush1.xpose.msra.mxu0 0.0
    %989 = vmatprep.subr.mxu0 0.0
    %990 = vmatpush1.xpose.msra.mxu0 0.0
    %991 = vmatprep.subr.mxu0 0.0
    %992 = vmatpush1.xpose.msra.mxu0 0.0
    %993 = vmatprep.subr.mxu0 0.0
    %994 = vmatpush1.xpose.msra.mxu0 0.0
    %995 = vmatprep.subr.mxu0 0.0
    %996 = vmatpush1.xpose.msra.mxu0 0.0
    %997 = vmatprep.subr.mxu0 0.0
    %998 = vmatpush1.xpose.msra.mxu0 0.0
    %999 = vmatprep.subr.mxu0 0.0
    %1000 = vmatpush1.xpose.msra.mxu0 0.0
    %1001 = vmatprep.subr.mxu0 0.0
    %1002 = vmatpush1.xpose.msra.mxu0 0.0
    %1003 = vmatprep.mubr.f32.mxu0 0.0
    %1004 = vmatmul.mubr.f32.gmra.mrb[0].mxu0 %v935
    %v1005 = vpop.f32.mrb[0].mxu0
    %v1006 = vadd.f32 0.0, %v1005
    %v1007 = vpop.f32.mrb[0].mxu0
    %1008 = vdwg.mxu0
    %v1009 = vmul.f32 %v928, 0.35355338
    %v1010 = vmul.f32 %v1006, 0.35355338
    %v1011 = vadd.f32 %v1009, %v184
    %v1012 = vadd.f32 %v1010, %v185
    %v1013 = vsel %vm189, %v1011, -inf
    %1014 = vmax.xlane.f32.xlu0 %v1013
    %v1015 = vpop.xlane.xlu0 %1014
    %v1016 = vsel %vm189, %v1012, -inf
    %1017 = vmax.xlane.f32.xlu0 %v1016
    %v1018 = vpop.xlane.xlu0 %1017
    %v1019 = vsub.f32 %v1011, %v1015
    %v1020 = vsub.f32 %v1012, %v1018
    %v1021 = vmul.f32 %v1019, 1.442695
    %v1022 = vpow.pop %v1021
    %v1023 = vmul.f32 %v1020, 1.442695
    %v1024 = vpow.pop %v1023
    %v1025 = vsel %vm189, %v1022, 0.0
    %1026 = vadd.xlane.f32.xlu0 %v1025
    %v1027 = vpop.xlane.xlu0 %1026
    %v1028 = vsel %vm189, %v1024, 0.0
    %1029 = vadd.xlane.f32.xlu0 %v1028
    %v1030 = vpop.xlane.xlu0 %1029
    %v1031 = vrcp.pop %v1027
    %v1032 = vrcp.pop %v1030
    %v1033 = vmul.f32 %v1022, %v1031
    %v1034 = vmul.f32 %v1024, %v1032
    %1035 = vrot.lane.b32.xlu0 %v174, 48
    %v1036 = vpop.permute.xlu0 %1035
    %v1039 = vsel %vm189, %v1033, 0
    %1041 = vmatprep.subr.mxu0 0.0
    %1042 = vmatpush1.msra.mxu0 %v1036
    %1043 = vmatprep.subr.mxu0 0.0
    %1044 = vmatpush1.msra.mxu0 0.0
    %1045 = vmatprep.subr.mxu0 0.0
    %1046 = vmatpush1.msra.mxu0 0.0
    %1047 = vmatprep.subr.mxu0 0.0
    %1048 = vmatpush1.msra.mxu0 0.0
    %1049 = vmatprep.subr.mxu0 0.0
    %1050 = vmatpush1.msra.mxu0 0.0
    %1051 = vmatprep.subr.mxu0 0.0
    %1052 = vmatpush1.msra.mxu0 0.0
    %1053 = vmatprep.subr.mxu0 0.0
    %1054 = vmatpush1.msra.mxu0 0.0
    %1055 = vmatprep.subr.mxu0 0.0
    %1056 = vmatpush1.msra.mxu0 0.0
    %1057 = vmatprep.subr.mxu0 0.0
    %1058 = vmatpush1.msra.mxu0 0.0
    %1059 = vmatprep.subr.mxu0 0.0
    %1060 = vmatpush1.msra.mxu0 0.0
    %1061 = vmatprep.subr.mxu0 0.0
    %1062 = vmatpush1.msra.mxu0 0.0
    %1063 = vmatprep.subr.mxu0 0.0
    %1064 = vmatpush1.msra.mxu0 0.0
    %1065 = vmatprep.subr.mxu0 0.0
    %1066 = vmatpush1.msra.mxu0 0.0
    %1067 = vmatprep.subr.mxu0 0.0
    %1068 = vmatpush1.msra.mxu0 0.0
    %1069 = vmatprep.subr.mxu0 0.0
    %1070 = vmatpush1.msra.mxu0 0.0
    %1071 = vmatprep.subr.mxu0 0.0
    %1072 = vmatpush1.msra.mxu0 0.0
    %1073 = vmatprep.subr.mxu0 0.0
    %1074 = vmatpush1.msra.mxu0 0.0
    %1075 = vmatprep.subr.mxu0 0.0
    %1076 = vmatpush1.msra.mxu0 0.0
    %1077 = vmatprep.subr.mxu0 0.0
    %1078 = vmatpush1.msra.mxu0 0.0
    %1079 = vmatprep.subr.mxu0 0.0
    %1080 = vmatpush1.msra.mxu0 0.0
    %1081 = vmatprep.subr.mxu0 0.0
    %1082 = vmatpush1.msra.mxu0 0.0
    %1083 = vmatprep.subr.mxu0 0.0
    %1084 = vmatpush1.msra.mxu0 0.0
    %1085 = vmatprep.subr.mxu0 0.0
    %1086 = vmatpush1.msra.mxu0 0.0
    %1087 = vmatprep.subr.mxu0 0.0
    %1088 = vmatpush1.msra.mxu0 0.0
    %1089 = vmatprep.subr.mxu0 0.0
    %1090 = vmatpush1.msra.mxu0 0.0
    %1091 = vmatprep.subr.mxu0 0.0
    %1092 = vmatpush1.msra.mxu0 0.0
    %1093 = vmatprep.subr.mxu0 0.0
    %1094 = vmatpush1.msra.mxu0 0.0
    %1095 = vmatprep.subr.mxu0 0.0
    %1096 = vmatpush1.msra.mxu0 0.0
    %1097 = vmatprep.subr.mxu0 0.0
    %1098 = vmatpush1.msra.mxu0 0.0
    %1099 = vmatprep.subr.mxu0 0.0
    %1100 = vmatpush1.msra.mxu0 0.0
    %1101 = vmatprep.subr.mxu0 0.0
    %1102 = vmatpush1.msra.mxu0 0.0
    %1103 = vmatprep.subr.mxu0 0.0
    %1104 = vmatpush1.msra.mxu0 0.0
    %1105 = vmatprep.mubr.f32.mxu0 0.0
    %1106 = vmatmul.mubr.f32.gmra.mrb[0].mxu0 %v1039
    %v1107 = vpop.f32.mrb[0].mxu0
    %v1108 = vadd.f32 0.0, %v1107
    %v1109 = vpop.f32.mrb[0].mxu0
    %1110 = vdwg.mxu0
    %1111 = vrot.lane.b32.xlu0 %v177, 48
    %v1112 = vpop.permute.xlu0 %1111
    %v1115 = vsel %vm189, %v1034, 0
    %1117 = vmatprep.subr.mxu0 0.0
    %1118 = vmatpush1.msra.mxu0 %v1112
    %1119 = vmatprep.subr.mxu0 0.0
    %1120 = vmatpush1.msra.mxu0 0.0
    %1121 = vmatprep.subr.mxu0 0.0
    %1122 = vmatpush1.msra.mxu0 0.0
    %1123 = vmatprep.subr.mxu0 0.0
    %1124 = vmatpush1.msra.mxu0 0.0
    %1125 = vmatprep.subr.mxu0 0.0
    %1126 = vmatpush1.msra.mxu0 0.0
    %1127 = vmatprep.subr.mxu0 0.0
    %1128 = vmatpush1.msra.mxu0 0.0
    %1129 = vmatprep.subr.mxu0 0.0
    %1130 = vmatpush1.msra.mxu0 0.0
    %1131 = vmatprep.subr.mxu0 0.0
    %1132 = vmatpush1.msra.mxu0 0.0
    %1133 = vmatprep.subr.mxu0 0.0
    %1134 = vmatpush1.msra.mxu0 0.0
    %1135 = vmatprep.subr.mxu0 0.0
    %1136 = vmatpush1.msra.mxu0 0.0
    %1137 = vmatprep.subr.mxu0 0.0
    %1138 = vmatpush1.msra.mxu0 0.0
    %1139 = vmatprep.subr.mxu0 0.0
    %1140 = vmatpush1.msra.mxu0 0.0
    %1141 = vmatprep.subr.mxu0 0.0
    %1142 = vmatpush1.msra.mxu0 0.0
    %1143 = vmatprep.subr.mxu0 0.0
    %1144 = vmatpush1.msra.mxu0 0.0
    %1145 = vmatprep.subr.mxu0 0.0
    %1146 = vmatpush1.msra.mxu0 0.0
    %1147 = vmatprep.subr.mxu0 0.0
    %1148 = vmatpush1.msra.mxu0 0.0
    %1149 = vmatprep.subr.mxu0 0.0
    %1150 = vmatpush1.msra.mxu0 0.0
    %1151 = vmatprep.subr.mxu0 0.0
    %1152 = vmatpush1.msra.mxu0 0.0
    %1153 = vmatprep.subr.mxu0 0.0
    %1154 = vmatpush1.msra.mxu0 0.0
    %1155 = vmatprep.subr.mxu0 0.0
    %1156 = vmatpush1.msra.mxu0 0.0
    %1157 = vmatprep.subr.mxu0 0.0
    %1158 = vmatpush1.msra.mxu0 0.0
    %1159 = vmatprep.subr.mxu0 0.0
    %1160 = vmatpush1.msra.mxu0 0.0
    %1161 = vmatprep.subr.mxu0 0.0
    %1162 = vmatpush1.msra.mxu0 0.0
    %1163 = vmatprep.subr.mxu0 0.0
    %1164 = vmatpush1.msra.mxu0 0.0
    %1165 = vmatprep.subr.mxu0 0.0
    %1166 = vmatpush1.msra.mxu0 0.0
    %1167 = vmatprep.subr.mxu0 0.0
    %1168 = vmatpush1.msra.mxu0 0.0
    %1169 = vmatprep.subr.mxu0 0.0
    %1170 = vmatpush1.msra.mxu0 0.0
    %1171 = vmatprep.subr.mxu0 0.0
    %1172 = vmatpush1.msra.mxu0 0.0
    %1173 = vmatprep.subr.mxu0 0.0
    %1174 = vmatpush1.msra.mxu0 0.0
    %1175 = vmatprep.subr.mxu0 0.0
    %1176 = vmatpush1.msra.mxu0 0.0
    %1177 = vmatprep.subr.mxu0 0.0
    %1178 = vmatpush1.msra.mxu0 0.0
    %1179 = vmatprep.subr.mxu0 0.0
    %1180 = vmatpush1.msra.mxu0 0.0
    %1181 = vmatprep.mubr.f32.mxu0 0.0
    %1182 = vmatmul.mubr.f32.gmra.mrb[0].mxu0 %v1115
    %v1183 = vpop.f32.mrb[0].mxu0
    %v1184 = vadd.f32 0.0, %v1183
    %v1185 = vpop.f32.mrb[0].mxu0
    %1186 = vdwg.mxu0
    %1187 = vrot.lane.b32.xlu0 %v174, 104
    %v1188 = vpop.permute.xlu0 %1187
    %1189 = vrot.lane.b32.xlu0 %v174, 72
    %v1190 = vpop.permute.xlu0 %1189
    %v1191 = vsel %vm189, %v1188, 0
    %v1193 = vsel %vm189, %v1190, 0
    %1195 = vmatprep.subr.mxu0 0.0
    %1196 = vmatpush1.xpose.msra.mxu0 %v1193
    %1197 = vmatprep.subr.mxu0 0.0
    %1198 = vmatpush1.xpose.msra.mxu0 0.0
    %1199 = vmatprep.subr.mxu0 0.0
    %1200 = vmatpush1.xpose.msra.mxu0 0.0
    %1201 = vmatprep.subr.mxu0 0.0
    %1202 = vmatpush1.xpose.msra.mxu0 0.0
    %1203 = vmatprep.subr.mxu0 0.0
    %1204 = vmatpush1.xpose.msra.mxu0 0.0
    %1205 = vmatprep.subr.mxu0 0.0
    %1206 = vmatpush1.xpose.msra.mxu0 0.0
    %1207 = vmatprep.subr.mxu0 0.0
    %1208 = vmatpush1.xpose.msra.mxu0 0.0
    %1209 = vmatprep.subr.mxu0 0.0
    %1210 = vmatpush1.xpose.msra.mxu0 0.0
    %1211 = vmatprep.subr.mxu0 0.0
    %1212 = vmatpush1.xpose.msra.mxu0 0.0
    %1213 = vmatprep.subr.mxu0 0.0
    %1214 = vmatpush1.xpose.msra.mxu0 0.0
    %1215 = vmatprep.subr.mxu0 0.0
    %1216 = vmatpush1.xpose.msra.mxu0 0.0
    %1217 = vmatprep.subr.mxu0 0.0
    %1218 = vmatpush1.xpose.msra.mxu0 0.0
    %1219 = vmatprep.subr.mxu0 0.0
    %1220 = vmatpush1.xpose.msra.mxu0 0.0
    %1221 = vmatprep.subr.mxu0 0.0
    %1222 = vmatpush1.xpose.msra.mxu0 0.0
    %1223 = vmatprep.subr.mxu0 0.0
    %1224 = vmatpush1.xpose.msra.mxu0 0.0
    %1225 = vmatprep.subr.mxu0 0.0
    %1226 = vmatpush1.xpose.msra.mxu0 0.0
    %1227 = vmatprep.subr.mxu0 0.0
    %1228 = vmatpush1.xpose.msra.mxu0 0.0
    %1229 = vmatprep.subr.mxu0 0.0
    %1230 = vmatpush1.xpose.msra.mxu0 0.0
    %1231 = vmatprep.subr.mxu0 0.0
    %1232 = vmatpush1.xpose.msra.mxu0 0.0
    %1233 = vmatprep.subr.mxu0 0.0
    %1234 = vmatpush1.xpose.msra.mxu0 0.0
    %1235 = vmatprep.subr.mxu0 0.0
    %1236 = vmatpush1.xpose.msra.mxu0 0.0
    %1237 = vmatprep.subr.mxu0 0.0
    %1238 = vmatpush1.xpose.msra.mxu0 0.0
    %1239 = vmatprep.subr.mxu0 0.0
    %1240 = vmatpush1.xpose.msra.mxu0 0.0
    %1241 = vmatprep.subr.mxu0 0.0
    %1242 = vmatpush1.xpose.msra.mxu0 0.0
    %1243 = vmatprep.subr.mxu0 0.0
    %1244 = vmatpush1.xpose.msra.mxu0 0.0
    %1245 = vmatprep.subr.mxu0 0.0
    %1246 = vmatpush1.xpose.msra.mxu0 0.0
    %1247 = vmatprep.subr.mxu0 0.0
    %1248 = vmatpush1.xpose.msra.mxu0 0.0
    %1249 = vmatprep.subr.mxu0 0.0
    %1250 = vmatpush1.xpose.msra.mxu0 0.0
    %1251 = vmatprep.subr.mxu0 0.0
    %1252 = vmatpush1.xpose.msra.mxu0 0.0
    %1253 = vmatprep.subr.mxu0 0.0
    %1254 = vmatpush1.xpose.msra.mxu0 0.0
    %1255 = vmatprep.subr.mxu0 0.0
    %1256 = vmatpush1.xpose.msra.mxu0 0.0
    %1257 = vmatprep.subr.mxu0 0.0
    %1258 = vmatpush1.xpose.msra.mxu0 0.0
    %1259 = vmatprep.mubr.f32.mxu0 0.0
    %1260 = vmatmul.mubr.f32.gmra.mrb[0].mxu0 %v1191
    %v1261 = vpop.f32.mrb[0].mxu0
    %v1262 = vadd.f32 0.0, %v1261
    %v1263 = vpop.f32.mrb[0].mxu0
    %1264 = vdwg.mxu0
    %1265 = vrot.lane.b32.xlu0 %v177, 104
    %v1266 = vpop.permute.xlu0 %1265
    %1267 = vrot.lane.b32.xlu0 %v177, 72
    %v1268 = vpop.permute.xlu0 %1267
    %v1269 = vsel %vm189, %v1266, 0
    %v1271 = vsel %vm189, %v1268, 0
    %1273 = vmatprep.subr.mxu0 0.0
    %1274 = vmatpush1.xpose.msra.mxu0 %v1271
    %1275 = vmatprep.subr.mxu0 0.0
    %1276 = vmatpush1.xpose.msra.mxu0 0.0
    %1277 = vmatprep.subr.mxu0 0.0
    %1278 = vmatpush1.xpose.msra.mxu0 0.0
    %1279 = vmatprep.subr.mxu0 0.0
    %1280 = vmatpush1.xpose.msra.mxu0 0.0
    %1281 = vmatprep.subr.mxu0 0.0
    %1282 = vmatpush1.xpose.msra.mxu0 0.0
    %1283 = vmatprep.subr.mxu0 0.0
    %1284 = vmatpush1.xpose.msra.mxu0 0.0
    %1285 = vmatprep.subr.mxu0 0.0
    %1286 = vmatpush1.xpose.msra.mxu0 0.0
    %1287 = vmatprep.subr.mxu0 0.0
    %1288 = vmatpush1.xpose.msra.mxu0 0.0
    %1289 = vmatprep.subr.mxu0 0.0
    %1290 = vmatpush1.xpose.msra.mxu0 0.0
    %1291 = vmatprep.subr.mxu0 0.0
    %1292 = vmatpush1.xpose.msra.mxu0 0.0
    %1293 = vmatprep.subr.mxu0 0.0
    %1294 = vmatpush1.xpose.msra.mxu0 0.0
    %1295 = vmatprep.subr.mxu0 0.0
    %1296 = vmatpush1.xpose.msra.mxu0 0.0
    %1297 = vmatprep.subr.mxu0 0.0
    %1298 = vmatpush1.xpose.msra.mxu0 0.0
    %1299 = vmatprep.subr.mxu0 0.0
    %1300 = vmatpush1.xpose.msra.mxu0 0.0
    %1301 = vmatprep.subr.mxu0 0.0
    %1302 = vmatpush1.xpose.msra.mxu0 0.0
    %1303 = vmatprep.subr.mxu0 0.0
    %1304 = vmatpush1.xpose.msra.mxu0 0.0
    %1305 = vmatprep.subr.mxu0 0.0
    %1306 = vmatpush1.xpose.msra.mxu0 0.0
    %1307 = vmatprep.subr.mxu0 0.0
    %1308 = vmatpush1.xpose.msra.mxu0 0.0
    %1309 = vmatprep.subr.mxu0 0.0
    %1310 = vmatpush1.xpose.msra.mxu0 0.0
    %1311 = vmatprep.subr.mxu0 0.0
    %1312 = vmatpush1.xpose.msra.mxu0 0.0
    %1313 = vmatprep.subr.mxu0 0.0
    %1314 = vmatpush1.xpose.msra.mxu0 0.0
    %1315 = vmatprep.subr.mxu0 0.0
    %1316 = vmatpush1.xpose.msra.mxu0 0.0
    %1317 = vmatprep.subr.mxu0 0.0
    %1318 = vmatpush1.xpose.msra.mxu0 0.0
    %1319 = vmatprep.subr.mxu0 0.0
    %1320 = vmatpush1.xpose.msra.mxu0 0.0
    %1321 = vmatprep.subr.mxu0 0.0
    %1322 = vmatpush1.xpose.msra.mxu0 0.0
    %1323 = vmatprep.subr.mxu0 0.0
    %1324 = vmatpush1.xpose.msra.mxu0 0.0
    %1325 = vmatprep.subr.mxu0 0.0
    %1326 = vmatpush1.xpose.msra.mxu0 0.0
    %1327 = vmatprep.subr.mxu0 0.0
    %1328 = vmatpush1.xpose.msra.mxu0 0.0
    %1329 = vmatprep.subr.mxu0 0.0
    %1330 = vmatpush1.xpose.msra.mxu0 0.0
    %1331 = vmatprep.subr.mxu0 0.0
    %1332 = vmatpush1.xpose.msra.mxu0 0.0
    %1333 = vmatprep.subr.mxu0 0.0
    %1334 = vmatpush1.xpose.msra.mxu0 0.0
    %1335 = vmatprep.subr.mxu0 0.0
    %1336 = vmatpush1.xpose.msra.mxu0 0.0
    %1337 = vmatprep.mubr.f32.mxu0 0.0
    %1338 = vmatmul.mubr.f32.gmra.mrb[0].mxu0 %v1269
    %v1339 = vpop.f32.mrb[0].mxu0
    %v1340 = vadd.f32 0.0, %v1339
    %v1341 = vpop.f32.mrb[0].mxu0
    %1342 = vdwg.mxu0
    %v1343 = vmul.f32 %v1262, 0.35355338
    %v1344 = vmul.f32 %v1340, 0.35355338
    %v1345 = vadd.f32 %v1343, %v184
    %v1346 = vadd.f32 %v1344, %v185
    %v1347 = vsel %vm189, %v1345, -inf
    %1348 = vmax.xlane.f32.xlu0 %v1347
    %v1349 = vpop.xlane.xlu0 %1348
    %v1350 = vsel %vm189, %v1346, -inf
    %1351 = vmax.xlane.f32.xlu0 %v1350
    %v1352 = vpop.xlane.xlu0 %1351
    %v1353 = vsub.f32 %v1345, %v1349
    %v1354 = vsub.f32 %v1346, %v1352
    %v1355 = vmul.f32 %v1353, 1.442695
    %v1356 = vpow.pop %v1355
    %v1357 = vmul.f32 %v1354, 1.442695
    %v1358 = vpow.pop %v1357
    %v1359 = vsel %vm189, %v1356, 0.0
    %1360 = vadd.xlane.f32.xlu0 %v1359
    %v1361 = vpop.xlane.xlu0 %1360
    %v1362 = vsel %vm189, %v1358, 0.0
    %1363 = vadd.xlane.f32.xlu0 %v1362
    %v1364 = vpop.xlane.xlu0 %1363
    %v1365 = vrcp.pop %v1361
    %v1366 = vrcp.pop %v1364
    %v1367 = vmul.f32 %v1356, %v1365
    %v1368 = vmul.f32 %v1358, %v1366
    %1369 = vrot.lane.b32.xlu0 %v174, 40
    %v1370 = vpop.permute.xlu0 %1369
    %v1373 = vsel %vm189, %v1367, 0
    %1375 = vmatprep.subr.mxu0 0.0
    %1376 = vmatpush1.msra.mxu0 %v1370
    %1377 = vmatprep.subr.mxu0 0.0
    %1378 = vmatpush1.msra.mxu0 0.0
    %1379 = vmatprep.subr.mxu0 0.0
    %1380 = vmatpush1.msra.mxu0 0.0
    %1381 = vmatprep.subr.mxu0 0.0
    %1382 = vmatpush1.msra.mxu0 0.0
    %1383 = vmatprep.subr.mxu0 0.0
    %1384 = vmatpush1.msra.mxu0 0.0
    %1385 = vmatprep.subr.mxu0 0.0
    %1386 = vmatpush1.msra.mxu0 0.0
    %1387 = vmatprep.subr.mxu0 0.0
    %1388 = vmatpush1.msra.mxu0 0.0
    %1389 = vmatprep.subr.mxu0 0.0
    %1390 = vmatpush1.msra.mxu0 0.0
    %1391 = vmatprep.subr.mxu0 0.0
    %1392 = vmatpush1.msra.mxu0 0.0
    %1393 = vmatprep.subr.mxu0 0.0
    %1394 = vmatpush1.msra.mxu0 0.0
    %1395 = vmatprep.subr.mxu0 0.0
    %1396 = vmatpush1.msra.mxu0 0.0
    %1397 = vmatprep.subr.mxu0 0.0
    %1398 = vmatpush1.msra.mxu0 0.0
    %1399 = vmatprep.subr.mxu0 0.0
    %1400 = vmatpush1.msra.mxu0 0.0
    %1401 = vmatprep.subr.mxu0 0.0
    %1402 = vmatpush1.msra.mxu0 0.0
    %1403 = vmatprep.subr.mxu0 0.0
    %1404 = vmatpush1.msra.mxu0 0.0
    %1405 = vmatprep.subr.mxu0 0.0
    %1406 = vmatpush1.msra.mxu0 0.0
    %1407 = vmatprep.subr.mxu0 0.0
    %1408 = vmatpush1.msra.mxu0 0.0
    %1409 = vmatprep.subr.mxu0 0.0
    %1410 = vmatpush1.msra.mxu0 0.0
    %1411 = vmatprep.subr.mxu0 0.0
    %1412 = vmatpush1.msra.mxu0 0.0
    %1413 = vmatprep.subr.mxu0 0.0
    %1414 = vmatpush1.msra.mxu0 0.0
    %1415 = vmatprep.subr.mxu0 0.0
    %1416 = vmatpush1.msra.mxu0 0.0
    %1417 = vmatprep.subr.mxu0 0.0
    %1418 = vmatpush1.msra.mxu0 0.0
    %1419 = vmatprep.subr.mxu0 0.0
    %1420 = vmatpush1.msra.mxu0 0.0
    %1421 = vmatprep.subr.mxu0 0.0
    %1422 = vmatpush1.msra.mxu0 0.0
    %1423 = vmatprep.subr.mxu0 0.0
    %1424 = vmatpush1.msra.mxu0 0.0
    %1425 = vmatprep.subr.mxu0 0.0
    %1426 = vmatpush1.msra.mxu0 0.0
    %1427 = vmatprep.subr.mxu0 0.0
    %1428 = vmatpush1.msra.mxu0 0.0
    %1429 = vmatprep.subr.mxu0 0.0
    %1430 = vmatpush1.msra.mxu0 0.0
    %1431 = vmatprep.subr.mxu0 0.0
    %1432 = vmatpush1.msra.mxu0 0.0
    %1433 = vmatprep.subr.mxu0 0.0
    %1434 = vmatpush1.msra.mxu0 0.0
    %1435 = vmatprep.subr.mxu0 0.0
    %1436 = vmatpush1.msra.mxu0 0.0
    %1437 = vmatprep.subr.mxu0 0.0
    %1438 = vmatpush1.msra.mxu0 0.0
    %1439 = vmatprep.mubr.f32.mxu0 0.0
    %1440 = vmatmul.mubr.f32.gmra.mrb[0].mxu0 %v1373
    %v1441 = vpop.f32.mrb[0].mxu0
    %v1442 = vadd.f32 0.0, %v1441
    %v1443 = vpop.f32.mrb[0].mxu0
    %1444 = vdwg.mxu0
    %1445 = vrot.lane.b32.xlu0 %v177, 40
    %v1446 = vpop.permute.xlu0 %1445
    %v1449 = vsel %vm189, %v1368, 0
    %1451 = vmatprep.subr.mxu0 0.0
    %1452 = vmatpush1.msra.mxu0 %v1446
    %1453 = vmatprep.subr.mxu0 0.0
    %1454 = vmatpush1.msra.mxu0 0.0
    %1455 = vmatprep.subr.mxu0 0.0
    %1456 = vmatpush1.msra.mxu0 0.0
    %1457 = vmatprep.subr.mxu0 0.0
    %1458 = vmatpush1.msra.mxu0 0.0
    %1459 = vmatprep.subr.mxu0 0.0
    %1460 = vmatpush1.msra.mxu0 0.0
    %1461 = vmatprep.subr.mxu0 0.0
    %1462 = vmatpush1.msra.mxu0 0.0
    %1463 = vmatprep.subr.mxu0 0.0
    %1464 = vmatpush1.msra.mxu0 0.0
    %1465 = vmatprep.subr.mxu0 0.0
    %1466 = vmatpush1.msra.mxu0 0.0
    %1467 = vmatprep.subr.mxu0 0.0
    %1468 = vmatpush1.msra.mxu0 0.0
    %1469 = vmatprep.subr.mxu0 0.0
    %1470 = vmatpush1.msra.mxu0 0.0
    %1471 = vmatprep.subr.mxu0 0.0
    %1472 = vmatpush1.msra.mxu0 0.0
    %1473 = vmatprep.subr.mxu0 0.0
    %1474 = vmatpush1.msra.mxu0 0.0
    %1475 = vmatprep.subr.mxu0 0.0
    %1476 = vmatpush1.msra.mxu0 0.0
    %1477 = vmatprep.subr.mxu0 0.0
    %1478 = vmatpush1.msra.mxu0 0.0
    %1479 = vmatprep.subr.mxu0 0.0
    %1480 = vmatpush1.msra.mxu0 0.0
    %1481 = vmatprep.subr.mxu0 0.0
    %1482 = vmatpush1.msra.mxu0 0.0
    %1483 = vmatprep.subr.mxu0 0.0
    %1484 = vmatpush1.msra.mxu0 0.0
    %1485 = vmatprep.subr.mxu0 0.0
    %1486 = vmatpush1.msra.mxu0 0.0
    %1487 = vmatprep.subr.mxu0 0.0
    %1488 = vmatpush1.msra.mxu0 0.0
    %1489 = vmatprep.subr.mxu0 0.0
    %1490 = vmatpush1.msra.mxu0 0.0
    %1491 = vmatprep.subr.mxu0 0.0
    %1492 = vmatpush1.msra.mxu0 0.0
    %1493 = vmatprep.subr.mxu0 0.0
    %1494 = vmatpush1.msra.mxu0 0.0
    %1495 = vmatprep.subr.mxu0 0.0
    %1496 = vmatpush1.msra.mxu0 0.0
    %1497 = vmatprep.subr.mxu0 0.0
    %1498 = vmatpush1.msra.mxu0 0.0
    %1499 = vmatprep.subr.mxu0 0.0
    %1500 = vmatpush1.msra.mxu0 0.0
    %1501 = vmatprep.subr.mxu0 0.0
    %1502 = vmatpush1.msra.mxu0 0.0
    %1503 = vmatprep.subr.mxu0 0.0
    %1504 = vmatpush1.msra.mxu0 0.0
    %1505 = vmatprep.subr.mxu0 0.0
    %1506 = vmatpush1.msra.mxu0 0.0
    %1507 = vmatprep.subr.mxu0 0.0
    %1508 = vmatpush1.msra.mxu0 0.0
    %1509 = vmatprep.subr.mxu0 0.0
    %1510 = vmatpush1.msra.mxu0 0.0
    %1511 = vmatprep.subr.mxu0 0.0
    %1512 = vmatpush1.msra.mxu0 0.0
    %1513 = vmatprep.subr.mxu0 0.0
    %1514 = vmatpush1.msra.mxu0 0.0
    %1515 = vmatprep.mubr.f32.mxu0 0.0
    %1516 = vmatmul.mubr.f32.gmra.mrb[0].mxu0 %v1449
    %v1517 = vpop.f32.mrb[0].mxu0
    %v1518 = vadd.f32 0.0, %v1517
    %v1519 = vpop.f32.mrb[0].mxu0
    %1520 = vdwg.mxu0
    %1523 = vrot.lane.b32.xlu0 %v774, 8
    %v1524 = vpop.permute.xlu0 %1523
    %1525 = vrot.lane.b32.xlu0 %v850, 8
    %v1526 = vpop.permute.xlu0 %1525
    %1531 = vrot.lane.b32.xlu0 %v1108, 16
    %v1532 = vpop.permute.xlu0 %1531
    %1533 = vrot.lane.b32.xlu0 %v1184, 16
    %v1534 = vpop.permute.xlu0 %1533
    %1539 = vrot.lane.b32.xlu0 %v1442, 24
    %v1540 = vpop.permute.xlu0 %1539
    %1541 = vrot.lane.b32.xlu0 %v1518, 24
    %v1542 = vpop.permute.xlu0 %1541
    %v1545 = vsel %vm189, %v440, %v1524
    %v1546 = vsel %vm189, %v516, %v1526
    %vm1547 = vcmask 130048
    %v1548 = vsel %vm1547, %v1545, %v1532
    %v1549 = vsel %vm1547, %v1546, %v1534
    %vm1550 = vcmask 195584
    %v1551 = vsel %vm1550, %v1548, %v1540
    %v1552 = vsel %vm1550, %v1549, %v1542
    %v1553 = vpack.c.bf16 %v1552, %v1551
    %v1558 = vunpack.c.l.b16 %v80
    %v1559 = vunpack.c.l.b16 %v81
    %v1560 = vunpack.c.l.b16 %v82
    %v1561 = vunpack.c.l.b16 %v83
    %v1562 = vpack.c.b16 %v1559, %v1558
    %v1563 = vpack.c.b16 %v1561, %v1560
    %v1567 = vsel %vm135, %v1553, 0
    %1569 = vmatprep.subr.bf16.mxu0 0
    %1570 = vmatpush1.bf16.msra.mxu0 %v1562
    %1571 = vmatprep.subr.bf16.mxu0 0
    %1572 = vmatpush1.bf16.msra.mxu0 %v1563
    %1573 = vmatprep.subr.bf16.mxu0 0
    %1574 = vmatpush1.bf16.msra.mxu0 0
    %1575 = vmatprep.subr.bf16.mxu0 0
    %1576 = vmatpush1.bf16.msra.mxu0 0
    %1577 = vmatprep.subr.bf16.mxu0 0
    %1578 = vmatpush1.bf16.msra.mxu0 0
    %1579 = vmatprep.subr.bf16.mxu0 0
    %1580 = vmatpush1.bf16.msra.mxu0 0
    %1581 = vmatprep.subr.bf16.mxu0 0
    %1582 = vmatpush1.bf16.msra.mxu0 0
    %1583 = vmatprep.subr.bf16.mxu0 0
    %1584 = vmatpush1.bf16.msra.mxu0 0
    %1585 = vmatprep.subr.bf16.mxu0 0
    %1586 = vmatpush1.bf16.msra.mxu0 0
    %1587 = vmatprep.subr.bf16.mxu0 0
    %1588 = vmatpush1.bf16.msra.mxu0 0
    %1589 = vmatprep.subr.bf16.mxu0 0
    %1590 = vmatpush1.bf16.msra.mxu0 0
    %1591 = vmatprep.subr.bf16.mxu0 0
    %1592 = vmatpush1.bf16.msra.mxu0 0
    %1593 = vmatprep.subr.bf16.mxu0 0
    %1594 = vmatpush1.bf16.msra.mxu0 0
    %1595 = vmatprep.subr.bf16.mxu0 0
    %1596 = vmatpush1.bf16.msra.mxu0 0
    %1597 = vmatprep.subr.bf16.mxu0 0
    %1598 = vmatpush1.bf16.msra.mxu0 0
    %1599 = vmatprep.subr.bf16.mxu0 0
    %1600 = vmatpush1.bf16.msra.mxu0 0
    %1601 = vmatprep.mubr.bf16.mxu0 0
    %1602 = vmatmul.mubr.bf16.gmra.mrb[0].mxu0 %v1567
    %v1603 = vpop.f32.mrb[0].mxu0
    %v1604 = vadd.f32 %v116, %v1603
    %v1605 = vpop.f32.mrb[0].mxu0
    %v1606 = vpop.f32.mrb[0].mxu0
    %v1607 = vadd.f32 %v117, %v1606
    %v1608 = vpop.f32.mrb[0].mxu0
    %1609 = vdwg.mxu0
    %v1610 = vsel %vm135, %v1604, 0.0
    %1611 = vadd.xlane.f32.xlu0 %v1610
    %v1612 = vpop.xlane.xlu0 %1611
    %v1613 = vsel %vm135, %v1607, 0.0
    %1614 = vadd.xlane.f32.xlu0 %v1613
    %v1615 = vpop.xlane.xlu0 %1614
    %v1616 = vrcp.pop 32.0
    %v1617 = vmul.f32 %v1612, %v1616
    %v1618 = vmul.f32 %v1615, %v1616
    %v1619 = vsub.f32 %v1604, %v1617
    %v1620 = vsub.f32 %v1607, %v1618
    %v1621 = vmul.f32 %v1619, %v1619
    %v1622 = vmul.f32 %v1620, %v1620
    %v1623 = vsel %vm135, %v1621, 0.0
    %1624 = vadd.xlane.f32.xlu0 %v1623
    %v1625 = vpop.xlane.xlu0 %1624
    %v1626 = vsel %vm135, %v1622, 0.0
    %1627 = vadd.xlane.f32.xlu0 %v1626
    %v1628 = vpop.xlane.xlu0 %1627
    %v1629 = vmul.f32 %v1625, %v1616
    %v1630 = vmul.f32 %v1628, %v1616
    %v1631 = vadd.f32 %v1629, 1e-06
    %v1632 = vadd.f32 %v1630, 1e-06
    %v1633 = vrsqrt.pop %v1631
    %v1634 = vrsqrt.pop %v1632
    %v1635 = vmul.f32 %v1619, %v1633
    %v1636 = vmul.f32 %v1620, %v1634
    %v1637 = vlaneseq
    %v1638 = vshrl.u32 %v1637, 7
    %v1639 = vsub.s32 2, %v1638
    %v1640 = vrot.slane %v111, %v1639
    %v1641 = vmul.f32 %v1635, %v1640
    %v1642 = vmul.f32 %v1636, %v1640
    %v1643 = vlaneseq
    %v1644 = vshrl.u32 %v1643, 7
    %v1645 = vsub.s32 3, %v1644
    %v1646 = vrot.slane %v111, %v1645
    %v1647 = vadd.f32 %v1641, %v1646
    %v1648 = vadd.f32 %v1642, %v1646
    %v1649 = vpack.c.bf16 %v1648, %v1647
    %v1654 = vunpack.c.l.b16 %v84
    %v1655 = vunpack.c.l.b16 %v85
    %v1656 = vunpack.c.l.b16 %v86
    %v1657 = vunpack.c.l.b16 %v87
    %v1658 = vpack.c.b16 %v1655, %v1654
    %v1659 = vpack.c.b16 %v1657, %v1656
    %v1663 = vsel %vm135, %v1649, 0
    %1665 = vmatprep.subr.bf16.mxu0 0
    %1666 = vmatpush1.bf16.msra.mxu0 %v1658
    %1667 = vmatprep.subr.bf16.mxu0 0
    %1668 = vmatpush1.bf16.msra.mxu0 %v1659
    %1669 = vmatprep.subr.bf16.mxu0 0
    %1670 = vmatpush1.bf16.msra.mxu0 0
    %1671 = vmatprep.subr.bf16.mxu0 0
    %1672 = vmatpush1.bf16.msra.mxu0 0
    %1673 = vmatprep.subr.bf16.mxu0 0
    %1674 = vmatpush1.bf16.msra.mxu0 0
    %1675 = vmatprep.subr.bf16.mxu0 0
    %1676 = vmatpush1.bf16.msra.mxu0 0
    %1677 = vmatprep.subr.bf16.mxu0 0
    %1678 = vmatpush1.bf16.msra.mxu0 0
    %1679 = vmatprep.subr.bf16.mxu0 0
    %1680 = vmatpush1.bf16.msra.mxu0 0
    %1681 = vmatprep.subr.bf16.mxu0 0
    %1682 = vmatpush1.bf16.msra.mxu0 0
    %1683 = vmatprep.subr.bf16.mxu0 0
    %1684 = vmatpush1.bf16.msra.mxu0 0
    %1685 = vmatprep.subr.bf16.mxu0 0
    %1686 = vmatpush1.bf16.msra.mxu0 0
    %1687 = vmatprep.subr.bf16.mxu0 0
    %1688 = vmatpush1.bf16.msra.mxu0 0
    %1689 = vmatprep.subr.bf16.mxu0 0
    %1690 = vmatpush1.bf16.msra.mxu0 0
    %1691 = vmatprep.subr.bf16.mxu0 0
    %1692 = vmatpush1.bf16.msra.mxu0 0
    %1693 = vmatprep.subr.bf16.mxu0 0
    %1694 = vmatpush1.bf16.msra.mxu0 0
    %1695 = vmatprep.subr.bf16.mxu0 0
    %1696 = vmatpush1.bf16.msra.mxu0 0
    %1697 = vmatprep.mubr.bf16.mxu0 0
    %1698 = vmatmul.mubr.bf16.gmra.mrb[0].mxu0 %v1663
    %v1699 = vpop.f32.mrb[0].mxu0
    %v1700 = vadd.f32 0.0, %v1699
    %v1701 = vpop.f32.mrb[0].mxu0
    %v1702 = vpop.f32.mrb[0].mxu0
    %v1703 = vadd.f32 0.0, %v1702
    %v1704 = vpop.f32.mrb[0].mxu0
    %1705 = vdwg.mxu0
    %v1706 = vpack.c.bf16 %v119, %v118
    %v1707 = vpack.c.bf16 %v121, %v120
    %v1712 = vunpack.c.l.b16 %v88
    %v1713 = vunpack.c.l.b16 %v89
    %v1714 = vunpack.c.l.b16 %v90
    %v1715 = vunpack.c.l.b16 %v91
    %v1716 = vpack.c.b16 %v1713, %v1712
    %v1717 = vpack.c.b16 %v1715, %v1714
    %v1721 = vsel %vm135, %v1706, 0
    %v1724 = vsel %vm135, %v1707, 0
    %1726 = vmatprep.subr.bf16.mxu0 0
    %1727 = vmatpush1.bf16.msra.mxu0 %v1716
    %1728 = vmatprep.subr.bf16.mxu0 0
    %1729 = vmatpush1.bf16.msra.mxu0 %v1717
    %1730 = vmatprep.subr.bf16.mxu0 0
    %1731 = vmatpush1.bf16.msra.mxu0 0
    %1732 = vmatprep.subr.bf16.mxu0 0
    %1733 = vmatpush1.bf16.msra.mxu0 0
    %1734 = vmatprep.subr.bf16.mxu0 0
    %1735 = vmatpush1.bf16.msra.mxu0 0
    %1736 = vmatprep.subr.bf16.mxu0 0
    %1737 = vmatpush1.bf16.msra.mxu0 0
    %1738 = vmatprep.subr.bf16.mxu0 0
    %1739 = vmatpush1.bf16.msra.mxu0 0
    %1740 = vmatprep.subr.bf16.mxu0 0
    %1741 = vmatpush1.bf16.msra.mxu0 0
    %1742 = vmatprep.subr.bf16.mxu0 0
    %1743 = vmatpush1.bf16.msra.mxu0 0
    %1744 = vmatprep.subr.bf16.mxu0 0
    %1745 = vmatpush1.bf16.msra.mxu0 0
    %1746 = vmatprep.subr.bf16.mxu0 0
    %1747 = vmatpush1.bf16.msra.mxu0 0
    %1748 = vmatprep.subr.bf16.mxu0 0
    %1749 = vmatpush1.bf16.msra.mxu0 0
    %1750 = vmatprep.subr.bf16.mxu0 0
    %1751 = vmatpush1.bf16.msra.mxu0 0
    %1752 = vmatprep.subr.bf16.mxu0 0
    %1753 = vmatpush1.bf16.msra.mxu0 0
    %1754 = vmatprep.subr.bf16.mxu0 0
    %1755 = vmatpush1.bf16.msra.mxu0 0
    %1756 = vmatprep.subr.bf16.mxu0 0
    %1757 = vmatpush1.bf16.msra.mxu0 0
    %1758 = vmatprep.mubr.bf16.mxu0 0
    %1759 = vmatmul.mubr.bf16.gmra.mrb[0].mxu0 %v1721
    %v1760 = vpop.f32.mrb[0].mxu0
    %v1761 = vadd.f32 0.0, %v1760
    %v1762 = vpop.f32.mrb[0].mxu0
    %v1763 = vpop.f32.mrb[0].mxu0
    %v1764 = vadd.f32 0.0, %v1763
    %v1765 = vpop.f32.mrb[0].mxu0
    %1766 = vmatprep.mubr.bf16.mxu0 0
    %1767 = vmatmul.mubr.bf16.gmra.mrb[0].mxu0 %v1724
    %v1768 = vpop.f32.mrb[0].mxu0
    %v1769 = vadd.f32 0.0, %v1768
    %v1770 = vpop.f32.mrb[0].mxu0
    %v1771 = vpop.f32.mrb[0].mxu0
    %v1772 = vadd.f32 0.0, %v1771
    %v1773 = vpop.f32.mrb[0].mxu0
    %1774 = vdwg.mxu0
    %v1775 = vld [vmem:[%s3] sm:$0xff]
    %v1776 = vld [vmem:[%s3 + $0x8] sm:$0xff]
    %vm1777 = vcmp.eq.f32.partialorder %v1775, 0.0
    %vm1778 = vcmp.eq.f32.partialorder %v1776, 0.0
    %v1779 = vsel %vm1777, -1e+09, 0.0
    %v1780 = vsel %vm1778, -1e+09, 0.0
    %v1782 = vsel %vm189, %v1700, 0
    %v1785 = vsel %vm189, %v1761, 0
    %v1788 = vsel %vm189, %v1764, 0
    %1790 = vmatprep.subr.mxu0 0.0
    %1791 = vmatpush1.xpose.msra.mxu0 %v1785
    %1792 = vmatprep.subr.mxu0 0.0
    %1793 = vmatpush1.xpose.msra.mxu0 %v1788
    %1794 = vmatprep.subr.mxu0 0.0
    %1795 = vmatpush1.xpose.msra.mxu0 0.0
    %1796 = vmatprep.subr.mxu0 0.0
    %1797 = vmatpush1.xpose.msra.mxu0 0.0
    %1798 = vmatprep.subr.mxu0 0.0
    %1799 = vmatpush1.xpose.msra.mxu0 0.0
    %1800 = vmatprep.subr.mxu0 0.0
    %1801 = vmatpush1.xpose.msra.mxu0 0.0
    %1802 = vmatprep.subr.mxu0 0.0
    %1803 = vmatpush1.xpose.msra.mxu0 0.0
    %1804 = vmatprep.subr.mxu0 0.0
    %1805 = vmatpush1.xpose.msra.mxu0 0.0
    %1806 = vmatprep.subr.mxu0 0.0
    %1807 = vmatpush1.xpose.msra.mxu0 0.0
    %1808 = vmatprep.subr.mxu0 0.0
    %1809 = vmatpush1.xpose.msra.mxu0 0.0
    %1810 = vmatprep.subr.mxu0 0.0
    %1811 = vmatpush1.xpose.msra.mxu0 0.0
    %1812 = vmatprep.subr.mxu0 0.0
    %1813 = vmatpush1.xpose.msra.mxu0 0.0
    %1814 = vmatprep.subr.mxu0 0.0
    %1815 = vmatpush1.xpose.msra.mxu0 0.0
    %1816 = vmatprep.subr.mxu0 0.0
    %1817 = vmatpush1.xpose.msra.mxu0 0.0
    %1818 = vmatprep.subr.mxu0 0.0
    %1819 = vmatpush1.xpose.msra.mxu0 0.0
    %1820 = vmatprep.subr.mxu0 0.0
    %1821 = vmatpush1.xpose.msra.mxu0 0.0
    %1822 = vmatprep.subr.mxu0 0.0
    %1823 = vmatpush1.xpose.msra.mxu0 0.0
    %1824 = vmatprep.subr.mxu0 0.0
    %1825 = vmatpush1.xpose.msra.mxu0 0.0
    %1826 = vmatprep.subr.mxu0 0.0
    %1827 = vmatpush1.xpose.msra.mxu0 0.0
    %1828 = vmatprep.subr.mxu0 0.0
    %1829 = vmatpush1.xpose.msra.mxu0 0.0
    %1830 = vmatprep.subr.mxu0 0.0
    %1831 = vmatpush1.xpose.msra.mxu0 0.0
    %1832 = vmatprep.subr.mxu0 0.0
    %1833 = vmatpush1.xpose.msra.mxu0 0.0
    %1834 = vmatprep.subr.mxu0 0.0
    %1835 = vmatpush1.xpose.msra.mxu0 0.0
    %1836 = vmatprep.subr.mxu0 0.0
    %1837 = vmatpush1.xpose.msra.mxu0 0.0
    %1838 = vmatprep.subr.mxu0 0.0
    %1839 = vmatpush1.xpose.msra.mxu0 0.0
    %1840 = vmatprep.subr.mxu0 0.0
    %1841 = vmatpush1.xpose.msra.mxu0 0.0
    %1842 = vmatprep.subr.mxu0 0.0
    %1843 = vmatpush1.xpose.msra.mxu0 0.0
    %1844 = vmatprep.subr.mxu0 0.0
    %1845 = vmatpush1.xpose.msra.mxu0 0.0
    %1846 = vmatprep.subr.mxu0 0.0
    %1847 = vmatpush1.xpose.msra.mxu0 0.0
    %1848 = vmatprep.subr.mxu0 0.0
    %1849 = vmatpush1.xpose.msra.mxu0 0.0
    %1850 = vmatprep.subr.mxu0 0.0
    %1851 = vmatpush1.xpose.msra.mxu0 0.0
    %1852 = vmatprep.subr.mxu0 0.0
    %1853 = vmatpush1.xpose.msra.mxu0 0.0
    %1854 = vmatprep.mubr.f32.mxu0 0.0
    %1855 = vmatmul.mubr.f32.gmra.mrb[0].mxu0 %v1782
    %v1856 = vpop.f32.mrb[0].mxu0
    %v1857 = vadd.f32 0.0, %v1856
    %v1858 = vpop.f32.mrb[0].mxu0
    %1859 = vdwg.mxu0
    %v1861 = vsel %vm189, %v1703, 0
    %v1864 = vsel %vm189, %v1769, 0
    %v1867 = vsel %vm189, %v1772, 0
    %1869 = vmatprep.subr.mxu0 0.0
    %1870 = vmatpush1.xpose.msra.mxu0 %v1864
    %1871 = vmatprep.subr.mxu0 0.0
    %1872 = vmatpush1.xpose.msra.mxu0 %v1867
    %1873 = vmatprep.subr.mxu0 0.0
    %1874 = vmatpush1.xpose.msra.mxu0 0.0
    %1875 = vmatprep.subr.mxu0 0.0
    %1876 = vmatpush1.xpose.msra.mxu0 0.0
    %1877 = vmatprep.subr.mxu0 0.0
    %1878 = vmatpush1.xpose.msra.mxu0 0.0
    %1879 = vmatprep.subr.mxu0 0.0
    %1880 = vmatpush1.xpose.msra.mxu0 0.0
    %1881 = vmatprep.subr.mxu0 0.0
    %1882 = vmatpush1.xpose.msra.mxu0 0.0
    %1883 = vmatprep.subr.mxu0 0.0
    %1884 = vmatpush1.xpose.msra.mxu0 0.0
    %1885 = vmatprep.subr.mxu0 0.0
    %1886 = vmatpush1.xpose.msra.mxu0 0.0
    %1887 = vmatprep.subr.mxu0 0.0
    %1888 = vmatpush1.xpose.msra.mxu0 0.0
    %1889 = vmatprep.subr.mxu0 0.0
    %1890 = vmatpush1.xpose.msra.mxu0 0.0
    %1891 = vmatprep.subr.mxu0 0.0
    %1892 = vmatpush1.xpose.msra.mxu0 0.0
    %1893 = vmatprep.subr.mxu0 0.0
    %1894 = vmatpush1.xpose.msra.mxu0 0.0
    %1895 = vmatprep.subr.mxu0 0.0
    %1896 = vmatpush1.xpose.msra.mxu0 0.0
    %1897 = vmatprep.subr.mxu0 0.0
    %1898 = vmatpush1.xpose.msra.mxu0 0.0
    %1899 = vmatprep.subr.mxu0 0.0
    %1900 = vmatpush1.xpose.msra.mxu0 0.0
    %1901 = vmatprep.subr.mxu0 0.0
    %1902 = vmatpush1.xpose.msra.mxu0 0.0
    %1903 = vmatprep.subr.mxu0 0.0
    %1904 = vmatpush1.xpose.msra.mxu0 0.0
    %1905 = vmatprep.subr.mxu0 0.0
    %1906 = vmatpush1.xpose.msra.mxu0 0.0
    %1907 = vmatprep.subr.mxu0 0.0
    %1908 = vmatpush1.xpose.msra.mxu0 0.0
    %1909 = vmatprep.subr.mxu0 0.0
    %1910 = vmatpush1.xpose.msra.mxu0 0.0
    %1911 = vmatprep.subr.mxu0 0.0
    %1912 = vmatpush1.xpose.msra.mxu0 0.0
    %1913 = vmatprep.subr.mxu0 0.0
    %1914 = vmatpush1.xpose.msra.mxu0 0.0
    %1915 = vmatprep.subr.mxu0 0.0
    %1916 = vmatpush1.xpose.msra.mxu0 0.0
    %1917 = vmatprep.subr.mxu0 0.0
    %1918 = vmatpush1.xpose.msra.mxu0 0.0
    %1919 = vmatprep.subr.mxu0 0.0
    %1920 = vmatpush1.xpose.msra.mxu0 0.0
    %1921 = vmatprep.subr.mxu0 0.0
    %1922 = vmatpush1.xpose.msra.mxu0 0.0
    %1923 = vmatprep.subr.mxu0 0.0
    %1924 = vmatpush1.xpose.msra.mxu0 0.0
    %1925 = vmatprep.subr.mxu0 0.0
    %1926 = vmatpush1.xpose.msra.mxu0 0.0
    %1927 = vmatprep.subr.mxu0 0.0
    %1928 = vmatpush1.xpose.msra.mxu0 0.0
    %1929 = vmatprep.subr.mxu0 0.0
    %1930 = vmatpush1.xpose.msra.mxu0 0.0
    %1931 = vmatprep.subr.mxu0 0.0
    %1932 = vmatpush1.xpose.msra.mxu0 0.0
    %1933 = vmatprep.mubr.f32.mxu0 0.0
    %1934 = vmatmul.mubr.f32.gmra.mrb[0].mxu0 %v1861
    %v1935 = vpop.f32.mrb[0].mxu0
    %v1936 = vadd.f32 0.0, %v1935
    %v1937 = vpop.f32.mrb[0].mxu0
    %1938 = vdwg.mxu0
    %v1939 = vmul.f32 %v1857, 0.35355338
    %v1940 = vmul.f32 %v1936, 0.35355338
    %v1941 = vadd.f32 %v1939, %v1779
    %v1942 = vadd.f32 %v1940, %v1780
    %v1943 = vsel %vm1547, %v1941, -inf
    %1944 = vmax.xlane.f32.xlu0 %v1943
    %v1945 = vpop.xlane.xlu0 %1944
    %v1946 = vsel %vm1547, %v1942, -inf
    %1947 = vmax.xlane.f32.xlu0 %v1946
    %v1948 = vpop.xlane.xlu0 %1947
    %v1949 = vsub.f32 %v1941, %v1945
    %v1950 = vsub.f32 %v1942, %v1948
    %v1951 = vmul.f32 %v1949, 1.442695
    %v1952 = vpow.pop %v1951
    %v1953 = vmul.f32 %v1950, 1.442695
    %v1954 = vpow.pop %v1953
    %v1955 = vsel %vm1547, %v1952, 0.0
    %1956 = vadd.xlane.f32.xlu0 %v1955
    %v1957 = vpop.xlane.xlu0 %1956
    %v1958 = vsel %vm1547, %v1954, 0.0
    %1959 = vadd.xlane.f32.xlu0 %v1958
    %v1960 = vpop.xlane.xlu0 %1959
    %v1961 = vrcp.pop %v1957
    %v1962 = vrcp.pop %v1960
    %v1963 = vmul.f32 %v1952, %v1961
    %v1964 = vmul.f32 %v1954, %v1962
    %1965 = vrot.lane.b32.xlu0 %v1761, 96
    %v1966 = vpop.permute.xlu0 %1965
    %1967 = vrot.lane.b32.xlu0 %v1764, 96
    %v1968 = vpop.permute.xlu0 %1967
    %v1972 = vsel %vm1547, %v1963, 0
    %1974 = vmatprep.subr.mxu0 0.0
    %1975 = vmatpush1.msra.mxu0 %v1966
    %1976 = vmatprep.subr.mxu0 0.0
    %1977 = vmatpush1.msra.mxu0 %v1968
    %1978 = vmatprep.subr.mxu0 0.0
    %1979 = vmatpush1.msra.mxu0 0.0
    %1980 = vmatprep.subr.mxu0 0.0
    %1981 = vmatpush1.msra.mxu0 0.0
    %1982 = vmatprep.subr.mxu0 0.0
    %1983 = vmatpush1.msra.mxu0 0.0
    %1984 = vmatprep.subr.mxu0 0.0
    %1985 = vmatpush1.msra.mxu0 0.0
    %1986 = vmatprep.subr.mxu0 0.0
    %1987 = vmatpush1.msra.mxu0 0.0
    %1988 = vmatprep.subr.mxu0 0.0
    %1989 = vmatpush1.msra.mxu0 0.0
    %1990 = vmatprep.subr.mxu0 0.0
    %1991 = vmatpush1.msra.mxu0 0.0
    %1992 = vmatprep.subr.mxu0 0.0
    %1993 = vmatpush1.msra.mxu0 0.0
    %1994 = vmatprep.subr.mxu0 0.0
    %1995 = vmatpush1.msra.mxu0 0.0
    %1996 = vmatprep.subr.mxu0 0.0
    %1997 = vmatpush1.msra.mxu0 0.0
    %1998 = vmatprep.subr.mxu0 0.0
    %1999 = vmatpush1.msra.mxu0 0.0
    %2000 = vmatprep.subr.mxu0 0.0
    %2001 = vmatpush1.msra.mxu0 0.0
    %2002 = vmatprep.subr.mxu0 0.0
    %2003 = vmatpush1.msra.mxu0 0.0
    %2004 = vmatprep.subr.mxu0 0.0
    %2005 = vmatpush1.msra.mxu0 0.0
    %2006 = vmatprep.subr.mxu0 0.0
    %2007 = vmatpush1.msra.mxu0 0.0
    %2008 = vmatprep.subr.mxu0 0.0
    %2009 = vmatpush1.msra.mxu0 0.0
    %2010 = vmatprep.subr.mxu0 0.0
    %2011 = vmatpush1.msra.mxu0 0.0
    %2012 = vmatprep.subr.mxu0 0.0
    %2013 = vmatpush1.msra.mxu0 0.0
    %2014 = vmatprep.subr.mxu0 0.0
    %2015 = vmatpush1.msra.mxu0 0.0
    %2016 = vmatprep.subr.mxu0 0.0
    %2017 = vmatpush1.msra.mxu0 0.0
    %2018 = vmatprep.subr.mxu0 0.0
    %2019 = vmatpush1.msra.mxu0 0.0
    %2020 = vmatprep.subr.mxu0 0.0
    %2021 = vmatpush1.msra.mxu0 0.0
    %2022 = vmatprep.subr.mxu0 0.0
    %2023 = vmatpush1.msra.mxu0 0.0
    %2024 = vmatprep.subr.mxu0 0.0
    %2025 = vmatpush1.msra.mxu0 0.0
    %2026 = vmatprep.subr.mxu0 0.0
    %2027 = vmatpush1.msra.mxu0 0.0
    %2028 = vmatprep.subr.mxu0 0.0
    %2029 = vmatpush1.msra.mxu0 0.0
    %2030 = vmatprep.subr.mxu0 0.0
    %2031 = vmatpush1.msra.mxu0 0.0
    %2032 = vmatprep.subr.mxu0 0.0
    %2033 = vmatpush1.msra.mxu0 0.0
    %2034 = vmatprep.subr.mxu0 0.0
    %2035 = vmatpush1.msra.mxu0 0.0
    %2036 = vmatprep.subr.mxu0 0.0
    %2037 = vmatpush1.msra.mxu0 0.0
    %2038 = vmatprep.mubr.f32.mxu0 0.0
    %2039 = vmatmul.mubr.f32.gmra.mrb[0].mxu0 %v1972
    %v2040 = vpop.f32.mrb[0].mxu0
    %v2041 = vadd.f32 0.0, %v2040
    %v2042 = vpop.f32.mrb[0].mxu0
    %2043 = vdwg.mxu0
    %2044 = vrot.lane.b32.xlu0 %v1769, 96
    %v2045 = vpop.permute.xlu0 %2044
    %2046 = vrot.lane.b32.xlu0 %v1772, 96
    %v2047 = vpop.permute.xlu0 %2046
    %v2051 = vsel %vm1547, %v1964, 0
    %2053 = vmatprep.subr.mxu0 0.0
    %2054 = vmatpush1.msra.mxu0 %v2045
    %2055 = vmatprep.subr.mxu0 0.0
    %2056 = vmatpush1.msra.mxu0 %v2047
    %2057 = vmatprep.subr.mxu0 0.0
    %2058 = vmatpush1.msra.mxu0 0.0
    %2059 = vmatprep.subr.mxu0 0.0
    %2060 = vmatpush1.msra.mxu0 0.0
    %2061 = vmatprep.subr.mxu0 0.0
    %2062 = vmatpush1.msra.mxu0 0.0
    %2063 = vmatprep.subr.mxu0 0.0
    %2064 = vmatpush1.msra.mxu0 0.0
    %2065 = vmatprep.subr.mxu0 0.0
    %2066 = vmatpush1.msra.mxu0 0.0
    %2067 = vmatprep.subr.mxu0 0.0
    %2068 = vmatpush1.msra.mxu0 0.0
    %2069 = vmatprep.subr.mxu0 0.0
    %2070 = vmatpush1.msra.mxu0 0.0
    %2071 = vmatprep.subr.mxu0 0.0
    %2072 = vmatpush1.msra.mxu0 0.0
    %2073 = vmatprep.subr.mxu0 0.0
    %2074 = vmatpush1.msra.mxu0 0.0
    %2075 = vmatprep.subr.mxu0 0.0
    %2076 = vmatpush1.msra.mxu0 0.0
    %2077 = vmatprep.subr.mxu0 0.0
    %2078 = vmatpush1.msra.mxu0 0.0
    %2079 = vmatprep.subr.mxu0 0.0
    %2080 = vmatpush1.msra.mxu0 0.0
    %2081 = vmatprep.subr.mxu0 0.0
    %2082 = vmatpush1.msra.mxu0 0.0
    %2083 = vmatprep.subr.mxu0 0.0
    %2084 = vmatpush1.msra.mxu0 0.0
    %2085 = vmatprep.subr.mxu0 0.0
    %2086 = vmatpush1.msra.mxu0 0.0
    %2087 = vmatprep.subr.mxu0 0.0
    %2088 = vmatpush1.msra.mxu0 0.0
    %2089 = vmatprep.subr.mxu0 0.0
    %2090 = vmatpush1.msra.mxu0 0.0
    %2091 = vmatprep.subr.mxu0 0.0
    %2092 = vmatpush1.msra.mxu0 0.0
    %2093 = vmatprep.subr.mxu0 0.0
    %2094 = vmatpush1.msra.mxu0 0.0
    %2095 = vmatprep.subr.mxu0 0.0
    %2096 = vmatpush1.msra.mxu0 0.0
    %2097 = vmatprep.subr.mxu0 0.0
    %2098 = vmatpush1.msra.mxu0 0.0
    %2099 = vmatprep.subr.mxu0 0.0
    %2100 = vmatpush1.msra.mxu0 0.0
    %2101 = vmatprep.subr.mxu0 0.0
    %2102 = vmatpush1.msra.mxu0 0.0
    %2103 = vmatprep.subr.mxu0 0.0
    %2104 = vmatpush1.msra.mxu0 0.0
    %2105 = vmatprep.subr.mxu0 0.0
    %2106 = vmatpush1.msra.mxu0 0.0
    %2107 = vmatprep.subr.mxu0 0.0
    %2108 = vmatpush1.msra.mxu0 0.0
    %2109 = vmatprep.subr.mxu0 0.0
    %2110 = vmatpush1.msra.mxu0 0.0
    %2111 = vmatprep.subr.mxu0 0.0
    %2112 = vmatpush1.msra.mxu0 0.0
    %2113 = vmatprep.subr.mxu0 0.0
    %2114 = vmatpush1.msra.mxu0 0.0
    %2115 = vmatprep.subr.mxu0 0.0
    %2116 = vmatpush1.msra.mxu0 0.0
    %2117 = vmatprep.mubr.f32.mxu0 0.0
    %2118 = vmatmul.mubr.f32.gmra.mrb[0].mxu0 %v2051
    %v2119 = vpop.f32.mrb[0].mxu0
    %v2120 = vadd.f32 0.0, %v2119
    %v2121 = vpop.f32.mrb[0].mxu0
    %2122 = vdwg.mxu0
    %2123 = vrot.lane.b32.xlu0 %v1700, 120
    %v2124 = vpop.permute.xlu0 %2123
    %2125 = vrot.lane.b32.xlu0 %v1761, 120
    %v2126 = vpop.permute.xlu0 %2125
    %2127 = vrot.lane.b32.xlu0 %v1764, 120
    %v2128 = vpop.permute.xlu0 %2127
    %v2129 = vsel %vm189, %v2124, 0
    %v2131 = vsel %vm189, %v2126, 0
    %v2133 = vsel %vm189, %v2128, 0
    %2135 = vmatprep.subr.mxu0 0.0
    %2136 = vmatpush1.xpose.msra.mxu0 %v2131
    %2137 = vmatprep.subr.mxu0 0.0
    %2138 = vmatpush1.xpose.msra.mxu0 %v2133
    %2139 = vmatprep.subr.mxu0 0.0
    %2140 = vmatpush1.xpose.msra.mxu0 0.0
    %2141 = vmatprep.subr.mxu0 0.0
    %2142 = vmatpush1.xpose.msra.mxu0 0.0
    %2143 = vmatprep.subr.mxu0 0.0
    %2144 = vmatpush1.xpose.msra.mxu0 0.0
    %2145 = vmatprep.subr.mxu0 0.0
    %2146 = vmatpush1.xpose.msra.mxu0 0.0
    %2147 = vmatprep.subr.mxu0 0.0
    %2148 = vmatpush1.xpose.msra.mxu0 0.0
    %2149 = vmatprep.subr.mxu0 0.0
    %2150 = vmatpush1.xpose.msra.mxu0 0.0
    %2151 = vmatprep.subr.mxu0 0.0
    %2152 = vmatpush1.xpose.msra.mxu0 0.0
    %2153 = vmatprep.subr.mxu0 0.0
    %2154 = vmatpush1.xpose.msra.mxu0 0.0
    %2155 = vmatprep.subr.mxu0 0.0
    %2156 = vmatpush1.xpose.msra.mxu0 0.0
    %2157 = vmatprep.subr.mxu0 0.0
    %2158 = vmatpush1.xpose.msra.mxu0 0.0
    %2159 = vmatprep.subr.mxu0 0.0
    %2160 = vmatpush1.xpose.msra.mxu0 0.0
    %2161 = vmatprep.subr.mxu0 0.0
    %2162 = vmatpush1.xpose.msra.mxu0 0.0
    %2163 = vmatprep.subr.mxu0 0.0
    %2164 = vmatpush1.xpose.msra.mxu0 0.0
    %2165 = vmatprep.subr.mxu0 0.0
    %2166 = vmatpush1.xpose.msra.mxu0 0.0
    %2167 = vmatprep.subr.mxu0 0.0
    %2168 = vmatpush1.xpose.msra.mxu0 0.0
    %2169 = vmatprep.subr.mxu0 0.0
    %2170 = vmatpush1.xpose.msra.mxu0 0.0
    %2171 = vmatprep.subr.mxu0 0.0
    %2172 = vmatpush1.xpose.msra.mxu0 0.0
    %2173 = vmatprep.subr.mxu0 0.0
    %2174 = vmatpush1.xpose.msra.mxu0 0.0
    %2175 = vmatprep.subr.mxu0 0.0
    %2176 = vmatpush1.xpose.msra.mxu0 0.0
    %2177 = vmatprep.subr.mxu0 0.0
    %2178 = vmatpush1.xpose.msra.mxu0 0.0
    %2179 = vmatprep.subr.mxu0 0.0
    %2180 = vmatpush1.xpose.msra.mxu0 0.0
    %2181 = vmatprep.subr.mxu0 0.0
    %2182 = vmatpush1.xpose.msra.mxu0 0.0
    %2183 = vmatprep.subr.mxu0 0.0
    %2184 = vmatpush1.xpose.msra.mxu0 0.0
    %2185 = vmatprep.subr.mxu0 0.0
    %2186 = vmatpush1.xpose.msra.mxu0 0.0
    %2187 = vmatprep.subr.mxu0 0.0
    %2188 = vmatpush1.xpose.msra.mxu0 0.0
    %2189 = vmatprep.subr.mxu0 0.0
    %2190 = vmatpush1.xpose.msra.mxu0 0.0
    %2191 = vmatprep.subr.mxu0 0.0
    %2192 = vmatpush1.xpose.msra.mxu0 0.0
    %2193 = vmatprep.subr.mxu0 0.0
    %2194 = vmatpush1.xpose.msra.mxu0 0.0
    %2195 = vmatprep.subr.mxu0 0.0
    %2196 = vmatpush1.xpose.msra.mxu0 0.0
    %2197 = vmatprep.subr.mxu0 0.0
    %2198 = vmatpush1.xpose.msra.mxu0 0.0
    %2199 = vmatprep.mubr.f32.mxu0 0.0
    %2200 = vmatmul.mubr.f32.gmra.mrb[0].mxu0 %v2129
    %v2201 = vpop.f32.mrb[0].mxu0
    %v2202 = vadd.f32 0.0, %v2201
    %v2203 = vpop.f32.mrb[0].mxu0
    %2204 = vdwg.mxu0
    %2205 = vrot.lane.b32.xlu0 %v1703, 120
    %v2206 = vpop.permute.xlu0 %2205
    %2207 = vrot.lane.b32.xlu0 %v1769, 120
    %v2208 = vpop.permute.xlu0 %2207
    %2209 = vrot.lane.b32.xlu0 %v1772, 120
    %v2210 = vpop.permute.xlu0 %2209
    %v2211 = vsel %vm189, %v2206, 0
    %v2213 = vsel %vm189, %v2208, 0
    %v2215 = vsel %vm189, %v2210, 0
    %2217 = vmatprep.subr.mxu0 0.0
    %2218 = vmatpush1.xpose.msra.mxu0 %v2213
    %2219 = vmatprep.subr.mxu0 0.0
    %2220 = vmatpush1.xpose.msra.mxu0 %v2215
    %2221 = vmatprep.subr.mxu0 0.0
    %2222 = vmatpush1.xpose.msra.mxu0 0.0
    %2223 = vmatprep.subr.mxu0 0.0
    %2224 = vmatpush1.xpose.msra.mxu0 0.0
    %2225 = vmatprep.subr.mxu0 0.0
    %2226 = vmatpush1.xpose.msra.mxu0 0.0
    %2227 = vmatprep.subr.mxu0 0.0
    %2228 = vmatpush1.xpose.msra.mxu0 0.0
    %2229 = vmatprep.subr.mxu0 0.0
    %2230 = vmatpush1.xpose.msra.mxu0 0.0
    %2231 = vmatprep.subr.mxu0 0.0
    %2232 = vmatpush1.xpose.msra.mxu0 0.0
    %2233 = vmatprep.subr.mxu0 0.0
    %2234 = vmatpush1.xpose.msra.mxu0 0.0
    %2235 = vmatprep.subr.mxu0 0.0
    %2236 = vmatpush1.xpose.msra.mxu0 0.0
    %2237 = vmatprep.subr.mxu0 0.0
    %2238 = vmatpush1.xpose.msra.mxu0 0.0
    %2239 = vmatprep.subr.mxu0 0.0
    %2240 = vmatpush1.xpose.msra.mxu0 0.0
    %2241 = vmatprep.subr.mxu0 0.0
    %2242 = vmatpush1.xpose.msra.mxu0 0.0
    %2243 = vmatprep.subr.mxu0 0.0
    %2244 = vmatpush1.xpose.msra.mxu0 0.0
    %2245 = vmatprep.subr.mxu0 0.0
    %2246 = vmatpush1.xpose.msra.mxu0 0.0
    %2247 = vmatprep.subr.mxu0 0.0
    %2248 = vmatpush1.xpose.msra.mxu0 0.0
    %2249 = vmatprep.subr.mxu0 0.0
    %2250 = vmatpush1.xpose.msra.mxu0 0.0
    %2251 = vmatprep.subr.mxu0 0.0
    %2252 = vmatpush1.xpose.msra.mxu0 0.0
    %2253 = vmatprep.subr.mxu0 0.0
    %2254 = vmatpush1.xpose.msra.mxu0 0.0
    %2255 = vmatprep.subr.mxu0 0.0
    %2256 = vmatpush1.xpose.msra.mxu0 0.0
    %2257 = vmatprep.subr.mxu0 0.0
    %2258 = vmatpush1.xpose.msra.mxu0 0.0
    %2259 = vmatprep.subr.mxu0 0.0
    %2260 = vmatpush1.xpose.msra.mxu0 0.0
    %2261 = vmatprep.subr.mxu0 0.0
    %2262 = vmatpush1.xpose.msra.mxu0 0.0
    %2263 = vmatprep.subr.mxu0 0.0
    %2264 = vmatpush1.xpose.msra.mxu0 0.0
    %2265 = vmatprep.subr.mxu0 0.0
    %2266 = vmatpush1.xpose.msra.mxu0 0.0
    %2267 = vmatprep.subr.mxu0 0.0
    %2268 = vmatpush1.xpose.msra.mxu0 0.0
    %2269 = vmatprep.subr.mxu0 0.0
    %2270 = vmatpush1.xpose.msra.mxu0 0.0
    %2271 = vmatprep.subr.mxu0 0.0
    %2272 = vmatpush1.xpose.msra.mxu0 0.0
    %2273 = vmatprep.subr.mxu0 0.0
    %2274 = vmatpush1.xpose.msra.mxu0 0.0
    %2275 = vmatprep.subr.mxu0 0.0
    %2276 = vmatpush1.xpose.msra.mxu0 0.0
    %2277 = vmatprep.subr.mxu0 0.0
    %2278 = vmatpush1.xpose.msra.mxu0 0.0
    %2279 = vmatprep.subr.mxu0 0.0
    %2280 = vmatpush1.xpose.msra.mxu0 0.0
    %2281 = vmatprep.mubr.f32.mxu0 0.0
    %2282 = vmatmul.mubr.f32.gmra.mrb[0].mxu0 %v2211
    %v2283 = vpop.f32.mrb[0].mxu0
    %v2284 = vadd.f32 0.0, %v2283
    %v2285 = vpop.f32.mrb[0].mxu0
    %2286 = vdwg.mxu0
    %v2287 = vmul.f32 %v2202, 0.35355338
    %v2288 = vmul.f32 %v2284, 0.35355338
    %v2289 = vadd.f32 %v2287, %v1779
    %v2290 = vadd.f32 %v2288, %v1780
    %v2291 = vsel %vm1547, %v2289, -inf
    %2292 = vmax.xlane.f32.xlu0 %v2291
    %v2293 = vpop.xlane.xlu0 %2292
    %v2294 = vsel %vm1547, %v2290, -inf
    %2295 = vmax.xlane.f32.xlu0 %v2294
    %v2296 = vpop.xlane.xlu0 %2295
    %v2297 = vsub.f32 %v2289, %v2293
    %v2298 = vsub.f32 %v2290, %v2296
    %v2299 = vmul.f32 %v2297, 1.442695
    %v2300 = vpow.pop %v2299
    %v2301 = vmul.f32 %v2298, 1.442695
    %v2302 = vpow.pop %v2301
    %v2303 = vsel %vm1547, %v2300, 0.0
    %2304 = vadd.xlane.f32.xlu0 %v2303
    %v2305 = vpop.xlane.xlu0 %2304
    %v2306 = vsel %vm1547, %v2302, 0.0
    %2307 = vadd.xlane.f32.xlu0 %v2306
    %v2308 = vpop.xlane.xlu0 %2307
    %v2309 = vrcp.pop %v2305
    %v2310 = vrcp.pop %v2308
    %v2311 = vmul.f32 %v2300, %v2309
    %v2312 = vmul.f32 %v2302, %v2310
    %2313 = vrot.lane.b32.xlu0 %v1761, 88
    %v2314 = vpop.permute.xlu0 %2313
    %2315 = vrot.lane.b32.xlu0 %v1764, 88
    %v2316 = vpop.permute.xlu0 %2315
    %v2320 = vsel %vm1547, %v2311, 0
    %2322 = vmatprep.subr.mxu0 0.0
    %2323 = vmatpush1.msra.mxu0 %v2314
    %2324 = vmatprep.subr.mxu0 0.0
    %2325 = vmatpush1.msra.mxu0 %v2316
    %2326 = vmatprep.subr.mxu0 0.0
    %2327 = vmatpush1.msra.mxu0 0.0
    %2328 = vmatprep.subr.mxu0 0.0
    %2329 = vmatpush1.msra.mxu0 0.0
    %2330 = vmatprep.subr.mxu0 0.0
    %2331 = vmatpush1.msra.mxu0 0.0
    %2332 = vmatprep.subr.mxu0 0.0
    %2333 = vmatpush1.msra.mxu0 0.0
    %2334 = vmatprep.subr.mxu0 0.0
    %2335 = vmatpush1.msra.mxu0 0.0
    %2336 = vmatprep.subr.mxu0 0.0
    %2337 = vmatpush1.msra.mxu0 0.0
    %2338 = vmatprep.subr.mxu0 0.0
    %2339 = vmatpush1.msra.mxu0 0.0
    %2340 = vmatprep.subr.mxu0 0.0
    %2341 = vmatpush1.msra.mxu0 0.0
    %2342 = vmatprep.subr.mxu0 0.0
    %2343 = vmatpush1.msra.mxu0 0.0
    %2344 = vmatprep.subr.mxu0 0.0
    %2345 = vmatpush1.msra.mxu0 0.0
    %2346 = vmatprep.subr.mxu0 0.0
    %2347 = vmatpush1.msra.mxu0 0.0
    %2348 = vmatprep.subr.mxu0 0.0
    %2349 = vmatpush1.msra.mxu0 0.0
    %2350 = vmatprep.subr.mxu0 0.0
    %2351 = vmatpush1.msra.mxu0 0.0
    %2352 = vmatprep.subr.mxu0 0.0
    %2353 = vmatpush1.msra.mxu0 0.0
    %2354 = vmatprep.subr.mxu0 0.0
    %2355 = vmatpush1.msra.mxu0 0.0
    %2356 = vmatprep.subr.mxu0 0.0
    %2357 = vmatpush1.msra.mxu0 0.0
    %2358 = vmatprep.subr.mxu0 0.0
    %2359 = vmatpush1.msra.mxu0 0.0
    %2360 = vmatprep.subr.mxu0 0.0
    %2361 = vmatpush1.msra.mxu0 0.0
    %2362 = vmatprep.subr.mxu0 0.0
    %2363 = vmatpush1.msra.mxu0 0.0
    %2364 = vmatprep.subr.mxu0 0.0
    %2365 = vmatpush1.msra.mxu0 0.0
    %2366 = vmatprep.subr.mxu0 0.0
    %2367 = vmatpush1.msra.mxu0 0.0
    %2368 = vmatprep.subr.mxu0 0.0
    %2369 = vmatpush1.msra.mxu0 0.0
    %2370 = vmatprep.subr.mxu0 0.0
    %2371 = vmatpush1.msra.mxu0 0.0
    %2372 = vmatprep.subr.mxu0 0.0
    %2373 = vmatpush1.msra.mxu0 0.0
    %2374 = vmatprep.subr.mxu0 0.0
    %2375 = vmatpush1.msra.mxu0 0.0
    %2376 = vmatprep.subr.mxu0 0.0
    %2377 = vmatpush1.msra.mxu0 0.0
    %2378 = vmatprep.subr.mxu0 0.0
    %2379 = vmatpush1.msra.mxu0 0.0
    %2380 = vmatprep.subr.mxu0 0.0
    %2381 = vmatpush1.msra.mxu0 0.0
    %2382 = vmatprep.subr.mxu0 0.0
    %2383 = vmatpush1.msra.mxu0 0.0
    %2384 = vmatprep.subr.mxu0 0.0
    %2385 = vmatpush1.msra.mxu0 0.0
    %2386 = vmatprep.mubr.f32.mxu0 0.0
    %2387 = vmatmul.mubr.f32.gmra.mrb[0].mxu0 %v2320
    %v2388 = vpop.f32.mrb[0].mxu0
    %v2389 = vadd.f32 0.0, %v2388
    %v2390 = vpop.f32.mrb[0].mxu0
    %2391 = vdwg.mxu0
    %2392 = vrot.lane.b32.xlu0 %v1769, 88
    %v2393 = vpop.permute.xlu0 %2392
    %2394 = vrot.lane.b32.xlu0 %v1772, 88
    %v2395 = vpop.permute.xlu0 %2394
    %v2399 = vsel %vm1547, %v2312, 0
    %2401 = vmatprep.subr.mxu0 0.0
    %2402 = vmatpush1.msra.mxu0 %v2393
    %2403 = vmatprep.subr.mxu0 0.0
    %2404 = vmatpush1.msra.mxu0 %v2395
    %2405 = vmatprep.subr.mxu0 0.0
    %2406 = vmatpush1.msra.mxu0 0.0
    %2407 = vmatprep.subr.mxu0 0.0
    %2408 = vmatpush1.msra.mxu0 0.0
    %2409 = vmatprep.subr.mxu0 0.0
    %2410 = vmatpush1.msra.mxu0 0.0
    %2411 = vmatprep.subr.mxu0 0.0
    %2412 = vmatpush1.msra.mxu0 0.0
    %2413 = vmatprep.subr.mxu0 0.0
    %2414 = vmatpush1.msra.mxu0 0.0
    %2415 = vmatprep.subr.mxu0 0.0
    %2416 = vmatpush1.msra.mxu0 0.0
    %2417 = vmatprep.subr.mxu0 0.0
    %2418 = vmatpush1.msra.mxu0 0.0
    %2419 = vmatprep.subr.mxu0 0.0
    %2420 = vmatpush1.msra.mxu0 0.0
    %2421 = vmatprep.subr.mxu0 0.0
    %2422 = vmatpush1.msra.mxu0 0.0
    %2423 = vmatprep.subr.mxu0 0.0
    %2424 = vmatpush1.msra.mxu0 0.0
    %2425 = vmatprep.subr.mxu0 0.0
    %2426 = vmatpush1.msra.mxu0 0.0
    %2427 = vmatprep.subr.mxu0 0.0
    %2428 = vmatpush1.msra.mxu0 0.0
    %2429 = vmatprep.subr.mxu0 0.0
    %2430 = vmatpush1.msra.mxu0 0.0
    %2431 = vmatprep.subr.mxu0 0.0
    %2432 = vmatpush1.msra.mxu0 0.0
    %2433 = vmatprep.subr.mxu0 0.0
    %2434 = vmatpush1.msra.mxu0 0.0
    %2435 = vmatprep.subr.mxu0 0.0
    %2436 = vmatpush1.msra.mxu0 0.0
    %2437 = vmatprep.subr.mxu0 0.0
    %2438 = vmatpush1.msra.mxu0 0.0
    %2439 = vmatprep.subr.mxu0 0.0
    %2440 = vmatpush1.msra.mxu0 0.0
    %2441 = vmatprep.subr.mxu0 0.0
    %2442 = vmatpush1.msra.mxu0 0.0
    %2443 = vmatprep.subr.mxu0 0.0
    %2444 = vmatpush1.msra.mxu0 0.0
    %2445 = vmatprep.subr.mxu0 0.0
    %2446 = vmatpush1.msra.mxu0 0.0
    %2447 = vmatprep.subr.mxu0 0.0
    %2448 = vmatpush1.msra.mxu0 0.0
    %2449 = vmatprep.subr.mxu0 0.0
    %2450 = vmatpush1.msra.mxu0 0.0
    %2451 = vmatprep.subr.mxu0 0.0
    %2452 = vmatpush1.msra.mxu0 0.0
    %2453 = vmatprep.subr.mxu0 0.0
    %2454 = vmatpush1.msra.mxu0 0.0
    %2455 = vmatprep.subr.mxu0 0.0
    %2456 = vmatpush1.msra.mxu0 0.0
    %2457 = vmatprep.subr.mxu0 0.0
    %2458 = vmatpush1.msra.mxu0 0.0
    %2459 = vmatprep.subr.mxu0 0.0
    %2460 = vmatpush1.msra.mxu0 0.0
    %2461 = vmatprep.subr.mxu0 0.0
    %2462 = vmatpush1.msra.mxu0 0.0
    %2463 = vmatprep.subr.mxu0 0.0
    %2464 = vmatpush1.msra.mxu0 0.0
    %2465 = vmatprep.mubr.f32.mxu0 0.0
    %2466 = vmatmul.mubr.f32.gmra.mrb[0].mxu0 %v2399
    %v2467 = vpop.f32.mrb[0].mxu0
    %v2468 = vadd.f32 0.0, %v2467
    %v2469 = vpop.f32.mrb[0].mxu0
    %2470 = vdwg.mxu0
    %2471 = vrot.lane.b32.xlu0 %v1700, 112
    %v2472 = vpop.permute.xlu0 %2471
    %2473 = vrot.lane.b32.xlu0 %v1761, 112
    %v2474 = vpop.permute.xlu0 %2473
    %2475 = vrot.lane.b32.xlu0 %v1764, 112
    %v2476 = vpop.permute.xlu0 %2475
    %v2477 = vsel %vm189, %v2472, 0
    %v2479 = vsel %vm189, %v2474, 0
    %v2481 = vsel %vm189, %v2476, 0
    %2483 = vmatprep.subr.mxu0 0.0
    %2484 = vmatpush1.xpose.msra.mxu0 %v2479
    %2485 = vmatprep.subr.mxu0 0.0
    %2486 = vmatpush1.xpose.msra.mxu0 %v2481
    %2487 = vmatprep.subr.mxu0 0.0
    %2488 = vmatpush1.xpose.msra.mxu0 0.0
    %2489 = vmatprep.subr.mxu0 0.0
    %2490 = vmatpush1.xpose.msra.mxu0 0.0
    %2491 = vmatprep.subr.mxu0 0.0
    %2492 = vmatpush1.xpose.msra.mxu0 0.0
    %2493 = vmatprep.subr.mxu0 0.0
    %2494 = vmatpush1.xpose.msra.mxu0 0.0
    %2495 = vmatprep.subr.mxu0 0.0
    %2496 = vmatpush1.xpose.msra.mxu0 0.0
    %2497 = vmatprep.subr.mxu0 0.0
    %2498 = vmatpush1.xpose.msra.mxu0 0.0
    %2499 = vmatprep.subr.mxu0 0.0
    %2500 = vmatpush1.xpose.msra.mxu0 0.0
    %2501 = vmatprep.subr.mxu0 0.0
    %2502 = vmatpush1.xpose.msra.mxu0 0.0
    %2503 = vmatprep.subr.mxu0 0.0
    %2504 = vmatpush1.xpose.msra.mxu0 0.0
    %2505 = vmatprep.subr.mxu0 0.0
    %2506 = vmatpush1.xpose.msra.mxu0 0.0
    %2507 = vmatprep.subr.mxu0 0.0
    %2508 = vmatpush1.xpose.msra.mxu0 0.0
    %2509 = vmatprep.subr.mxu0 0.0
    %2510 = vmatpush1.xpose.msra.mxu0 0.0
    %2511 = vmatprep.subr.mxu0 0.0
    %2512 = vmatpush1.xpose.msra.mxu0 0.0
    %2513 = vmatprep.subr.mxu0 0.0
    %2514 = vmatpush1.xpose.msra.mxu0 0.0
    %2515 = vmatprep.subr.mxu0 0.0
    %2516 = vmatpush1.xpose.msra.mxu0 0.0
    %2517 = vmatprep.subr.mxu0 0.0
    %2518 = vmatpush1.xpose.msra.mxu0 0.0
    %2519 = vmatprep.subr.mxu0 0.0
    %2520 = vmatpush1.xpose.msra.mxu0 0.0
    %2521 = vmatprep.subr.mxu0 0.0
    %2522 = vmatpush1.xpose.msra.mxu0 0.0
    %2523 = vmatprep.subr.mxu0 0.0
    %2524 = vmatpush1.xpose.msra.mxu0 0.0
    %2525 = vmatprep.subr.mxu0 0.0
    %2526 = vmatpush1.xpose.msra.mxu0 0.0
    %2527 = vmatprep.subr.mxu0 0.0
    %2528 = vmatpush1.xpose.msra.mxu0 0.0
    %2529 = vmatprep.subr.mxu0 0.0
    %2530 = vmatpush1.xpose.msra.mxu0 0.0
    %2531 = vmatprep.subr.mxu0 0.0
    %2532 = vmatpush1.xpose.msra.mxu0 0.0
    %2533 = vmatprep.subr.mxu0 0.0
    %2534 = vmatpush1.xpose.msra.mxu0 0.0
    %2535 = vmatprep.subr.mxu0 0.0
    %2536 = vmatpush1.xpose.msra.mxu0 0.0
    %2537 = vmatprep.subr.mxu0 0.0
    %2538 = vmatpush1.xpose.msra.mxu0 0.0
    %2539 = vmatprep.subr.mxu0 0.0
    %2540 = vmatpush1.xpose.msra.mxu0 0.0
    %2541 = vmatprep.subr.mxu0 0.0
    %2542 = vmatpush1.xpose.msra.mxu0 0.0
    %2543 = vmatprep.subr.mxu0 0.0
    %2544 = vmatpush1.xpose.msra.mxu0 0.0
    %2545 = vmatprep.subr.mxu0 0.0
    %2546 = vmatpush1.xpose.msra.mxu0 0.0
    %2547 = vmatprep.mubr.f32.mxu0 0.0
    %2548 = vmatmul.mubr.f32.gmra.mrb[0].mxu0 %v2477
    %v2549 = vpop.f32.mrb[0].mxu0
    %v2550 = vadd.f32 0.0, %v2549
    %v2551 = vpop.f32.mrb[0].mxu0
    %2552 = vdwg.mxu0
    %2553 = vrot.lane.b32.xlu0 %v1703, 112
    %v2554 = vpop.permute.xlu0 %2553
    %2555 = vrot.lane.b32.xlu0 %v1769, 112
    %v2556 = vpop.permute.xlu0 %2555
    %2557 = vrot.lane.b32.xlu0 %v1772, 112
    %v2558 = vpop.permute.xlu0 %2557
    %v2559 = vsel %vm189, %v2554, 0
    %v2561 = vsel %vm189, %v2556, 0
    %v2563 = vsel %vm189, %v2558, 0
    %2565 = vmatprep.subr.mxu0 0.0
    %2566 = vmatpush1.xpose.msra.mxu0 %v2561
    %2567 = vmatprep.subr.mxu0 0.0
    %2568 = vmatpush1.xpose.msra.mxu0 %v2563
    %2569 = vmatprep.subr.mxu0 0.0
    %2570 = vmatpush1.xpose.msra.mxu0 0.0
    %2571 = vmatprep.subr.mxu0 0.0
    %2572 = vmatpush1.xpose.msra.mxu0 0.0
    %2573 = vmatprep.subr.mxu0 0.0
    %2574 = vmatpush1.xpose.msra.mxu0 0.0
    %2575 = vmatprep.subr.mxu0 0.0
    %2576 = vmatpush1.xpose.msra.mxu0 0.0
    %2577 = vmatprep.subr.mxu0 0.0
    %2578 = vmatpush1.xpose.msra.mxu0 0.0
    %2579 = vmatprep.subr.mxu0 0.0
    %2580 = vmatpush1.xpose.msra.mxu0 0.0
    %2581 = vmatprep.subr.mxu0 0.0
    %2582 = vmatpush1.xpose.msra.mxu0 0.0
    %2583 = vmatprep.subr.mxu0 0.0
    %2584 = vmatpush1.xpose.msra.mxu0 0.0
    %2585 = vmatprep.subr.mxu0 0.0
    %2586 = vmatpush1.xpose.msra.mxu0 0.0
    %2587 = vmatprep.subr.mxu0 0.0
    %2588 = vmatpush1.xpose.msra.mxu0 0.0
    %2589 = vmatprep.subr.mxu0 0.0
    %2590 = vmatpush1.xpose.msra.mxu0 0.0
    %2591 = vmatprep.subr.mxu0 0.0
    %2592 = vmatpush1.xpose.msra.mxu0 0.0
    %2593 = vmatprep.subr.mxu0 0.0
    %2594 = vmatpush1.xpose.msra.mxu0 0.0
    %2595 = vmatprep.subr.mxu0 0.0
    %2596 = vmatpush1.xpose.msra.mxu0 0.0
    %2597 = vmatprep.subr.mxu0 0.0
    %2598 = vmatpush1.xpose.msra.mxu0 0.0
    %2599 = vmatprep.subr.mxu0 0.0
    %2600 = vmatpush1.xpose.msra.mxu0 0.0
    %2601 = vmatprep.subr.mxu0 0.0
    %2602 = vmatpush1.xpose.msra.mxu0 0.0
    %2603 = vmatprep.subr.mxu0 0.0
    %2604 = vmatpush1.xpose.msra.mxu0 0.0
    %2605 = vmatprep.subr.mxu0 0.0
    %2606 = vmatpush1.xpose.msra.mxu0 0.0
    %2607 = vmatprep.subr.mxu0 0.0
    %2608 = vmatpush1.xpose.msra.mxu0 0.0
    %2609 = vmatprep.subr.mxu0 0.0
    %2610 = vmatpush1.xpose.msra.mxu0 0.0
    %2611 = vmatprep.subr.mxu0 0.0
    %2612 = vmatpush1.xpose.msra.mxu0 0.0
    %2613 = vmatprep.subr.mxu0 0.0
    %2614 = vmatpush1.xpose.msra.mxu0 0.0
    %2615 = vmatprep.subr.mxu0 0.0
    %2616 = vmatpush1.xpose.msra.mxu0 0.0
    %2617 = vmatprep.subr.mxu0 0.0
    %2618 = vmatpush1.xpose.msra.mxu0 0.0
    %2619 = vmatprep.subr.mxu0 0.0
    %2620 = vmatpush1.xpose.msra.mxu0 0.0
    %2621 = vmatprep.subr.mxu0 0.0
    %2622 = vmatpush1.xpose.msra.mxu0 0.0
    %2623 = vmatprep.subr.mxu0 0.0
    %2624 = vmatpush1.xpose.msra.mxu0 0.0
    %2625 = vmatprep.subr.mxu0 0.0
    %2626 = vmatpush1.xpose.msra.mxu0 0.0
    %2627 = vmatprep.subr.mxu0 0.0
    %2628 = vmatpush1.xpose.msra.mxu0 0.0
    %2629 = vmatprep.mubr.f32.mxu0 0.0
    %2630 = vmatmul.mubr.f32.gmra.mrb[0].mxu0 %v2559
    %v2631 = vpop.f32.mrb[0].mxu0
    %v2632 = vadd.f32 0.0, %v2631
    %v2633 = vpop.f32.mrb[0].mxu0
    %2634 = vdwg.mxu0
    %v2635 = vmul.f32 %v2550, 0.35355338
    %v2636 = vmul.f32 %v2632, 0.35355338
    %v2637 = vadd.f32 %v2635, %v1779
    %v2638 = vadd.f32 %v2636, %v1780
    %v2639 = vsel %vm1547, %v2637, -inf
    %2640 = vmax.xlane.f32.xlu0 %v2639
    %v2641 = vpop.xlane.xlu0 %2640
    %v2642 = vsel %vm1547, %v2638, -inf
    %2643 = vmax.xlane.f32.xlu0 %v2642
    %v2644 = vpop.xlane.xlu0 %2643
    %v2645 = vsub.f32 %v2637, %v2641
    %v2646 = vsub.f32 %v2638, %v2644
    %v2647 = vmul.f32 %v2645, 1.442695
    %v2648 = vpow.pop %v2647
    %v2649 = vmul.f32 %v2646, 1.442695
    %v2650 = vpow.pop %v2649
    %v2651 = vsel %vm1547, %v2648, 0.0
    %2652 = vadd.xlane.f32.xlu0 %v2651
    %v2653 = vpop.xlane.xlu0 %2652
    %v2654 = vsel %vm1547, %v2650, 0.0
    %2655 = vadd.xlane.f32.xlu0 %v2654
    %v2656 = vpop.xlane.xlu0 %2655
    %v2657 = vrcp.pop %v2653
    %v2658 = vrcp.pop %v2656
    %v2659 = vmul.f32 %v2648, %v2657
    %v2660 = vmul.f32 %v2650, %v2658
    %2661 = vrot.lane.b32.xlu0 %v1761, 80
    %v2662 = vpop.permute.xlu0 %2661
    %2663 = vrot.lane.b32.xlu0 %v1764, 80
    %v2664 = vpop.permute.xlu0 %2663
    %v2668 = vsel %vm1547, %v2659, 0
    %2670 = vmatprep.subr.mxu0 0.0
    %2671 = vmatpush1.msra.mxu0 %v2662
    %2672 = vmatprep.subr.mxu0 0.0
    %2673 = vmatpush1.msra.mxu0 %v2664
    %2674 = vmatprep.subr.mxu0 0.0
    %2675 = vmatpush1.msra.mxu0 0.0
    %2676 = vmatprep.subr.mxu0 0.0
    %2677 = vmatpush1.msra.mxu0 0.0
    %2678 = vmatprep.subr.mxu0 0.0
    %2679 = vmatpush1.msra.mxu0 0.0
    %2680 = vmatprep.subr.mxu0 0.0
    %2681 = vmatpush1.msra.mxu0 0.0
    %2682 = vmatprep.subr.mxu0 0.0
    %2683 = vmatpush1.msra.mxu0 0.0
    %2684 = vmatprep.subr.mxu0 0.0
    %2685 = vmatpush1.msra.mxu0 0.0
    %2686 = vmatprep.subr.mxu0 0.0
    %2687 = vmatpush1.msra.mxu0 0.0
    %2688 = vmatprep.subr.mxu0 0.0
    %2689 = vmatpush1.msra.mxu0 0.0
    %2690 = vmatprep.subr.mxu0 0.0
    %2691 = vmatpush1.msra.mxu0 0.0
    %2692 = vmatprep.subr.mxu0 0.0
    %2693 = vmatpush1.msra.mxu0 0.0
    %2694 = vmatprep.subr.mxu0 0.0
    %2695 = vmatpush1.msra.mxu0 0.0
    %2696 = vmatprep.subr.mxu0 0.0
    %2697 = vmatpush1.msra.mxu0 0.0
    %2698 = vmatprep.subr.mxu0 0.0
    %2699 = vmatpush1.msra.mxu0 0.0
    %2700 = vmatprep.subr.mxu0 0.0
    %2701 = vmatpush1.msra.mxu0 0.0
    %2702 = vmatprep.subr.mxu0 0.0
    %2703 = vmatpush1.msra.mxu0 0.0
    %2704 = vmatprep.subr.mxu0 0.0
    %2705 = vmatpush1.msra.mxu0 0.0
    %2706 = vmatprep.subr.mxu0 0.0
    %2707 = vmatpush1.msra.mxu0 0.0
    %2708 = vmatprep.subr.mxu0 0.0
    %2709 = vmatpush1.msra.mxu0 0.0
    %2710 = vmatprep.subr.mxu0 0.0
    %2711 = vmatpush1.msra.mxu0 0.0
    %2712 = vmatprep.subr.mxu0 0.0
    %2713 = vmatpush1.msra.mxu0 0.0
    %2714 = vmatprep.subr.mxu0 0.0
    %2715 = vmatpush1.msra.mxu0 0.0
    %2716 = vmatprep.subr.mxu0 0.0
    %2717 = vmatpush1.msra.mxu0 0.0
    %2718 = vmatprep.subr.mxu0 0.0
    %2719 = vmatpush1.msra.mxu0 0.0
    %2720 = vmatprep.subr.mxu0 0.0
    %2721 = vmatpush1.msra.mxu0 0.0
    %2722 = vmatprep.subr.mxu0 0.0
    %2723 = vmatpush1.msra.mxu0 0.0
    %2724 = vmatprep.subr.mxu0 0.0
    %2725 = vmatpush1.msra.mxu0 0.0
    %2726 = vmatprep.subr.mxu0 0.0
    %2727 = vmatpush1.msra.mxu0 0.0
    %2728 = vmatprep.subr.mxu0 0.0
    %2729 = vmatpush1.msra.mxu0 0.0
    %2730 = vmatprep.subr.mxu0 0.0
    %2731 = vmatpush1.msra.mxu0 0.0
    %2732 = vmatprep.subr.mxu0 0.0
    %2733 = vmatpush1.msra.mxu0 0.0
    %2734 = vmatprep.mubr.f32.mxu0 0.0
    %2735 = vmatmul.mubr.f32.gmra.mrb[0].mxu0 %v2668
    %v2736 = vpop.f32.mrb[0].mxu0
    %v2737 = vadd.f32 0.0, %v2736
    %v2738 = vpop.f32.mrb[0].mxu0
    %2739 = vdwg.mxu0
    %2740 = vrot.lane.b32.xlu0 %v1769, 80
    %v2741 = vpop.permute.xlu0 %2740
    %2742 = vrot.lane.b32.xlu0 %v1772, 80
    %v2743 = vpop.permute.xlu0 %2742
    %v2747 = vsel %vm1547, %v2660, 0
    %2749 = vmatprep.subr.mxu0 0.0
    %2750 = vmatpush1.msra.mxu0 %v2741
    %2751 = vmatprep.subr.mxu0 0.0
    %2752 = vmatpush1.msra.mxu0 %v2743
    %2753 = vmatprep.subr.mxu0 0.0
    %2754 = vmatpush1.msra.mxu0 0.0
    %2755 = vmatprep.subr.mxu0 0.0
    %2756 = vmatpush1.msra.mxu0 0.0
    %2757 = vmatprep.subr.mxu0 0.0
    %2758 = vmatpush1.msra.mxu0 0.0
    %2759 = vmatprep.subr.mxu0 0.0
    %2760 = vmatpush1.msra.mxu0 0.0
    %2761 = vmatprep.subr.mxu0 0.0
    %2762 = vmatpush1.msra.mxu0 0.0
    %2763 = vmatprep.subr.mxu0 0.0
    %2764 = vmatpush1.msra.mxu0 0.0
    %2765 = vmatprep.subr.mxu0 0.0
    %2766 = vmatpush1.msra.mxu0 0.0
    %2767 = vmatprep.subr.mxu0 0.0
    %2768 = vmatpush1.msra.mxu0 0.0
    %2769 = vmatprep.subr.mxu0 0.0
    %2770 = vmatpush1.msra.mxu0 0.0
    %2771 = vmatprep.subr.mxu0 0.0
    %2772 = vmatpush1.msra.mxu0 0.0
    %2773 = vmatprep.subr.mxu0 0.0
    %2774 = vmatpush1.msra.mxu0 0.0
    %2775 = vmatprep.subr.mxu0 0.0
    %2776 = vmatpush1.msra.mxu0 0.0
    %2777 = vmatprep.subr.mxu0 0.0
    %2778 = vmatpush1.msra.mxu0 0.0
    %2779 = vmatprep.subr.mxu0 0.0
    %2780 = vmatpush1.msra.mxu0 0.0
    %2781 = vmatprep.subr.mxu0 0.0
    %2782 = vmatpush1.msra.mxu0 0.0
    %2783 = vmatprep.subr.mxu0 0.0
    %2784 = vmatpush1.msra.mxu0 0.0
    %2785 = vmatprep.subr.mxu0 0.0
    %2786 = vmatpush1.msra.mxu0 0.0
    %2787 = vmatprep.subr.mxu0 0.0
    %2788 = vmatpush1.msra.mxu0 0.0
    %2789 = vmatprep.subr.mxu0 0.0
    %2790 = vmatpush1.msra.mxu0 0.0
    %2791 = vmatprep.subr.mxu0 0.0
    %2792 = vmatpush1.msra.mxu0 0.0
    %2793 = vmatprep.subr.mxu0 0.0
    %2794 = vmatpush1.msra.mxu0 0.0
    %2795 = vmatprep.subr.mxu0 0.0
    %2796 = vmatpush1.msra.mxu0 0.0
    %2797 = vmatprep.subr.mxu0 0.0
    %2798 = vmatpush1.msra.mxu0 0.0
    %2799 = vmatprep.subr.mxu0 0.0
    %2800 = vmatpush1.msra.mxu0 0.0
    %2801 = vmatprep.subr.mxu0 0.0
    %2802 = vmatpush1.msra.mxu0 0.0
    %2803 = vmatprep.subr.mxu0 0.0
    %2804 = vmatpush1.msra.mxu0 0.0
    %2805 = vmatprep.subr.mxu0 0.0
    %2806 = vmatpush1.msra.mxu0 0.0
    %2807 = vmatprep.subr.mxu0 0.0
    %2808 = vmatpush1.msra.mxu0 0.0
    %2809 = vmatprep.subr.mxu0 0.0
    %2810 = vmatpush1.msra.mxu0 0.0
    %2811 = vmatprep.subr.mxu0 0.0
    %2812 = vmatpush1.msra.mxu0 0.0
    %2813 = vmatprep.mubr.f32.mxu0 0.0
    %2814 = vmatmul.mubr.f32.gmra.mrb[0].mxu0 %v2747
    %v2815 = vpop.f32.mrb[0].mxu0
    %v2816 = vadd.f32 0.0, %v2815
    %v2817 = vpop.f32.mrb[0].mxu0
    %2818 = vdwg.mxu0
    %2819 = vrot.lane.b32.xlu0 %v1700, 104
    %v2820 = vpop.permute.xlu0 %2819
    %2821 = vrot.lane.b32.xlu0 %v1761, 104
    %v2822 = vpop.permute.xlu0 %2821
    %2823 = vrot.lane.b32.xlu0 %v1764, 104
    %v2824 = vpop.permute.xlu0 %2823
    %v2825 = vsel %vm189, %v2820, 0
    %v2827 = vsel %vm189, %v2822, 0
    %v2829 = vsel %vm189, %v2824, 0
    %2831 = vmatprep.subr.mxu0 0.0
    %2832 = vmatpush1.xpose.msra.mxu0 %v2827
    %2833 = vmatprep.subr.mxu0 0.0
    %2834 = vmatpush1.xpose.msra.mxu0 %v2829
    %2835 = vmatprep.subr.mxu0 0.0
    %2836 = vmatpush1.xpose.msra.mxu0 0.0
    %2837 = vmatprep.subr.mxu0 0.0
    %2838 = vmatpush1.xpose.msra.mxu0 0.0
    %2839 = vmatprep.subr.mxu0 0.0
    %2840 = vmatpush1.xpose.msra.mxu0 0.0
    %2841 = vmatprep.subr.mxu0 0.0
    %2842 = vmatpush1.xpose.msra.mxu0 0.0
    %2843 = vmatprep.subr.mxu0 0.0
    %2844 = vmatpush1.xpose.msra.mxu0 0.0
    %2845 = vmatprep.subr.mxu0 0.0
    %2846 = vmatpush1.xpose.msra.mxu0 0.0
    %2847 = vmatprep.subr.mxu0 0.0
    %2848 = vmatpush1.xpose.msra.mxu0 0.0
    %2849 = vmatprep.subr.mxu0 0.0
    %2850 = vmatpush1.xpose.msra.mxu0 0.0
    %2851 = vmatprep.subr.mxu0 0.0
    %2852 = vmatpush1.xpose.msra.mxu0 0.0
    %2853 = vmatprep.subr.mxu0 0.0
    %2854 = vmatpush1.xpose.msra.mxu0 0.0
    %2855 = vmatprep.subr.mxu0 0.0
    %2856 = vmatpush1.xpose.msra.mxu0 0.0
    %2857 = vmatprep.subr.mxu0 0.0
    %2858 = vmatpush1.xpose.msra.mxu0 0.0
    %2859 = vmatprep.subr.mxu0 0.0
    %2860 = vmatpush1.xpose.msra.mxu0 0.0
    %2861 = vmatprep.subr.mxu0 0.0
    %2862 = vmatpush1.xpose.msra.mxu0 0.0
    %2863 = vmatprep.subr.mxu0 0.0
    %2864 = vmatpush1.xpose.msra.mxu0 0.0
    %2865 = vmatprep.subr.mxu0 0.0
    %2866 = vmatpush1.xpose.msra.mxu0 0.0
    %2867 = vmatprep.subr.mxu0 0.0
    %2868 = vmatpush1.xpose.msra.mxu0 0.0
    %2869 = vmatprep.subr.mxu0 0.0
    %2870 = vmatpush1.xpose.msra.mxu0 0.0
    %2871 = vmatprep.subr.mxu0 0.0
    %2872 = vmatpush1.xpose.msra.mxu0 0.0
    %2873 = vmatprep.subr.mxu0 0.0
    %2874 = vmatpush1.xpose.msra.mxu0 0.0
    %2875 = vmatprep.subr.mxu0 0.0
    %2876 = vmatpush1.xpose.msra.mxu0 0.0
    %2877 = vmatprep.subr.mxu0 0.0
    %2878 = vmatpush1.xpose.msra.mxu0 0.0
    %2879 = vmatprep.subr.mxu0 0.0
    %2880 = vmatpush1.xpose.msra.mxu0 0.0
    %2881 = vmatprep.subr.mxu0 0.0
    %2882 = vmatpush1.xpose.msra.mxu0 0.0
    %2883 = vmatprep.subr.mxu0 0.0
    %2884 = vmatpush1.xpose.msra.mxu0 0.0
    %2885 = vmatprep.subr.mxu0 0.0
    %2886 = vmatpush1.xpose.msra.mxu0 0.0
    %2887 = vmatprep.subr.mxu0 0.0
    %2888 = vmatpush1.xpose.msra.mxu0 0.0
    %2889 = vmatprep.subr.mxu0 0.0
    %2890 = vmatpush1.xpose.msra.mxu0 0.0
    %2891 = vmatprep.subr.mxu0 0.0
    %2892 = vmatpush1.xpose.msra.mxu0 0.0
    %2893 = vmatprep.subr.mxu0 0.0
    %2894 = vmatpush1.xpose.msra.mxu0 0.0
    %2895 = vmatprep.mubr.f32.mxu0 0.0
    %2896 = vmatmul.mubr.f32.gmra.mrb[0].mxu0 %v2825
    %v2897 = vpop.f32.mrb[0].mxu0
    %v2898 = vadd.f32 0.0, %v2897
    %v2899 = vpop.f32.mrb[0].mxu0
    %2900 = vdwg.mxu0
    %2901 = vrot.lane.b32.xlu0 %v1703, 104
    %v2902 = vpop.permute.xlu0 %2901
    %2903 = vrot.lane.b32.xlu0 %v1769, 104
    %v2904 = vpop.permute.xlu0 %2903
    %2905 = vrot.lane.b32.xlu0 %v1772, 104
    %v2906 = vpop.permute.xlu0 %2905
    %v2907 = vsel %vm189, %v2902, 0
    %v2909 = vsel %vm189, %v2904, 0
    %v2911 = vsel %vm189, %v2906, 0
    %2913 = vmatprep.subr.mxu0 0.0
    %2914 = vmatpush1.xpose.msra.mxu0 %v2909
    %2915 = vmatprep.subr.mxu0 0.0
    %2916 = vmatpush1.xpose.msra.mxu0 %v2911
    %2917 = vmatprep.subr.mxu0 0.0
    %2918 = vmatpush1.xpose.msra.mxu0 0.0
    %2919 = vmatprep.subr.mxu0 0.0
    %2920 = vmatpush1.xpose.msra.mxu0 0.0
    %2921 = vmatprep.subr.mxu0 0.0
    %2922 = vmatpush1.xpose.msra.mxu0 0.0
    %2923 = vmatprep.subr.mxu0 0.0
    %2924 = vmatpush1.xpose.msra.mxu0 0.0
    %2925 = vmatprep.subr.mxu0 0.0
    %2926 = vmatpush1.xpose.msra.mxu0 0.0
    %2927 = vmatprep.subr.mxu0 0.0
    %2928 = vmatpush1.xpose.msra.mxu0 0.0
    %2929 = vmatprep.subr.mxu0 0.0
    %2930 = vmatpush1.xpose.msra.mxu0 0.0
    %2931 = vmatprep.subr.mxu0 0.0
    %2932 = vmatpush1.xpose.msra.mxu0 0.0
    %2933 = vmatprep.subr.mxu0 0.0
    %2934 = vmatpush1.xpose.msra.mxu0 0.0
    %2935 = vmatprep.subr.mxu0 0.0
    %2936 = vmatpush1.xpose.msra.mxu0 0.0
    %2937 = vmatprep.subr.mxu0 0.0
    %2938 = vmatpush1.xpose.msra.mxu0 0.0
    %2939 = vmatprep.subr.mxu0 0.0
    %2940 = vmatpush1.xpose.msra.mxu0 0.0
    %2941 = vmatprep.subr.mxu0 0.0
    %2942 = vmatpush1.xpose.msra.mxu0 0.0
    %2943 = vmatprep.subr.mxu0 0.0
    %2944 = vmatpush1.xpose.msra.mxu0 0.0
    %2945 = vmatprep.subr.mxu0 0.0
    %2946 = vmatpush1.xpose.msra.mxu0 0.0
    %2947 = vmatprep.subr.mxu0 0.0
    %2948 = vmatpush1.xpose.msra.mxu0 0.0
    %2949 = vmatprep.subr.mxu0 0.0
    %2950 = vmatpush1.xpose.msra.mxu0 0.0
    %2951 = vmatprep.subr.mxu0 0.0
    %2952 = vmatpush1.xpose.msra.mxu0 0.0
    %2953 = vmatprep.subr.mxu0 0.0
    %2954 = vmatpush1.xpose.msra.mxu0 0.0
    %2955 = vmatprep.subr.mxu0 0.0
    %2956 = vmatpush1.xpose.msra.mxu0 0.0
    %2957 = vmatprep.subr.mxu0 0.0
    %2958 = vmatpush1.xpose.msra.mxu0 0.0
    %2959 = vmatprep.subr.mxu0 0.0
    %2960 = vmatpush1.xpose.msra.mxu0 0.0
    %2961 = vmatprep.subr.mxu0 0.0
    %2962 = vmatpush1.xpose.msra.mxu0 0.0
    %2963 = vmatprep.subr.mxu0 0.0
    %2964 = vmatpush1.xpose.msra.mxu0 0.0
    %2965 = vmatprep.subr.mxu0 0.0
    %2966 = vmatpush1.xpose.msra.mxu0 0.0
    %2967 = vmatprep.subr.mxu0 0.0
    %2968 = vmatpush1.xpose.msra.mxu0 0.0
    %2969 = vmatprep.subr.mxu0 0.0
    %2970 = vmatpush1.xpose.msra.mxu0 0.0
    %2971 = vmatprep.subr.mxu0 0.0
    %2972 = vmatpush1.xpose.msra.mxu0 0.0
    %2973 = vmatprep.subr.mxu0 0.0
    %2974 = vmatpush1.xpose.msra.mxu0 0.0
    %2975 = vmatprep.subr.mxu0 0.0
    %2976 = vmatpush1.xpose.msra.mxu0 0.0
    %2977 = vmatprep.mubr.f32.mxu0 0.0
    %2978 = vmatmul.mubr.f32.gmra.mrb[0].mxu0 %v2907
    %v2979 = vpop.f32.mrb[0].mxu0
    %v2980 = vadd.f32 0.0, %v2979
    %v2981 = vpop.f32.mrb[0].mxu0
    %2982 = vdwg.mxu0
    %v2983 = vmul.f32 %v2898, 0.35355338
    %v2984 = vmul.f32 %v2980, 0.35355338
    %v2985 = vadd.f32 %v2983, %v1779
    %v2986 = vadd.f32 %v2984, %v1780
    %v2987 = vsel %vm1547, %v2985, -inf
    %2988 = vmax.xlane.f32.xlu0 %v2987
    %v2989 = vpop.xlane.xlu0 %2988
    %v2990 = vsel %vm1547, %v2986, -inf
    %2991 = vmax.xlane.f32.xlu0 %v2990
    %v2992 = vpop.xlane.xlu0 %2991
    %v2993 = vsub.f32 %v2985, %v2989
    %v2994 = vsub.f32 %v2986, %v2992
    %v2995 = vmul.f32 %v2993, 1.442695
    %v2996 = vpow.pop %v2995
    %v2997 = vmul.f32 %v2994, 1.442695
    %v2998 = vpow.pop %v2997
    %v2999 = vsel %vm1547, %v2996, 0.0
    %3000 = vadd.xlane.f32.xlu0 %v2999
    %v3001 = vpop.xlane.xlu0 %3000
    %v3002 = vsel %vm1547, %v2998, 0.0
    %3003 = vadd.xlane.f32.xlu0 %v3002
    %v3004 = vpop.xlane.xlu0 %3003
    %v3005 = vrcp.pop %v3001
    %v3006 = vrcp.pop %v3004
    %v3007 = vmul.f32 %v2996, %v3005
    %v3008 = vmul.f32 %v2998, %v3006
    %3009 = vrot.lane.b32.xlu0 %v1761, 72
    %v3010 = vpop.permute.xlu0 %3009
    %3011 = vrot.lane.b32.xlu0 %v1764, 72
    %v3012 = vpop.permute.xlu0 %3011
    %v3016 = vsel %vm1547, %v3007, 0
    %3018 = vmatprep.subr.mxu0 0.0
    %3019 = vmatpush1.msra.mxu0 %v3010
    %3020 = vmatprep.subr.mxu0 0.0
    %3021 = vmatpush1.msra.mxu0 %v3012
    %3022 = vmatprep.subr.mxu0 0.0
    %3023 = vmatpush1.msra.mxu0 0.0
    %3024 = vmatprep.subr.mxu0 0.0
    %3025 = vmatpush1.msra.mxu0 0.0
    %3026 = vmatprep.subr.mxu0 0.0
    %3027 = vmatpush1.msra.mxu0 0.0
    %3028 = vmatprep.subr.mxu0 0.0
    %3029 = vmatpush1.msra.mxu0 0.0
    %3030 = vmatprep.subr.mxu0 0.0
    %3031 = vmatpush1.msra.mxu0 0.0
    %3032 = vmatprep.subr.mxu0 0.0
    %3033 = vmatpush1.msra.mxu0 0.0
    %3034 = vmatprep.subr.mxu0 0.0
    %3035 = vmatpush1.msra.mxu0 0.0
    %3036 = vmatprep.subr.mxu0 0.0
    %3037 = vmatpush1.msra.mxu0 0.0
    %3038 = vmatprep.subr.mxu0 0.0
    %3039 = vmatpush1.msra.mxu0 0.0
    %3040 = vmatprep.subr.mxu0 0.0
    %3041 = vmatpush1.msra.mxu0 0.0
    %3042 = vmatprep.subr.mxu0 0.0
    %3043 = vmatpush1.msra.mxu0 0.0
    %3044 = vmatprep.subr.mxu0 0.0
    %3045 = vmatpush1.msra.mxu0 0.0
    %3046 = vmatprep.subr.mxu0 0.0
    %3047 = vmatpush1.msra.mxu0 0.0
    %3048 = vmatprep.subr.mxu0 0.0
    %3049 = vmatpush1.msra.mxu0 0.0
    %3050 = vmatprep.subr.mxu0 0.0
    %3051 = vmatpush1.msra.mxu0 0.0
    %3052 = vmatprep.subr.mxu0 0.0
    %3053 = vmatpush1.msra.mxu0 0.0
    %3054 = vmatprep.subr.mxu0 0.0
    %3055 = vmatpush1.msra.mxu0 0.0
    %3056 = vmatprep.subr.mxu0 0.0
    %3057 = vmatpush1.msra.mxu0 0.0
    %3058 = vmatprep.subr.mxu0 0.0
    %3059 = vmatpush1.msra.mxu0 0.0
    %3060 = vmatprep.subr.mxu0 0.0
    %3061 = vmatpush1.msra.mxu0 0.0
    %3062 = vmatprep.subr.mxu0 0.0
    %3063 = vmatpush1.msra.mxu0 0.0
    %3064 = vmatprep.subr.mxu0 0.0
    %3065 = vmatpush1.msra.mxu0 0.0
    %3066 = vmatprep.subr.mxu0 0.0
    %3067 = vmatpush1.msra.mxu0 0.0
    %3068 = vmatprep.subr.mxu0 0.0
    %3069 = vmatpush1.msra.mxu0 0.0
    %3070 = vmatprep.subr.mxu0 0.0
    %3071 = vmatpush1.msra.mxu0 0.0
    %3072 = vmatprep.subr.mxu0 0.0
    %3073 = vmatpush1.msra.mxu0 0.0
    %3074 = vmatprep.subr.mxu0 0.0
    %3075 = vmatpush1.msra.mxu0 0.0
    %3076 = vmatprep.subr.mxu0 0.0
    %3077 = vmatpush1.msra.mxu0 0.0
    %3078 = vmatprep.subr.mxu0 0.0
    %3079 = vmatpush1.msra.mxu0 0.0
    %3080 = vmatprep.subr.mxu0 0.0
    %3081 = vmatpush1.msra.mxu0 0.0
    %3082 = vmatprep.mubr.f32.mxu0 0.0
    %3083 = vmatmul.mubr.f32.gmra.mrb[0].mxu0 %v3016
    %v3084 = vpop.f32.mrb[0].mxu0
    %v3085 = vadd.f32 0.0, %v3084
    %v3086 = vpop.f32.mrb[0].mxu0
    %3087 = vdwg.mxu0
    %3088 = vrot.lane.b32.xlu0 %v1769, 72
    %v3089 = vpop.permute.xlu0 %3088
    %3090 = vrot.lane.b32.xlu0 %v1772, 72
    %v3091 = vpop.permute.xlu0 %3090
    %v3095 = vsel %vm1547, %v3008, 0
    %3097 = vmatprep.subr.mxu0 0.0
    %3098 = vmatpush1.msra.mxu0 %v3089
    %3099 = vmatprep.subr.mxu0 0.0
    %3100 = vmatpush1.msra.mxu0 %v3091
    %3101 = vmatprep.subr.mxu0 0.0
    %3102 = vmatpush1.msra.mxu0 0.0
    %3103 = vmatprep.subr.mxu0 0.0
    %3104 = vmatpush1.msra.mxu0 0.0
    %3105 = vmatprep.subr.mxu0 0.0
    %3106 = vmatpush1.msra.mxu0 0.0
    %3107 = vmatprep.subr.mxu0 0.0
    %3108 = vmatpush1.msra.mxu0 0.0
    %3109 = vmatprep.subr.mxu0 0.0
    %3110 = vmatpush1.msra.mxu0 0.0
    %3111 = vmatprep.subr.mxu0 0.0
    %3112 = vmatpush1.msra.mxu0 0.0
    %3113 = vmatprep.subr.mxu0 0.0
    %3114 = vmatpush1.msra.mxu0 0.0
    %3115 = vmatprep.subr.mxu0 0.0
    %3116 = vmatpush1.msra.mxu0 0.0
    %3117 = vmatprep.subr.mxu0 0.0
    %3118 = vmatpush1.msra.mxu0 0.0
    %3119 = vmatprep.subr.mxu0 0.0
    %3120 = vmatpush1.msra.mxu0 0.0
    %3121 = vmatprep.subr.mxu0 0.0
    %3122 = vmatpush1.msra.mxu0 0.0
    %3123 = vmatprep.subr.mxu0 0.0
    %3124 = vmatpush1.msra.mxu0 0.0
    %3125 = vmatprep.subr.mxu0 0.0
    %3126 = vmatpush1.msra.mxu0 0.0
    %3127 = vmatprep.subr.mxu0 0.0
    %3128 = vmatpush1.msra.mxu0 0.0
    %3129 = vmatprep.subr.mxu0 0.0
    %3130 = vmatpush1.msra.mxu0 0.0
    %3131 = vmatprep.subr.mxu0 0.0
    %3132 = vmatpush1.msra.mxu0 0.0
    %3133 = vmatprep.subr.mxu0 0.0
    %3134 = vmatpush1.msra.mxu0 0.0
    %3135 = vmatprep.subr.mxu0 0.0
    %3136 = vmatpush1.msra.mxu0 0.0
    %3137 = vmatprep.subr.mxu0 0.0
    %3138 = vmatpush1.msra.mxu0 0.0
    %3139 = vmatprep.subr.mxu0 0.0
    %3140 = vmatpush1.msra.mxu0 0.0
    %3141 = vmatprep.subr.mxu0 0.0
    %3142 = vmatpush1.msra.mxu0 0.0
    %3143 = vmatprep.subr.mxu0 0.0
    %3144 = vmatpush1.msra.mxu0 0.0
    %3145 = vmatprep.subr.mxu0 0.0
    %3146 = vmatpush1.msra.mxu0 0.0
    %3147 = vmatprep.subr.mxu0 0.0
    %3148 = vmatpush1.msra.mxu0 0.0
    %3149 = vmatprep.subr.mxu0 0.0
    %3150 = vmatpush1.msra.mxu0 0.0
    %3151 = vmatprep.subr.mxu0 0.0
    %3152 = vmatpush1.msra.mxu0 0.0
    %3153 = vmatprep.subr.mxu0 0.0
    %3154 = vmatpush1.msra.mxu0 0.0
    %3155 = vmatprep.subr.mxu0 0.0
    %3156 = vmatpush1.msra.mxu0 0.0
    %3157 = vmatprep.subr.mxu0 0.0
    %3158 = vmatpush1.msra.mxu0 0.0
    %3159 = vmatprep.subr.mxu0 0.0
    %3160 = vmatpush1.msra.mxu0 0.0
    %3161 = vmatprep.mubr.f32.mxu0 0.0
    %3162 = vmatmul.mubr.f32.gmra.mrb[0].mxu0 %v3095
    %v3163 = vpop.f32.mrb[0].mxu0
    %v3164 = vadd.f32 0.0, %v3163
    %v3165 = vpop.f32.mrb[0].mxu0
    %3166 = vdwg.mxu0
    %3169 = vrot.lane.b32.xlu0 %v2389, 8
    %v3170 = vpop.permute.xlu0 %3169
    %3171 = vrot.lane.b32.xlu0 %v2468, 8
    %v3172 = vpop.permute.xlu0 %3171
    %3177 = vrot.lane.b32.xlu0 %v2737, 16
    %v3178 = vpop.permute.xlu0 %3177
    %3179 = vrot.lane.b32.xlu0 %v2816, 16
    %v3180 = vpop.permute.xlu0 %3179
    %3185 = vrot.lane.b32.xlu0 %v3085, 24
    %v3186 = vpop.permute.xlu0 %3185
    %3187 = vrot.lane.b32.xlu0 %v3164, 24
    %v3188 = vpop.permute.xlu0 %3187
    %v3191 = vsel %vm189, %v2041, %v3170
    %v3192 = vsel %vm189, %v2120, %v3172
    %v3193 = vsel %vm1547, %v3191, %v3178
    %v3194 = vsel %vm1547, %v3192, %v3180
    %v3195 = vsel %vm1550, %v3193, %v3186
    %v3196 = vsel %vm1550, %v3194, %v3188
    %v3197 = vpack.c.bf16 %v3196, %v3195
    %v3202 = vunpack.c.l.b16 %v92
    %v3203 = vunpack.c.l.b16 %v93
    %v3204 = vunpack.c.l.b16 %v94
    %v3205 = vunpack.c.l.b16 %v95
    %v3206 = vpack.c.b16 %v3203, %v3202
    %v3207 = vpack.c.b16 %v3205, %v3204
    %v3211 = vsel %vm135, %v3197, 0
    %3213 = vmatprep.subr.bf16.mxu0 0
    %3214 = vmatpush1.bf16.msra.mxu0 %v3206
    %3215 = vmatprep.subr.bf16.mxu0 0
    %3216 = vmatpush1.bf16.msra.mxu0 %v3207
    %3217 = vmatprep.subr.bf16.mxu0 0
    %3218 = vmatpush1.bf16.msra.mxu0 0
    %3219 = vmatprep.subr.bf16.mxu0 0
    %3220 = vmatpush1.bf16.msra.mxu0 0
    %3221 = vmatprep.subr.bf16.mxu0 0
    %3222 = vmatpush1.bf16.msra.mxu0 0
    %3223 = vmatprep.subr.bf16.mxu0 0
    %3224 = vmatpush1.bf16.msra.mxu0 0
    %3225 = vmatprep.subr.bf16.mxu0 0
    %3226 = vmatpush1.bf16.msra.mxu0 0
    %3227 = vmatprep.subr.bf16.mxu0 0
    %3228 = vmatpush1.bf16.msra.mxu0 0
    %3229 = vmatprep.subr.bf16.mxu0 0
    %3230 = vmatpush1.bf16.msra.mxu0 0
    %3231 = vmatprep.subr.bf16.mxu0 0
    %3232 = vmatpush1.bf16.msra.mxu0 0
    %3233 = vmatprep.subr.bf16.mxu0 0
    %3234 = vmatpush1.bf16.msra.mxu0 0
    %3235 = vmatprep.subr.bf16.mxu0 0
    %3236 = vmatpush1.bf16.msra.mxu0 0
    %3237 = vmatprep.subr.bf16.mxu0 0
    %3238 = vmatpush1.bf16.msra.mxu0 0
    %3239 = vmatprep.subr.bf16.mxu0 0
    %3240 = vmatpush1.bf16.msra.mxu0 0
    %3241 = vmatprep.subr.bf16.mxu0 0
    %3242 = vmatpush1.bf16.msra.mxu0 0
    %3243 = vmatprep.subr.bf16.mxu0 0
    %3244 = vmatpush1.bf16.msra.mxu0 0
    %3245 = vmatprep.mubr.bf16.mxu0 0
    %3246 = vmatmul.mubr.bf16.gmra.mrb[0].mxu0 %v3211
    %v3247 = vpop.f32.mrb[0].mxu0
    %v3248 = vadd.f32 %v1647, %v3247
    %v3249 = vpop.f32.mrb[0].mxu0
    %v3250 = vpop.f32.mrb[0].mxu0
    %v3251 = vadd.f32 %v1648, %v3250
    %v3252 = vpop.f32.mrb[0].mxu0
    %3253 = vdwg.mxu0
    %v3254 = vsel %vm135, %v3248, 0.0
    %3255 = vadd.xlane.f32.xlu0 %v3254
    %v3256 = vpop.xlane.xlu0 %3255
    %v3257 = vsel %vm135, %v3251, 0.0
    %3258 = vadd.xlane.f32.xlu0 %v3257
    %v3259 = vpop.xlane.xlu0 %3258
    %v3260 = vmul.f32 %v3256, %v1616
    %v3261 = vmul.f32 %v3259, %v1616
    %v3262 = vsub.f32 %v3248, %v3260
    %v3263 = vsub.f32 %v3251, %v3261
    %v3264 = vmul.f32 %v3262, %v3262
    %v3265 = vmul.f32 %v3263, %v3263
    %v3266 = vsel %vm135, %v3264, 0.0
    %3267 = vadd.xlane.f32.xlu0 %v3266
    %v3268 = vpop.xlane.xlu0 %3267
    %v3269 = vsel %vm135, %v3265, 0.0
    %3270 = vadd.xlane.f32.xlu0 %v3269
    %v3271 = vpop.xlane.xlu0 %3270
    %v3272 = vmul.f32 %v3268, %v1616
    %v3273 = vmul.f32 %v3271, %v1616
    %v3274 = vadd.f32 %v3272, 1e-06
    %v3275 = vadd.f32 %v3273, 1e-06
    %v3276 = vrsqrt.pop %v3274
    %v3277 = vrsqrt.pop %v3275
    %v3278 = vmul.f32 %v3262, %v3276
    %v3279 = vmul.f32 %v3263, %v3277
    %v3280 = vlaneseq
    %v3281 = vshrl.u32 %v3280, 7
    %v3282 = vsub.s32 4, %v3281
    %v3283 = vrot.slane %v113, %v3282
    %v3284 = vmul.f32 %v3278, %v3283
    %v3285 = vmul.f32 %v3279, %v3283
    %v3286 = vlaneseq
    %v3287 = vshrl.u32 %v3286, 7
    %v3288 = vsub.s32 5, %v3287
    %v3289 = vrot.slane %v113, %v3288
    %v3290 = vadd.f32 %v3284, %v3289
    %v3291 = vadd.f32 %v3285, %v3289
    %v3292 = vpack.c.bf16 %v3291, %v3290
    %v3293 = vlaneseq
    %v3294 = vshrl.u32 %v3293, 7
    %v3295 = vsub.s32 0, %v3294
    %v3296 = vrot.slane %v109, %v3295
    %v3301 = vunpack.c.l.b16 %v96
    %v3302 = vunpack.c.l.b16 %v97
    %v3303 = vunpack.c.l.b16 %v98
    %v3304 = vunpack.c.l.b16 %v99
    %v3305 = vpack.c.b16 %v3302, %v3301
    %v3306 = vpack.c.b16 %v3304, %v3303
    %v3310 = vsel %vm135, %v3292, 0
    %3312 = vmatprep.subr.bf16.mxu0 0
    %3313 = vmatpush1.bf16.msra.mxu0 %v3305
    %3314 = vmatprep.subr.bf16.mxu0 0
    %3315 = vmatpush1.bf16.msra.mxu0 %v3306
    %3316 = vmatprep.subr.bf16.mxu0 0
    %3317 = vmatpush1.bf16.msra.mxu0 0
    %3318 = vmatprep.subr.bf16.mxu0 0
    %3319 = vmatpush1.bf16.msra.mxu0 0
    %3320 = vmatprep.subr.bf16.mxu0 0
    %3321 = vmatpush1.bf16.msra.mxu0 0
    %3322 = vmatprep.subr.bf16.mxu0 0
    %3323 = vmatpush1.bf16.msra.mxu0 0
    %3324 = vmatprep.subr.bf16.mxu0 0
    %3325 = vmatpush1.bf16.msra.mxu0 0
    %3326 = vmatprep.subr.bf16.mxu0 0
    %3327 = vmatpush1.bf16.msra.mxu0 0
    %3328 = vmatprep.subr.bf16.mxu0 0
    %3329 = vmatpush1.bf16.msra.mxu0 0
    %3330 = vmatprep.subr.bf16.mxu0 0
    %3331 = vmatpush1.bf16.msra.mxu0 0
    %3332 = vmatprep.subr.bf16.mxu0 0
    %3333 = vmatpush1.bf16.msra.mxu0 0
    %3334 = vmatprep.subr.bf16.mxu0 0
    %3335 = vmatpush1.bf16.msra.mxu0 0
    %3336 = vmatprep.subr.bf16.mxu0 0
    %3337 = vmatpush1.bf16.msra.mxu0 0
    %3338 = vmatprep.subr.bf16.mxu0 0
    %3339 = vmatpush1.bf16.msra.mxu0 0
    %3340 = vmatprep.subr.bf16.mxu0 0
    %3341 = vmatpush1.bf16.msra.mxu0 0
    %3342 = vmatprep.subr.bf16.mxu0 0
    %3343 = vmatpush1.bf16.msra.mxu0 0
    %3344 = vmatprep.mubr.bf16.mxu0 0
    %3345 = vmatmul.mubr.bf16.gmra.mrb[0].mxu0 %v3310
    %v3346 = vpop.f32.mrb[0].mxu0
    %v3347 = vadd.f32 %v3296, %v3346
    %v3348 = vpop.f32.mrb[0].mxu0
    %v3349 = vpop.f32.mrb[0].mxu0
    %v3350 = vadd.f32 %v3296, %v3349
    %v3351 = vpop.f32.mrb[0].mxu0
    %3352 = vdwg.mxu0
    %v3353 = vmax.f32 %v3347, 0.0
    %v3354 = vmax.f32 %v3350, 0.0
    %v3355 = vpack.c.bf16 %v3354, %v3353
    %v3356 = vlaneseq
    %v3357 = vshrl.u32 %v3356, 7
    %v3358 = vsub.s32 1, %v3357
    %v3359 = vrot.slane %v109, %v3358
    %v3368 = vunpack.c.l.b16 %v100
    %v3369 = vunpack.c.l.b16 %v101
    %v3370 = vunpack.c.l.b16 %v102
    %v3371 = vunpack.c.l.b16 %v103
    %v3372 = vunpack.c.l.b16 %v104
    %v3373 = vunpack.c.l.b16 %v105
    %v3374 = vunpack.c.l.b16 %v106
    %v3375 = vunpack.c.l.b16 %v107
    %v3376 = vpack.c.b16 %v3369, %v3368
    %v3377 = vpack.c.b16 %v3371, %v3370
    %v3378 = vpack.c.b16 %v3373, %v3372
    %v3379 = vpack.c.b16 %v3375, %v3374
    %vm3384 = vcmask 523264
    %v3386 = vsel %vm3384, %v3355, 0
    %3388 = vmatprep.subr.bf16.mxu0 0
    %3389 = vmatpush1.bf16.msra.mxu0 %v3376
    %3390 = vmatprep.subr.bf16.mxu0 0
    %3391 = vmatpush1.bf16.msra.mxu0 %v3377
    %3392 = vmatprep.subr.bf16.mxu0 0
    %3393 = vmatpush1.bf16.msra.mxu0 %v3378
    %3394 = vmatprep.subr.bf16.mxu0 0
    %3395 = vmatpush1.bf16.msra.mxu0 %v3379
    %3396 = vmatprep.subr.bf16.mxu0 0
    %3397 = vmatpush1.bf16.msra.mxu0 0
    %3398 = vmatprep.subr.bf16.mxu0 0
    %3399 = vmatpush1.bf16.msra.mxu0 0
    %3400 = vmatprep.subr.bf16.mxu0 0
    %3401 = vmatpush1.bf16.msra.mxu0 0
    %3402 = vmatprep.subr.bf16.mxu0 0
    %3403 = vmatpush1.bf16.msra.mxu0 0
    %3404 = vmatprep.subr.bf16.mxu0 0
    %3405 = vmatpush1.bf16.msra.mxu0 0
    %3406 = vmatprep.subr.bf16.mxu0 0
    %3407 = vmatpush1.bf16.msra.mxu0 0
    %3408 = vmatprep.subr.bf16.mxu0 0
    %3409 = vmatpush1.bf16.msra.mxu0 0
    %3410 = vmatprep.subr.bf16.mxu0 0
    %3411 = vmatpush1.bf16.msra.mxu0 0
    %3412 = vmatprep.subr.bf16.mxu0 0
    %3413 = vmatpush1.bf16.msra.mxu0 0
    %3414 = vmatprep.subr.bf16.mxu0 0
    %3415 = vmatpush1.bf16.msra.mxu0 0
    %3416 = vmatprep.subr.bf16.mxu0 0
    %3417 = vmatpush1.bf16.msra.mxu0 0
    %3418 = vmatprep.subr.bf16.mxu0 0
    %3419 = vmatpush1.bf16.msra.mxu0 0
    %3420 = vmatprep.mubr.bf16.mxu0 0
    %3421 = vmatmul.mubr.bf16.gmra.mrb[0].mxu0 %v3386
    %v3422 = vpop.f32.mrb[0].mxu0
    %v3423 = vadd.f32 %v3359, %v3422
    %v3424 = vpop.f32.mrb[0].mxu0
    %v3425 = vpop.f32.mrb[0].mxu0
    %v3426 = vadd.f32 %v3359, %v3425
    %v3427 = vpop.f32.mrb[0].mxu0
    %3428 = vdwg.mxu0
    %v3429 = vadd.f32 %v3423, %v3290
    %v3430 = vadd.f32 %v3426, %v3291
    %v3431 = vsel %vm135, %v3429, 0.0
    %3432 = vadd.xlane.f32.xlu0 %v3431
    %v3433 = vpop.xlane.xlu0 %3432
    %v3434 = vsel %vm135, %v3430, 0.0
    %3435 = vadd.xlane.f32.xlu0 %v3434
    %v3436 = vpop.xlane.xlu0 %3435
    %v3437 = vmul.f32 %v3433, %v1616
    %v3438 = vmul.f32 %v3436, %v1616
    %v3439 = vsub.f32 %v3429, %v3437
    %v3440 = vsub.f32 %v3430, %v3438
    %v3441 = vmul.f32 %v3439, %v3439
    %v3442 = vmul.f32 %v3440, %v3440
    %v3443 = vsel %vm135, %v3441, 0.0
    %3444 = vadd.xlane.f32.xlu0 %v3443
    %v3445 = vpop.xlane.xlu0 %3444
    %v3446 = vsel %vm135, %v3442, 0.0
    %3447 = vadd.xlane.f32.xlu0 %v3446
    %v3448 = vpop.xlane.xlu0 %3447
    %v3449 = vmul.f32 %v3445, %v1616
    %v3450 = vmul.f32 %v3448, %v1616
    %v3451 = vadd.f32 %v3449, 1e-06
    %v3452 = vadd.f32 %v3450, 1e-06
    %v3453 = vrsqrt.pop %v3451
    %v3454 = vrsqrt.pop %v3452
    %v3455 = vmul.f32 %v3439, %v3453
    %v3456 = vmul.f32 %v3440, %v3454
    %v3457 = vlaneseq
    %v3458 = vshrl.u32 %v3457, 7
    %v3459 = vsub.s32 6, %v3458
    %v3460 = vrot.slane %v115, %v3459
    %v3461 = vmul.f32 %v3455, %v3460
    %v3462 = vmul.f32 %v3456, %v3460
    %v3463 = vlaneseq
    %v3464 = vshrl.u32 %v3463, 7
    %v3465 = vsub.s32 7, %v3464
    %v3466 = vrot.slane %v115, %v3465
    %v3467 = vadd.f32 %v3461, %v3466
    %v3468 = vadd.f32 %v3462, %v3466
    %v3471 = vrot.slane %v3468, 7
    %vm3472 = vcmask 1041409
    %v3473 = vsel %vm3472, %v3471, %v3467
    %v3475 = vrot.slane %v3467, 1
    %v3476 = vsel %vm3472, %v3468, %v3475
    %3477 = vrot.lane.b32.xlu0 %v3476, 32
    %v3478 = vpop.permute.xlu0 %3477
    %v3480 = vrot.slane %v3467, 2
    %v3481 = vrot.slane %v3468, 1
    %v3482 = vsel %vm3472, %v3481, %v3480
    %3483 = vrot.lane.b32.xlu0 %v3482, 64
    %v3484 = vpop.permute.xlu0 %3483
    %v3486 = vrot.slane %v3467, 3
    %v3487 = vrot.slane %v3468, 2
    %v3488 = vsel %vm3472, %v3487, %v3486
    %3489 = vrot.lane.b32.xlu0 %v3488, 96
    %v3490 = vpop.permute.xlu0 %3489
    %v3492 = vrot.slane %v3467, 4
    %v3493 = vrot.slane %v3468, 3
    %v3494 = vsel %vm3472, %v3493, %v3492
    %v3496 = vrot.slane %v3467, 5
    %v3497 = vrot.slane %v3468, 4
    %v3498 = vsel %vm3472, %v3497, %v3496
    %3499 = vrot.lane.b32.xlu0 %v3498, 32
    %v3500 = vpop.permute.xlu0 %3499
    %v3502 = vrot.slane %v3467, 6
    %v3503 = vrot.slane %v3468, 5
    %v3504 = vsel %vm3472, %v3503, %v3502
    %3505 = vrot.lane.b32.xlu0 %v3504, 64
    %v3506 = vpop.permute.xlu0 %3505
    %v3508 = vrot.slane %v3467, 7
    %v3509 = vrot.slane %v3468, 6
    %v3510 = vsel %vm3472, %v3509, %v3508
    %3511 = vrot.lane.b32.xlu0 %v3510, 96
    %v3512 = vpop.permute.xlu0 %3511
    %v3514 = vsel %vm135, %v3473, %v3478
    %v3515 = vsel %vm3384, %v3514, %v3484
    %vm3516 = vcmask 785408
    %v3517 = vsel %vm3516, %v3515, %v3490
    %v3518 = vsel %vm135, %v3494, %v3500
    %v3519 = vsel %vm3384, %v3518, %v3506
    %v3520 = vsel %vm3516, %v3519, %v3512
    %v3523 = vcombine.low %v3517, %v3520
    %v3525 = vunpack.c.l.s4 1983009808
    %v3526 = vunpack.c.0.s8 %v3525
    %v3527 = vlaneseq
    %v3528 = vshrl.u32 %v3527, 7
    %v3529 = vsub.s32 %v3526, %v3528
    %v3530 = vrot.slane %v3523, %v3529
    %3532 = vst [vmem:[%s5] sm:$0xf] %v3530
    // Predicated region
    $region38: #{decoder_layer.1} parent=1 // pred_check
      _
    $region39: #{decoder_layer.1} parent=1 // pred_check_branch
      %3534 = sbr.rel (0) target = $region41
    $region40: #{decoder_layer.1} parent=1 // pred_region
      _
    $region41: #{decoder_layer.1} parent=1 // pred_fallthru
      _
    // Predicated region
    $region42: #{decoder_layer.1} parent=1 // pred_check
      _
    $region43: #{decoder_layer.1} parent=1 // pred_check_branch
      %3536 = sbr.rel (0) target = $region45
    $region44: #{decoder_layer.1} parent=1 // pred_region
      _
    $region45: #{decoder_layer.1} parent=1 // pred_fallthru
      _
    %3537 = vsyncpa [#allocation3], 1
    %3538 = vsyncpa [#allocation5], 1
    %3539 = vsyncpa [#allocation8], 1

</llo_original>
